<compile_context>
chip_gen: v7x
topology: tpu7x:2x2x1
jax: 0.10.0
libtpu: 0.0.40
codegen_flags: <defaults>
</compile_context>

<pallas_src>
import functools

import numpy as np
import jax
import jax.numpy as jnp
from jax.experimental import pallas as pl
from jax.experimental.pallas import tpu as pltpu

# ----------------------------- configuration ---------------------------------
BATCH = 2
X_DIM = 16          # x_dim
Y_DIM = 8           # y_dim
EMBED_DIM = 32      # embed_dim
SIGMA = 25.0        # marginal_prob_std(t) = sqrt((sigma^(2t)-1)/(2 ln sigma))
EPS = 1e-5          # GroupNorm eps
ENC_LEN = 28        # encodex output length

# spatial lengths through the U-net (kernel size 3, padding 0)
L1 = ENC_LEN - 2              # 26  conv1  stride 1
L2 = (L1 - 3) // 2 + 1        # 12  conv2  stride 2
L3 = (L2 - 3) // 2 + 1        # 5   conv3  stride 2
L4 = (L3 - 3) // 2 + 1        # 2   conv4  stride 2
LT4 = (L4 - 1) * 2 + 3        # 5   tconv4 stride 2
LT3 = (LT4 - 1) * 2 + 3 + 1   # 12  tconv3 stride 2, output_padding 1
LT2 = (LT3 - 1) * 2 + 3 + 1   # 26  tconv2 stride 2, output_padding 1
LT1 = LT2 + 2                 # 28  tconv1 stride 1

# name, C_in(main), C_skip, C_out, L_in, L_out, stride, groups, transposed
STAGES = [
    ("c1", 1,   0,   32,  ENC_LEN, L1,  1, 4,  False),
    ("c2", 32,  0,   64,  L1,      L2,  2, 32, False),
    ("c3", 64,  0,   128, L2,      L3,  2, 32, False),
    ("c4", 128, 0,   256, L3,      L4,  2, 32, False),
    ("t4", 256, 0,   128, L4,      LT4, 2, 32, True),
    ("t3", 128, 128, 64,  LT4,     LT3, 2, 32, True),
    ("t2", 64,  64,  32,  LT3,     LT2, 2, 32, True),
]


# ----------------------- parameter slab packing (host) ------------------------
class _Slab:
    """Packs many small 2-D parameters into one (rows, width) array.

    Each block is zero-padded to `width` lanes and `row_align` rows so that the
    in-kernel static windows start on (sub)lane-tile-aligned offsets."""

    def __init__(self, width, row_align):
        self.width = width
        self.align = row_align
        self.blocks = []
        self.index = {}          # name -> (row_offset, rows, cols)
        self.rows = 0

    def add(self, name, arr):
        arr = np.asarray(arr, np.float32)
        if arr.ndim == 1:
            arr = arr[None, :]
        r, c = arr.shape
        assert c <= self.width, (name, arr.shape, self.width)
        rp = -(-r // self.align) * self.align
        blk = np.zeros((rp, self.width), np.float32)
        blk[:r, :c] = arr
        self.index[name] = (self.rows, r, c)
        self.blocks.append(blk)
        self.rows += rp

    def finalize(self, dtype):
        slab = np.concatenate(self.blocks, axis=0)
        return jnp.asarray(slab, dtype=dtype), self.index


def make_slabs(key):
    """Builds the bf16 (matmul weights + 0/1 select/scatter) and f32 slabs."""
    keys = iter(jax.random.split(key, 64))

    def nrm(shape, scale):
        return np.asarray(scale * jax.random.normal(next(keys), shape, dtype=jnp.float32))

    bfb = _Slab(width=384, row_align=16)   # bf16: conv/tconv/Dense weights, Sel matrices
    fpb = _Slab(width=256, row_align=8)    # f32 : biases, GroupNorm, tiny linears

    half = EMBED_DIM // 2
    # time / y embedding
    fpb.add("w_fourier", nrm((1, half), 30.0))                              # GFP W (fixed)
    fpb.add("Wt", nrm((EMBED_DIM, EMBED_DIM), 1.0 / np.sqrt(EMBED_DIM)))    # Linear(embed,embed)
    fpb.add("bt", nrm((1, EMBED_DIM), 0.1))
    fpb.add("Wy", nrm((Y_DIM, EMBED_DIM), 1.0 / np.sqrt(Y_DIM)))            # Linear(y_dim,embed)
    fpb.add("by", nrm((1, EMBED_DIM), 0.1))

    # encodex (Linear x_dim -> 28) laid out for the column path, decodex (28 -> x_dim)
    fpb.add("WencT", nrm((ENC_LEN, X_DIM), 1.0 / np.sqrt(X_DIM)))           # (28, 16)
    fpb.add("benc", nrm((ENC_LEN, 1), 0.1))                                 # (28, 1)
    fpb.add("Wdec", nrm((ENC_LEN, X_DIM), 1.0 / np.sqrt(ENC_LEN)))          # (28, 16)
    fpb.add("bdec", nrm((1, X_DIM), 0.1))

    # conv1 (1 -> 32, k3, s1, bias=False): per-tap row vectors, used on the VPU
    w1 = nrm((32, 1, 3), 1.0 / np.sqrt(1 * 3))                              # torch (C_out, C_in, K)
    fpb.add("W_c1", w1[:, 0, :].T)                                          # (3, 32): [k, co]

    # tconv1 (64 -> 1, k3, s1, bias=True): per-tap row vectors + bias, VPU/XLU path
    wt1 = nrm((64, 1, 3), 1.0 / np.sqrt(64 * 3))                            # torch (C_in, C_out, K)
    fpb.add("W_t1", wt1[:, 0, :].T)                                         # (3, 64): [k, ci]
    fpb.add("b_t1", nrm((1, 1), 0.1))

    # conv / tconv stages (bias=False) + Dense(embed) + GroupNorm for all stages
    for name, ci, cs, co, li, lo, stride, g, transposed in STAGES:
        cit = ci + cs
        if name != "c1":
            if transposed:
                w = nrm((cit, co, 3), 1.0 / np.sqrt(cit * 3))               # torch (C_in, C_out, K)
                wcat = np.concatenate([w[:, :, k] for k in range(3)], axis=1)    # (cit, 3*co)
                bfb.add("W_" + name, wcat)
                S = np.zeros((3, BATCH * lo, BATCH * li), np.float32)       # scatter per tap
                for k in range(3):
                    for b in range(BATCH):
                        for l_ in range(li):
                            o = l_ * stride + k
                            if o < lo:
                                S[k, b * lo + o, b * li + l_] = 1.0
                bfb.add("S_" + name, np.concatenate([S[0], S[1], S[2]], axis=1))  # (B*lo, 3*B*li)
            else:
                w = nrm((co, cit, 3), 1.0 / np.sqrt(cit * 3))               # torch (C_out, C_in, K)
                wcol = np.concatenate([w[:, :, k].T for k in range(3)], axis=0)   # (3*cit, co)
                bfb.add("W_" + name, wcol)
                S = np.zeros((3, BATCH * lo, BATCH * li), np.float32)       # strided row select
                for k in range(3):
                    for b in range(BATCH):
                        for o in range(lo):
                            S[k, b * lo + o, b * li + o * stride + k] = 1.0
                bfb.add("S_" + name, S.reshape(3 * BATCH * lo, BATCH * li))  # (3*B*lo, B*li)

        # Dense(embed -> C) with bias, GroupNorm affine + (C, C) group-pool matrix
        bfb.add("Wd_" + name, nrm((EMBED_DIM, co), 1.0 / np.sqrt(EMBED_DIM)))
        fpb.add("bd_" + name, nrm((1, co), 0.1))
        fpb.add("gam_" + name, 1.0 + nrm((1, co), 0.1))
        fpb.add("bet_" + name, nrm((1, co), 0.1))
        gid = np.arange(co) // (co // g)
        fpb.add("P_" + name, (gid[:, None] == gid[None, :]).astype(np.float32))

    bf_slab, bf_idx = bfb.finalize(jnp.bfloat16)
    fp_slab, fp_idx = fpb.finalize(jnp.float32)
    return bf_slab, fp_slab, bf_idx, fp_idx


# -------------------------------- kernel --------------------------------------
def unet_kernel(bf_idx, fp_idx, xT_ref, y_ref, t_ref, bf_ref, fp_ref, out_ref):
    f32, bf16 = jnp.float32, jnp.bfloat16
    B = BATCH

    def gbf(name):                              # zero-cost static window into the bf16 slab
        off, r, c = bf_idx[name]
        return bf_ref[off:off + r, :c]

    def gfp(name):                              # ... and into the f32 slab
        off, r, c = fp_idx[name]
        return fp_ref[off:off + r, :c]

    def dot(a, b):
        return jnp.dot(a, b, preferred_element_type=f32)

    def silu(v):                                # v * sigmoid(v); reciprocal on the EUP
        return v * pl.reciprocal(1.0 + jnp.exp(-v), approx=True)

    xT = xT_ref[...]                            # (X_DIM, B) f32
    y = y_ref[...]                              # (B, Y_DIM) f32
    t = t_ref[...]                              # (B, 1)     f32

    # --- time + y embeddings (tiny, f32; Fourier projection is a broadcast mul) ---
    proj = (t * gfp("w_fourier")) * (2.0 * np.pi)                    # (B, EMBED/2)
    four = jnp.concatenate([jnp.sin(proj), jnp.cos(proj)], axis=1)   # (B, EMBED)
    embedt = silu(dot(four, gfp("Wt")) + gfp("bt"))
    embedy = silu(dot(y, gfp("Wy")) + gfp("by"))
    embed = embedt + embedy                                          # (B, EMBED)
    embed_bf = embed.astype(bf16)

    # --- encodex: column layout (28, B) so conv1 taps are contiguous sublane slices ---
    xcol = dot(gfp("WencT"), xT) + gfp("benc")                       # (28, B)

    # ------------------------------ helpers -----------------------------------
    def dense_gn_silu(name, pre, L, C, G):
        # Dense(embed): (B, C) broadcast over L per batch (no broadcast matmuls)
        dvec = dot(embed_bf, gbf("Wd_" + name)) + gfp("bd_" + name)          # (B, C)
        dense_rows = jnp.concatenate(
            [jnp.broadcast_to(dvec[b:b + 1, :], (L, C)) for b in range(B)], axis=0)
        pre = pre + dense_rows                                               # (B*L, C)

        # GroupNorm: per-(batch, group) stats via sublane sums + one (C, C) pool matmul
        inv = 1.0 / ((C // G) * L)
        sums, sqs = [], []
        for b in range(B):
            blk = pre[b * L:(b + 1) * L, :]
            sums.append(jnp.sum(blk, axis=0, keepdims=True))
            sqs.append(jnp.sum(blk * blk, axis=0, keepdims=True))
        stats = jnp.concatenate(sums + sqs, axis=0)                          # (2B, C)
        pooled = dot(stats, gfp("P_" + name)) * inv                          # (2B, C) f32
        mean = pooled[:B, :]                                                 # (B, C)
        var = jnp.maximum(pooled[B:, :] - mean * mean, 0.0)                  # (B, C)
        mean_rows = jnp.concatenate(
            [jnp.broadcast_to(mean[b:b + 1, :], (L, C)) for b in range(B)], axis=0)
        istd_rows = jnp.concatenate(
            [jnp.broadcast_to(jax.lax.rsqrt(var[b:b + 1, :] + EPS), (L, C)) for b in range(B)],
            axis=0)
        hn = (pre - mean_rows) * istd_rows * gfp("gam_" + name) + gfp("bet_" + name)
        return silu(hn)

    def conv_fwd(name, h, L_out):
        # 2 matmuls: stacked 0/1 row-select (exact) + fused K=3 im2col weight matmul
        R = B * L_out
        sel = dot(gbf("S_" + name), h.astype(bf16))                          # (3R, C_in) f32
        X = jnp.concatenate([sel[k * R:(k + 1) * R, :] for k in range(3)], axis=1)
        return dot(X.astype(bf16), gbf("W_" + name))                         # (R, C_out) f32

    def conv_tr(name, h, C_out):
        # 2 matmuls: fused N=3*C_out weight matmul + stacked 0/1 scatter
        hW = dot(h.astype(bf16), gbf("W_" + name))                           # (B*L_in, 3*C_out)
        hW_stack = jnp.concatenate(
            [hW[:, k * C_out:(k + 1) * C_out] for k in range(3)], axis=0)    # (3*B*L_in, C_out)
        return dot(gbf("S_" + name), hW_stack.astype(bf16))                  # (B*L_out, C_out)

    # --- conv1: C_in = 1 -> pure outer-product broadcast on the VPU (no MXU) ---
    w1 = gfp("W_c1")                                                         # (3, 32)
    pre1_parts = []
    for b in range(B):
        xb = xcol[:, b:b + 1]                                                # (28, 1)
        acc = xb[0:L1, :] * w1[0:1, :]
        acc = acc + xb[1:1 + L1, :] * w1[1:2, :]
        acc = acc + xb[2:2 + L1, :] * w1[2:3, :]
        pre1_parts.append(acc)                                               # (26, 32)
    pre1 = jnp.concatenate(pre1_parts, axis=0)                               # (B*26, 32)

    # --- encoder ---
    h1 = dense_gn_silu("c1", pre1, L1, 32, 4)                                # (B*26, 32)
    h2 = dense_gn_silu("c2", conv_fwd("c2", h1, L2), L2, 64, 32)             # (B*12, 64)
    h3 = dense_gn_silu("c3", conv_fwd("c3", h2, L3), L3, 128, 32)            # (B*5, 128)
    h4 = dense_gn_silu("c4", conv_fwd("c4", h3, L4), L4, 256, 32)            # (B*2, 256)

    # --- decoder (skip connections = channel concat along lanes) ---
    hd = dense_gn_silu("t4", conv_tr("t4", h4, 128), LT4, 128, 32)           # (B*5, 128)
    hd = dense_gn_silu("t3", conv_tr("t3", jnp.concatenate([hd, h3], axis=1), 64),
                       LT3, 64, 32)                                          # (B*12, 64)
    hd = dense_gn_silu("t2", conv_tr("t2", jnp.concatenate([hd, h2], axis=1), 32),
                       LT2, 32, 32)                                          # (B*26, 32)

    # --- tconv1 (C_out = 1, stride 1, bias) + decodex: lane reductions, no MXU ---
    hcat = jnp.concatenate([hd, h1], axis=1)                                 # (B*26, 64)
    wt1 = gfp("W_t1")                                                        # (3, 64)
    g = [jnp.sum(hcat * wt1[k:k + 1, :], axis=1, keepdims=True) for k in range(3)]  # (B*26, 1)
    b_t1 = gfp("b_t1")                                                       # (1, 1)
    Wdec = gfp("Wdec")                                                       # (28, 16)
    bdec = gfp("bdec")                                                       # (1, 16)
    out_rows = []
    for b in range(B):
        col = jnp.broadcast_to(b_t1, (LT1, 1))                               # (28, 1)
        for k in range(3):
            gb = g[k][b * LT2:(b + 1) * LT2, :]                              # (26, 1)
            parts = []
            if k > 0:
                parts.append(jnp.zeros((k, 1), f32))
            parts.append(gb)
            if 2 - k > 0:
                parts.append(jnp.zeros((2 - k, 1), f32))
            col = col + jnp.concatenate(parts, axis=0)                       # scatter tap k
        # decodex: Linear(28 -> x_dim) as broadcast-mul + sublane reduction
        out_rows.append(jnp.sum(col * Wdec, axis=0, keepdims=True) + bdec)   # (1, 16)
    out16 = jnp.concatenate(out_rows, axis=0)                                # (B, 16)

    # --- divide by marginal_prob_std(t) (EUP reciprocal) ---
    log_s = float(np.log(SIGMA))
    std = jnp.sqrt((jnp.exp((2.0 * log_s) * t) - 1.0) / (2.0 * log_s))       # (B, 1)
    out_ref[...] = out16 * pl.reciprocal(std, approx=True)


# ------------------------------- wrapper ---------------------------------------
def onedunet_forward(x, y, t, bf_slab, fp_slab, bf_idx, fp_idx):
    """x: (B, 1, X_DIM), y: (B, Y_DIM), t: (B,)  ->  (B, 1, X_DIM)."""
    B = x.shape[0]
    xT = jnp.asarray(x, jnp.float32).reshape(B, X_DIM).T                     # (X_DIM, B)
    inputs = [xT,
              jnp.asarray(y, jnp.float32),
              jnp.asarray(t, jnp.float32).reshape(B, 1),
              bf_slab, fp_slab]

    kernel = functools.partial(unet_kernel, bf_idx, fp_idx)
    out = pl.pallas_call(
        kernel,
        out_shape=jax.ShapeDtypeStruct((B, X_DIM), jnp.float32),
        in_specs=[pl.BlockSpec(memory_space=pltpu.MemorySpace.VMEM)] * len(inputs),
        out_specs=pl.BlockSpec(memory_space=pltpu.MemorySpace.VMEM),
        compiler_params=pltpu.CompilerParams(vmem_limit_bytes=32 * 1024 * 1024),
        cost_estimate=pl.CostEstimate(flops=3_000_000, transcendentals=25_000,
                                      bytes_accessed=2_800_000),
    )(*inputs)
    return out.reshape(B, 1, X_DIM)


# --------------------------------- main -----------------------------------------
if __name__ == "__main__":
    key = jax.random.PRNGKey(0)
    kx, ky, kt, kp = jax.random.split(key, 4)
    x = jax.random.normal(kx, (BATCH, 1, X_DIM), dtype=jnp.float32)
    y = jax.random.normal(ky, (BATCH, Y_DIM), dtype=jnp.float32)
    t = jax.random.uniform(kt, (BATCH,), minval=0.1, maxval=1.0, dtype=jnp.float32)

    bf_slab, fp_slab, bf_idx, fp_idx = make_slabs(kp)
    out = onedunet_forward(x, y, t, bf_slab, fp_slab, bf_idx, fp_idx)
    jax.block_until_ready(out)

    assert out.shape == (BATCH, 1, X_DIM), out.shape
    assert bool(jnp.all(jnp.isfinite(out)))
    print("KERNEL_OK")
</pallas_src>

<mosaic_0001>
module attributes {stable_mosaic.version = 11 : i64} {
  func.func @unet_kernel(%arg0: memref<16x2xf32, #tpu.memory_space<vmem>>, %arg1: memref<2x8xf32, #tpu.memory_space<vmem>>, %arg2: memref<2x1xf32, #tpu.memory_space<vmem>>, %arg3: memref<1776x384xbf16, #tpu.memory_space<vmem>>, %arg4: memref<1064x256xf32, #tpu.memory_space<vmem>>, %arg5: memref<2x16xf32, #tpu.memory_space<vmem>>) attributes {dimension_semantics = [], scalar_prefetch = 0 : i64, scratch_operands = 0 : i64, tpu.core_type = #tpu.core_type<tc>} {
    %c0 = arith.constant 0 : index
    %c0_0 = arith.constant 0 : index
    %0 = vector.load %arg0[%c0, %c0_0] : memref<16x2xf32, #tpu.memory_space<vmem>>, vector<16x2xf32>
    %c0_1 = arith.constant 0 : index
    %c0_2 = arith.constant 0 : index
    %1 = vector.load %arg1[%c0_1, %c0_2] : memref<2x8xf32, #tpu.memory_space<vmem>>, vector<2x8xf32>
    %c0_3 = arith.constant 0 : index
    %c0_4 = arith.constant 0 : index
    %2 = vector.load %arg2[%c0_3, %c0_4] : memref<2x1xf32, #tpu.memory_space<vmem>>, vector<2x1xf32>
    %c0_5 = arith.constant 0 : index
    %c0_6 = arith.constant 0 : index
    %3 = vector.load %arg4[%c0_5, %c0_6] : memref<1064x256xf32, #tpu.memory_space<vmem>>, vector<1x16xf32>
    %4 = vector.broadcast %2 : vector<2x1xf32> to vector<2x16xf32>
    %5 = vector.broadcast %3 : vector<1x16xf32> to vector<2x16xf32>
    %6 = arith.mulf %4, %5 : vector<2x16xf32>
    %cst = arith.constant 6.28318548 : f32
    %7 = vector.broadcast %cst : f32 to vector<2x16xf32>
    %8 = arith.mulf %6, %7 : vector<2x16xf32>
    %9 = math.sin %8 : vector<2x16xf32>
    %10 = math.cos %8 : vector<2x16xf32>
    %11 = tpu.concatenate %9, %10 in 1 : vector<2x16xf32>, vector<2x16xf32> -> vector<2x32xf32>
    %c8 = arith.constant 8 : index
    %c0_7 = arith.constant 0 : index
    %12 = vector.load %arg4[%c8, %c0_7] : memref<1064x256xf32, #tpu.memory_space<vmem>>, vector<32x32xf32>
    %cst_8 = arith.constant dense<0.000000e+00> : vector<2x32xf32>
    %13 = tpu.matmul %11, %12, %cst_8 {dimension_numbers = #tpu.dot_dimension_numbers<[1], [0], [0], [1], [0, 0, 1, 1], [], []>} : vector<2x32xf32>, vector<32x32xf32>, vector<2x32xf32> -> vector<2x32xf32>
    %c40 = arith.constant 40 : index
    %c0_9 = arith.constant 0 : index
    %14 = vector.load %arg4[%c40, %c0_9] : memref<1064x256xf32, #tpu.memory_space<vmem>>, vector<1x32xf32>
    %15 = vector.broadcast %14 : vector<1x32xf32> to vector<2x32xf32>
    %16 = arith.addf %13, %15 : vector<2x32xf32>
    %cst_10 = arith.constant 0.000000e+00 : f32
    %17 = vector.broadcast %cst_10 : f32 to vector<2x32xf32>
    %18 = arith.subf %17, %16 : vector<2x32xf32>
    %19 = math.exp %18 : vector<2x32xf32>
    %cst_11 = arith.constant 1.000000e+00 : f32
    %20 = vector.broadcast %cst_11 : f32 to vector<2x32xf32>
    %21 = arith.addf %20, %19 : vector<2x32xf32>
    %22 = tpu.reciprocal %21 {approx = true} : vector<2x32xf32> -> vector<2x32xf32>
    %23 = arith.mulf %16, %22 : vector<2x32xf32>
    %c48 = arith.constant 48 : index
    %c0_12 = arith.constant 0 : index
    %24 = vector.load %arg4[%c48, %c0_12] : memref<1064x256xf32, #tpu.memory_space<vmem>>, vector<8x32xf32>
    %cst_13 = arith.constant dense<0.000000e+00> : vector<2x32xf32>
    %25 = tpu.matmul %1, %24, %cst_13 {dimension_numbers = #tpu.dot_dimension_numbers<[1], [0], [0], [1], [0, 0, 1, 1], [], []>} : vector<2x8xf32>, vector<8x32xf32>, vector<2x32xf32> -> vector<2x32xf32>
    %c56 = arith.constant 56 : index
    %c0_14 = arith.constant 0 : index
    %26 = vector.load %arg4[%c56, %c0_14] : memref<1064x256xf32, #tpu.memory_space<vmem>>, vector<1x32xf32>
    %27 = vector.broadcast %26 : vector<1x32xf32> to vector<2x32xf32>
    %28 = arith.addf %25, %27 : vector<2x32xf32>
    %cst_15 = arith.constant 0.000000e+00 : f32
    %29 = vector.broadcast %cst_15 : f32 to vector<2x32xf32>
    %30 = arith.subf %29, %28 : vector<2x32xf32>
    %31 = math.exp %30 : vector<2x32xf32>
    %cst_16 = arith.constant 1.000000e+00 : f32
    %32 = vector.broadcast %cst_16 : f32 to vector<2x32xf32>
    %33 = arith.addf %32, %31 : vector<2x32xf32>
    %34 = tpu.reciprocal %33 {approx = true} : vector<2x32xf32> -> vector<2x32xf32>
    %35 = arith.mulf %28, %34 : vector<2x32xf32>
    %36 = arith.addf %23, %35 : vector<2x32xf32>
    %37 = arith.truncf %36 : vector<2x32xf32> to vector<2x32xbf16>
    %c64 = arith.constant 64 : index
    %c0_17 = arith.constant 0 : index
    %38 = vector.load %arg4[%c64, %c0_17] : memref<1064x256xf32, #tpu.memory_space<vmem>>, vector<28x16xf32>
    %cst_18 = arith.constant dense<0.000000e+00> : vector<28x2xf32>
    %39 = tpu.matmul %38, %0, %cst_18 {dimension_numbers = #tpu.dot_dimension_numbers<[1], [0], [0], [1], [0, 0, 1, 1], [], []>} : vector<28x16xf32>, vector<16x2xf32>, vector<28x2xf32> -> vector<28x2xf32>
    %c96 = arith.constant 96 : index
    %c0_19 = arith.constant 0 : index
    %40 = vector.load %arg4[%c96, %c0_19] : memref<1064x256xf32, #tpu.memory_space<vmem>>, vector<28x1xf32>
    %41 = vector.broadcast %40 : vector<28x1xf32> to vector<28x2xf32>
    %42 = arith.addf %39, %41 : vector<28x2xf32>
    %c168 = arith.constant 168 : index
    %c0_20 = arith.constant 0 : index
    %43 = vector.load %arg4[%c168, %c0_20] : memref<1064x256xf32, #tpu.memory_space<vmem>>, vector<3x32xf32>
    %44 = vector.extract_strided_slice %42 {offsets = [0, 0], sizes = [28, 1], strides = [1, 1]} : vector<28x2xf32> to vector<28x1xf32>
    %45 = vector.extract_strided_slice %44 {offsets = [0, 0], sizes = [26, 1], strides = [1, 1]} : vector<28x1xf32> to vector<26x1xf32>
    %46 = vector.extract_strided_slice %43 {offsets = [0, 0], sizes = [1, 32], strides = [1, 1]} : vector<3x32xf32> to vector<1x32xf32>
    %47 = vector.broadcast %45 : vector<26x1xf32> to vector<26x32xf32>
    %48 = vector.broadcast %46 : vector<1x32xf32> to vector<26x32xf32>
    %49 = arith.mulf %47, %48 : vector<26x32xf32>
    %50 = vector.extract_strided_slice %44 {offsets = [1, 0], sizes = [26, 1], strides = [1, 1]} : vector<28x1xf32> to vector<26x1xf32>
    %51 = vector.extract_strided_slice %43 {offsets = [1, 0], sizes = [1, 32], strides = [1, 1]} : vector<3x32xf32> to vector<1x32xf32>
    %52 = vector.broadcast %50 : vector<26x1xf32> to vector<26x32xf32>
    %53 = vector.broadcast %51 : vector<1x32xf32> to vector<26x32xf32>
    %54 = arith.mulf %52, %53 : vector<26x32xf32>
    %55 = arith.addf %49, %54 : vector<26x32xf32>
    %56 = vector.extract_strided_slice %44 {offsets = [2, 0], sizes = [26, 1], strides = [1, 1]} : vector<28x1xf32> to vector<26x1xf32>
    %57 = vector.extract_strided_slice %43 {offsets = [2, 0], sizes = [1, 32], strides = [1, 1]} : vector<3x32xf32> to vector<1x32xf32>
    %58 = vector.broadcast %56 : vector<26x1xf32> to vector<26x32xf32>
    %59 = vector.broadcast %57 : vector<1x32xf32> to vector<26x32xf32>
    %60 = arith.mulf %58, %59 : vector<26x32xf32>
    %61 = arith.addf %55, %60 : vector<26x32xf32>
    %62 = vector.extract_strided_slice %42 {offsets = [0, 1], sizes = [28, 1], strides = [1, 1]} : vector<28x2xf32> to vector<28x1xf32>
    %63 = vector.extract_strided_slice %62 {offsets = [0, 0], sizes = [26, 1], strides = [1, 1]} : vector<28x1xf32> to vector<26x1xf32>
    %64 = vector.extract_strided_slice %43 {offsets = [0, 0], sizes = [1, 32], strides = [1, 1]} : vector<3x32xf32> to vector<1x32xf32>
    %65 = vector.broadcast %63 : vector<26x1xf32> to vector<26x32xf32>
    %66 = vector.broadcast %64 : vector<1x32xf32> to vector<26x32xf32>
    %67 = arith.mulf %65, %66 : vector<26x32xf32>
    %68 = vector.extract_strided_slice %62 {offsets = [1, 0], sizes = [26, 1], strides = [1, 1]} : vector<28x1xf32> to vector<26x1xf32>
    %69 = vector.extract_strided_slice %43 {offsets = [1, 0], sizes = [1, 32], strides = [1, 1]} : vector<3x32xf32> to vector<1x32xf32>
    %70 = vector.broadcast %68 : vector<26x1xf32> to vector<26x32xf32>
    %71 = vector.broadcast %69 : vector<1x32xf32> to vector<26x32xf32>
    %72 = arith.mulf %70, %71 : vector<26x32xf32>
    %73 = arith.addf %67, %72 : vector<26x32xf32>
    %74 = vector.extract_strided_slice %62 {offsets = [2, 0], sizes = [26, 1], strides = [1, 1]} : vector<28x1xf32> to vector<26x1xf32>
    %75 = vector.extract_strided_slice %43 {offsets = [2, 0], sizes = [1, 32], strides = [1, 1]} : vector<3x32xf32> to vector<1x32xf32>
    %76 = vector.broadcast %74 : vector<26x1xf32> to vector<26x32xf32>
    %77 = vector.broadcast %75 : vector<1x32xf32> to vector<26x32xf32>
    %78 = arith.mulf %76, %77 : vector<26x32xf32>
    %79 = arith.addf %73, %78 : vector<26x32xf32>
    %80 = tpu.concatenate %61, %79 in 0 : vector<26x32xf32>, vector<26x32xf32> -> vector<52x32xf32>
    %c0_21 = arith.constant 0 : index
    %c0_22 = arith.constant 0 : index
    %81 = vector.load %arg3[%c0_21, %c0_22] : memref<1776x384xbf16, #tpu.memory_space<vmem>>, vector<32x32xbf16>
    %cst_23 = arith.constant dense<0.000000e+00> : vector<2x32xf32>
    %82 = tpu.matmul %37, %81, %cst_23 {dimension_numbers = #tpu.dot_dimension_numbers<[1], [0], [0], [1], [0, 0, 1, 1], [], []>} : vector<2x32xbf16>, vector<32x32xbf16>, vector<2x32xf32> -> vector<2x32xf32>
    %c192 = arith.constant 192 : index
    %c0_24 = arith.constant 0 : index
    %83 = vector.load %arg4[%c192, %c0_24] : memref<1064x256xf32, #tpu.memory_space<vmem>>, vector<1x32xf32>
    %84 = vector.broadcast %83 : vector<1x32xf32> to vector<2x32xf32>
    %85 = arith.addf %82, %84 : vector<2x32xf32>
    %86 = vector.extract_strided_slice %85 {offsets = [0, 0], sizes = [1, 32], strides = [1, 1]} : vector<2x32xf32> to vector<1x32xf32>
    %87 = vector.shape_cast %86 : vector<1x32xf32> to vector<1x32xf32>
    %88 = vector.broadcast %87 : vector<1x32xf32> to vector<26x32xf32>
    %89 = vector.extract_strided_slice %85 {offsets = [1, 0], sizes = [1, 32], strides = [1, 1]} : vector<2x32xf32> to vector<1x32xf32>
    %90 = vector.shape_cast %89 : vector<1x32xf32> to vector<1x32xf32>
    %91 = vector.broadcast %90 : vector<1x32xf32> to vector<26x32xf32>
    %92 = tpu.concatenate %88, %91 in 0 : vector<26x32xf32>, vector<26x32xf32> -> vector<52x32xf32>
    %93 = arith.addf %80, %92 : vector<52x32xf32>
    %94 = vector.extract_strided_slice %93 {offsets = [0, 0], sizes = [26, 32], strides = [1, 1]} : vector<52x32xf32> to vector<26x32xf32>
    %cst_25 = arith.constant dense<0.000000e+00> : vector<32xf32>
    %95 = vector.multi_reduction <add>, %94, %cst_25 [0] : vector<26x32xf32> to vector<32xf32>
    %96 = vector.shape_cast %95 : vector<32xf32> to vector<1x32xf32>
    %97 = arith.mulf %94, %94 : vector<26x32xf32>
    %cst_26 = arith.constant dense<0.000000e+00> : vector<32xf32>
    %98 = vector.multi_reduction <add>, %97, %cst_26 [0] : vector<26x32xf32> to vector<32xf32>
    %99 = vector.shape_cast %98 : vector<32xf32> to vector<1x32xf32>
    %100 = vector.extract_strided_slice %93 {offsets = [26, 0], sizes = [26, 32], strides = [1, 1]} : vector<52x32xf32> to vector<26x32xf32>
    %cst_27 = arith.constant dense<0.000000e+00> : vector<32xf32>
    %101 = vector.multi_reduction <add>, %100, %cst_27 [0] : vector<26x32xf32> to vector<32xf32>
    %102 = vector.shape_cast %101 : vector<32xf32> to vector<1x32xf32>
    %103 = arith.mulf %100, %100 : vector<26x32xf32>
    %cst_28 = arith.constant dense<0.000000e+00> : vector<32xf32>
    %104 = vector.multi_reduction <add>, %103, %cst_28 [0] : vector<26x32xf32> to vector<32xf32>
    %105 = vector.shape_cast %104 : vector<32xf32> to vector<1x32xf32>
    %106 = tpu.concatenate %96, %102, %99, %105 in 0 : vector<1x32xf32>, vector<1x32xf32>, vector<1x32xf32>, vector<1x32xf32> -> vector<4x32xf32>
    %c216 = arith.constant 216 : index
    %c0_29 = arith.constant 0 : index
    %107 = vector.load %arg4[%c216, %c0_29] : memref<1064x256xf32, #tpu.memory_space<vmem>>, vector<32x32xf32>
    %cst_30 = arith.constant dense<0.000000e+00> : vector<4x32xf32>
    %108 = tpu.matmul %106, %107, %cst_30 {dimension_numbers = #tpu.dot_dimension_numbers<[1], [0], [0], [1], [0, 0, 1, 1], [], []>} : vector<4x32xf32>, vector<32x32xf32>, vector<4x32xf32> -> vector<4x32xf32>
    %cst_31 = arith.constant 0.00480769249 : f32
    %109 = vector.broadcast %cst_31 : f32 to vector<4x32xf32>
    %110 = arith.mulf %108, %109 : vector<4x32xf32>
    %111 = vector.extract_strided_slice %110 {offsets = [0, 0], sizes = [2, 32], strides = [1, 1]} : vector<4x32xf32> to vector<2x32xf32>
    %112 = vector.extract_strided_slice %110 {offsets = [2, 0], sizes = [2, 32], strides = [1, 1]} : vector<4x32xf32> to vector<2x32xf32>
    %113 = arith.mulf %111, %111 : vector<2x32xf32>
    %114 = arith.subf %112, %113 : vector<2x32xf32>
    %cst_32 = arith.constant 0.000000e+00 : f32
    %115 = vector.broadcast %cst_32 : f32 to vector<2x32xf32>
    %116 = arith.maximumf %114, %115 : vector<2x32xf32>
    %117 = vector.extract_strided_slice %111 {offsets = [0, 0], sizes = [1, 32], strides = [1, 1]} : vector<2x32xf32> to vector<1x32xf32>
    %118 = vector.shape_cast %117 : vector<1x32xf32> to vector<1x32xf32>
    %119 = vector.broadcast %118 : vector<1x32xf32> to vector<26x32xf32>
    %120 = vector.extract_strided_slice %111 {offsets = [1, 0], sizes = [1, 32], strides = [1, 1]} : vector<2x32xf32> to vector<1x32xf32>
    %121 = vector.shape_cast %120 : vector<1x32xf32> to vector<1x32xf32>
    %122 = vector.broadcast %121 : vector<1x32xf32> to vector<26x32xf32>
    %123 = tpu.concatenate %119, %122 in 0 : vector<26x32xf32>, vector<26x32xf32> -> vector<52x32xf32>
    %124 = vector.extract_strided_slice %116 {offsets = [0, 0], sizes = [1, 32], strides = [1, 1]} : vector<2x32xf32> to vector<1x32xf32>
    %cst_33 = arith.constant 9.99999974E-6 : f32
    %125 = vector.broadcast %cst_33 : f32 to vector<1x32xf32>
    %126 = arith.addf %124, %125 : vector<1x32xf32>
    %127 = math.rsqrt %126 : vector<1x32xf32>
    %128 = vector.shape_cast %127 : vector<1x32xf32> to vector<1x32xf32>
    %129 = vector.broadcast %128 : vector<1x32xf32> to vector<26x32xf32>
    %130 = vector.extract_strided_slice %116 {offsets = [1, 0], sizes = [1, 32], strides = [1, 1]} : vector<2x32xf32> to vector<1x32xf32>
    %cst_34 = arith.constant 9.99999974E-6 : f32
    %131 = vector.broadcast %cst_34 : f32 to vector<1x32xf32>
    %132 = arith.addf %130, %131 : vector<1x32xf32>
    %133 = math.rsqrt %132 : vector<1x32xf32>
    %134 = vector.shape_cast %133 : vector<1x32xf32> to vector<1x32xf32>
    %135 = vector.broadcast %134 : vector<1x32xf32> to vector<26x32xf32>
    %136 = tpu.concatenate %129, %135 in 0 : vector<26x32xf32>, vector<26x32xf32> -> vector<52x32xf32>
    %137 = arith.subf %93, %123 : vector<52x32xf32>
    %138 = arith.mulf %137, %136 : vector<52x32xf32>
    %c200 = arith.constant 200 : index
    %c0_35 = arith.constant 0 : index
    %139 = vector.load %arg4[%c200, %c0_35] : memref<1064x256xf32, #tpu.memory_space<vmem>>, vector<1x32xf32>
    %140 = vector.broadcast %139 : vector<1x32xf32> to vector<52x32xf32>
    %141 = arith.mulf %138, %140 : vector<52x32xf32>
    %c208 = arith.constant 208 : index
    %c0_36 = arith.constant 0 : index
    %142 = vector.load %arg4[%c208, %c0_36] : memref<1064x256xf32, #tpu.memory_space<vmem>>, vector<1x32xf32>
    %143 = vector.broadcast %142 : vector<1x32xf32> to vector<52x32xf32>
    %144 = arith.addf %141, %143 : vector<52x32xf32>
    %cst_37 = arith.constant 0.000000e+00 : f32
    %145 = vector.broadcast %cst_37 : f32 to vector<52x32xf32>
    %146 = arith.subf %145, %144 : vector<52x32xf32>
    %147 = math.exp %146 : vector<52x32xf32>
    %cst_38 = arith.constant 1.000000e+00 : f32
    %148 = vector.broadcast %cst_38 : f32 to vector<52x32xf32>
    %149 = arith.addf %148, %147 : vector<52x32xf32>
    %150 = tpu.reciprocal %149 {approx = true} : vector<52x32xf32> -> vector<52x32xf32>
    %151 = arith.mulf %144, %150 : vector<52x32xf32>
    %c128 = arith.constant 128 : index
    %c0_39 = arith.constant 0 : index
    %152 = vector.load %arg3[%c128, %c0_39] : memref<1776x384xbf16, #tpu.memory_space<vmem>>, vector<72x52xbf16>
    %153 = arith.truncf %151 : vector<52x32xf32> to vector<52x32xbf16>
    %cst_40 = arith.constant dense<0.000000e+00> : vector<72x32xf32>
    %154 = tpu.matmul %152, %153, %cst_40 {dimension_numbers = #tpu.dot_dimension_numbers<[1], [0], [0], [1], [0, 0, 1, 1], [], []>} : vector<72x52xbf16>, vector<52x32xbf16>, vector<72x32xf32> -> vector<72x32xf32>
    %155 = vector.extract_strided_slice %154 {offsets = [0, 0], sizes = [24, 32], strides = [1, 1]} : vector<72x32xf32> to vector<24x32xf32>
    %156 = vector.extract_strided_slice %154 {offsets = [24, 0], sizes = [24, 32], strides = [1, 1]} : vector<72x32xf32> to vector<24x32xf32>
    %157 = vector.extract_strided_slice %154 {offsets = [48, 0], sizes = [24, 32], strides = [1, 1]} : vector<72x32xf32> to vector<24x32xf32>
    %158 = tpu.concatenate %155, %156, %157 in 1 : vector<24x32xf32>, vector<24x32xf32>, vector<24x32xf32> -> vector<24x96xf32>
    %159 = arith.truncf %158 : vector<24x96xf32> to vector<24x96xbf16>
    %c32 = arith.constant 32 : index
    %c0_41 = arith.constant 0 : index
    %160 = vector.load %arg3[%c32, %c0_41] : memref<1776x384xbf16, #tpu.memory_space<vmem>>, vector<96x64xbf16>
    %cst_42 = arith.constant dense<0.000000e+00> : vector<24x64xf32>
    %161 = tpu.matmul %159, %160, %cst_42 {dimension_numbers = #tpu.dot_dimension_numbers<[1], [0], [0], [1], [0, 0, 1, 1], [], []>} : vector<24x96xbf16>, vector<96x64xbf16>, vector<24x64xf32> -> vector<24x64xf32>
    %c208_43 = arith.constant 208 : index
    %c0_44 = arith.constant 0 : index
    %162 = vector.load %arg3[%c208_43, %c0_44] : memref<1776x384xbf16, #tpu.memory_space<vmem>>, vector<32x64xbf16>
    %cst_45 = arith.constant dense<0.000000e+00> : vector<2x64xf32>
    %163 = tpu.matmul %37, %162, %cst_45 {dimension_numbers = #tpu.dot_dimension_numbers<[1], [0], [0], [1], [0, 0, 1, 1], [], []>} : vector<2x32xbf16>, vector<32x64xbf16>, vector<2x64xf32> -> vector<2x64xf32>
    %c248 = arith.constant 248 : index
    %c0_46 = arith.constant 0 : index
    %164 = vector.load %arg4[%c248, %c0_46] : memref<1064x256xf32, #tpu.memory_space<vmem>>, vector<1x64xf32>
    %165 = vector.broadcast %164 : vector<1x64xf32> to vector<2x64xf32>
    %166 = arith.addf %163, %165 : vector<2x64xf32>
    %167 = vector.extract_strided_slice %166 {offsets = [0, 0], sizes = [1, 64], strides = [1, 1]} : vector<2x64xf32> to vector<1x64xf32>
    %168 = vector.shape_cast %167 : vector<1x64xf32> to vector<1x64xf32>
    %169 = vector.broadcast %168 : vector<1x64xf32> to vector<12x64xf32>
    %170 = vector.extract_strided_slice %166 {offsets = [1, 0], sizes = [1, 64], strides = [1, 1]} : vector<2x64xf32> to vector<1x64xf32>
    %171 = vector.shape_cast %170 : vector<1x64xf32> to vector<1x64xf32>
    %172 = vector.broadcast %171 : vector<1x64xf32> to vector<12x64xf32>
    %173 = tpu.concatenate %169, %172 in 0 : vector<12x64xf32>, vector<12x64xf32> -> vector<24x64xf32>
    %174 = arith.addf %161, %173 : vector<24x64xf32>
    %175 = vector.extract_strided_slice %174 {offsets = [0, 0], sizes = [12, 64], strides = [1, 1]} : vector<24x64xf32> to vector<12x64xf32>
    %cst_47 = arith.constant dense<0.000000e+00> : vector<64xf32>
    %176 = vector.multi_reduction <add>, %175, %cst_47 [0] : vector<12x64xf32> to vector<64xf32>
    %177 = vector.shape_cast %176 : vector<64xf32> to vector<1x64xf32>
    %178 = arith.mulf %175, %175 : vector<12x64xf32>
    %cst_48 = arith.constant dense<0.000000e+00> : vector<64xf32>
    %179 = vector.multi_reduction <add>, %178, %cst_48 [0] : vector<12x64xf32> to vector<64xf32>
    %180 = vector.shape_cast %179 : vector<64xf32> to vector<1x64xf32>
    %181 = vector.extract_strided_slice %174 {offsets = [12, 0], sizes = [12, 64], strides = [1, 1]} : vector<24x64xf32> to vector<12x64xf32>
    %cst_49 = arith.constant dense<0.000000e+00> : vector<64xf32>
    %182 = vector.multi_reduction <add>, %181, %cst_49 [0] : vector<12x64xf32> to vector<64xf32>
    %183 = vector.shape_cast %182 : vector<64xf32> to vector<1x64xf32>
    %184 = arith.mulf %181, %181 : vector<12x64xf32>
    %cst_50 = arith.constant dense<0.000000e+00> : vector<64xf32>
    %185 = vector.multi_reduction <add>, %184, %cst_50 [0] : vector<12x64xf32> to vector<64xf32>
    %186 = vector.shape_cast %185 : vector<64xf32> to vector<1x64xf32>
    %187 = tpu.concatenate %177, %183, %180, %186 in 0 : vector<1x64xf32>, vector<1x64xf32>, vector<1x64xf32>, vector<1x64xf32> -> vector<4x64xf32>
    %c272 = arith.constant 272 : index
    %c0_51 = arith.constant 0 : index
    %188 = vector.load %arg4[%c272, %c0_51] : memref<1064x256xf32, #tpu.memory_space<vmem>>, vector<64x64xf32>
    %cst_52 = arith.constant dense<0.000000e+00> : vector<4x64xf32>
    %189 = tpu.matmul %187, %188, %cst_52 {dimension_numbers = #tpu.dot_dimension_numbers<[1], [0], [0], [1], [0, 0, 1, 1], [], []>} : vector<4x64xf32>, vector<64x64xf32>, vector<4x64xf32> -> vector<4x64xf32>
    %cst_53 = arith.constant 0.0416666679 : f32
    %190 = vector.broadcast %cst_53 : f32 to vector<4x64xf32>
    %191 = arith.mulf %189, %190 : vector<4x64xf32>
    %192 = vector.extract_strided_slice %191 {offsets = [0, 0], sizes = [2, 64], strides = [1, 1]} : vector<4x64xf32> to vector<2x64xf32>
    %193 = vector.extract_strided_slice %191 {offsets = [2, 0], sizes = [2, 64], strides = [1, 1]} : vector<4x64xf32> to vector<2x64xf32>
    %194 = arith.mulf %192, %192 : vector<2x64xf32>
    %195 = arith.subf %193, %194 : vector<2x64xf32>
    %cst_54 = arith.constant 0.000000e+00 : f32
    %196 = vector.broadcast %cst_54 : f32 to vector<2x64xf32>
    %197 = arith.maximumf %195, %196 : vector<2x64xf32>
    %198 = vector.extract_strided_slice %192 {offsets = [0, 0], sizes = [1, 64], strides = [1, 1]} : vector<2x64xf32> to vector<1x64xf32>
    %199 = vector.shape_cast %198 : vector<1x64xf32> to vector<1x64xf32>
    %200 = vector.broadcast %199 : vector<1x64xf32> to vector<12x64xf32>
    %201 = vector.extract_strided_slice %192 {offsets = [1, 0], sizes = [1, 64], strides = [1, 1]} : vector<2x64xf32> to vector<1x64xf32>
    %202 = vector.shape_cast %201 : vector<1x64xf32> to vector<1x64xf32>
    %203 = vector.broadcast %202 : vector<1x64xf32> to vector<12x64xf32>
    %204 = tpu.concatenate %200, %203 in 0 : vector<12x64xf32>, vector<12x64xf32> -> vector<24x64xf32>
    %205 = vector.extract_strided_slice %197 {offsets = [0, 0], sizes = [1, 64], strides = [1, 1]} : vector<2x64xf32> to vector<1x64xf32>
    %cst_55 = arith.constant 9.99999974E-6 : f32
    %206 = vector.broadcast %cst_55 : f32 to vector<1x64xf32>
    %207 = arith.addf %205, %206 : vector<1x64xf32>
    %208 = math.rsqrt %207 : vector<1x64xf32>
    %209 = vector.shape_cast %208 : vector<1x64xf32> to vector<1x64xf32>
    %210 = vector.broadcast %209 : vector<1x64xf32> to vector<12x64xf32>
    %211 = vector.extract_strided_slice %197 {offsets = [1, 0], sizes = [1, 64], strides = [1, 1]} : vector<2x64xf32> to vector<1x64xf32>
    %cst_56 = arith.constant 9.99999974E-6 : f32
    %212 = vector.broadcast %cst_56 : f32 to vector<1x64xf32>
    %213 = arith.addf %211, %212 : vector<1x64xf32>
    %214 = math.rsqrt %213 : vector<1x64xf32>
    %215 = vector.shape_cast %214 : vector<1x64xf32> to vector<1x64xf32>
    %216 = vector.broadcast %215 : vector<1x64xf32> to vector<12x64xf32>
    %217 = tpu.concatenate %210, %216 in 0 : vector<12x64xf32>, vector<12x64xf32> -> vector<24x64xf32>
    %218 = arith.subf %174, %204 : vector<24x64xf32>
    %219 = arith.mulf %218, %217 : vector<24x64xf32>
    %c256 = arith.constant 256 : index
    %c0_57 = arith.constant 0 : index
    %220 = vector.load %arg4[%c256, %c0_57] : memref<1064x256xf32, #tpu.memory_space<vmem>>, vector<1x64xf32>
    %221 = vector.broadcast %220 : vector<1x64xf32> to vector<24x64xf32>
    %222 = arith.mulf %219, %221 : vector<24x64xf32>
    %c264 = arith.constant 264 : index
    %c0_58 = arith.constant 0 : index
    %223 = vector.load %arg4[%c264, %c0_58] : memref<1064x256xf32, #tpu.memory_space<vmem>>, vector<1x64xf32>
    %224 = vector.broadcast %223 : vector<1x64xf32> to vector<24x64xf32>
    %225 = arith.addf %222, %224 : vector<24x64xf32>
    %cst_59 = arith.constant 0.000000e+00 : f32
    %226 = vector.broadcast %cst_59 : f32 to vector<24x64xf32>
    %227 = arith.subf %226, %225 : vector<24x64xf32>
    %228 = math.exp %227 : vector<24x64xf32>
    %cst_60 = arith.constant 1.000000e+00 : f32
    %229 = vector.broadcast %cst_60 : f32 to vector<24x64xf32>
    %230 = arith.addf %229, %228 : vector<24x64xf32>
    %231 = tpu.reciprocal %230 {approx = true} : vector<24x64xf32> -> vector<24x64xf32>
    %232 = arith.mulf %225, %231 : vector<24x64xf32>
    %c432 = arith.constant 432 : index
    %c0_61 = arith.constant 0 : index
    %233 = vector.load %arg3[%c432, %c0_61] : memref<1776x384xbf16, #tpu.memory_space<vmem>>, vector<30x24xbf16>
    %234 = arith.truncf %232 : vector<24x64xf32> to vector<24x64xbf16>
    %cst_62 = arith.constant dense<0.000000e+00> : vector<30x64xf32>
    %235 = tpu.matmul %233, %234, %cst_62 {dimension_numbers = #tpu.dot_dimension_numbers<[1], [0], [0], [1], [0, 0, 1, 1], [], []>} : vector<30x24xbf16>, vector<24x64xbf16>, vector<30x64xf32> -> vector<30x64xf32>
    %236 = vector.extract_strided_slice %235 {offsets = [0, 0], sizes = [10, 64], strides = [1, 1]} : vector<30x64xf32> to vector<10x64xf32>
    %237 = vector.extract_strided_slice %235 {offsets = [10, 0], sizes = [10, 64], strides = [1, 1]} : vector<30x64xf32> to vector<10x64xf32>
    %238 = vector.extract_strided_slice %235 {offsets = [20, 0], sizes = [10, 64], strides = [1, 1]} : vector<30x64xf32> to vector<10x64xf32>
    %239 = tpu.concatenate %236, %237, %238 in 1 : vector<10x64xf32>, vector<10x64xf32>, vector<10x64xf32> -> vector<10x192xf32>
    %240 = arith.truncf %239 : vector<10x192xf32> to vector<10x192xbf16>
    %c240 = arith.constant 240 : index
    %c0_63 = arith.constant 0 : index
    %241 = vector.load %arg3[%c240, %c0_63] : memref<1776x384xbf16, #tpu.memory_space<vmem>>, vector<192x128xbf16>
    %cst_64 = arith.constant dense<0.000000e+00> : vector<10x128xf32>
    %242 = tpu.matmul %240, %241, %cst_64 {dimension_numbers = #tpu.dot_dimension_numbers<[1], [0], [0], [1], [0, 0, 1, 1], [], []>} : vector<10x192xbf16>, vector<192x128xbf16>, vector<10x128xf32> -> vector<10x128xf32>
    %c464 = arith.constant 464 : index
    %c0_65 = arith.constant 0 : index
    %243 = vector.load %arg3[%c464, %c0_65] : memref<1776x384xbf16, #tpu.memory_space<vmem>>, vector<32x128xbf16>
    %cst_66 = arith.constant dense<0.000000e+00> : vector<2x128xf32>
    %244 = tpu.matmul %37, %243, %cst_66 {dimension_numbers = #tpu.dot_dimension_numbers<[1], [0], [0], [1], [0, 0, 1, 1], [], []>} : vector<2x32xbf16>, vector<32x128xbf16>, vector<2x128xf32> -> vector<2x128xf32>
    %c336 = arith.constant 336 : index
    %c0_67 = arith.constant 0 : index
    %245 = vector.load %arg4[%c336, %c0_67] : memref<1064x256xf32, #tpu.memory_space<vmem>>, vector<1x128xf32>
    %246 = vector.broadcast %245 : vector<1x128xf32> to vector<2x128xf32>
    %247 = arith.addf %244, %246 : vector<2x128xf32>
    %248 = vector.extract_strided_slice %247 {offsets = [0, 0], sizes = [1, 128], strides = [1, 1]} : vector<2x128xf32> to vector<1x128xf32>
    %249 = vector.shape_cast %248 : vector<1x128xf32> to vector<1x128xf32>
    %250 = vector.broadcast %249 : vector<1x128xf32> to vector<5x128xf32>
    %251 = vector.extract_strided_slice %247 {offsets = [1, 0], sizes = [1, 128], strides = [1, 1]} : vector<2x128xf32> to vector<1x128xf32>
    %252 = vector.shape_cast %251 : vector<1x128xf32> to vector<1x128xf32>
    %253 = vector.broadcast %252 : vector<1x128xf32> to vector<5x128xf32>
    %254 = tpu.concatenate %250, %253 in 0 : vector<5x128xf32>, vector<5x128xf32> -> vector<10x128xf32>
    %255 = arith.addf %242, %254 : vector<10x128xf32>
    %256 = vector.extract_strided_slice %255 {offsets = [0, 0], sizes = [5, 128], strides = [1, 1]} : vector<10x128xf32> to vector<5x128xf32>
    %cst_68 = arith.constant dense<0.000000e+00> : vector<128xf32>
    %257 = vector.multi_reduction <add>, %256, %cst_68 [0] : vector<5x128xf32> to vector<128xf32>
    %258 = vector.shape_cast %257 : vector<128xf32> to vector<1x128xf32>
    %259 = arith.mulf %256, %256 : vector<5x128xf32>
    %cst_69 = arith.constant dense<0.000000e+00> : vector<128xf32>
    %260 = vector.multi_reduction <add>, %259, %cst_69 [0] : vector<5x128xf32> to vector<128xf32>
    %261 = vector.shape_cast %260 : vector<128xf32> to vector<1x128xf32>
    %262 = vector.extract_strided_slice %255 {offsets = [5, 0], sizes = [5, 128], strides = [1, 1]} : vector<10x128xf32> to vector<5x128xf32>
    %cst_70 = arith.constant dense<0.000000e+00> : vector<128xf32>
    %263 = vector.multi_reduction <add>, %262, %cst_70 [0] : vector<5x128xf32> to vector<128xf32>
    %264 = vector.shape_cast %263 : vector<128xf32> to vector<1x128xf32>
    %265 = arith.mulf %262, %262 : vector<5x128xf32>
    %cst_71 = arith.constant dense<0.000000e+00> : vector<128xf32>
    %266 = vector.multi_reduction <add>, %265, %cst_71 [0] : vector<5x128xf32> to vector<128xf32>
    %267 = vector.shape_cast %266 : vector<128xf32> to vector<1x128xf32>
    %268 = tpu.concatenate %258, %264, %261, %267 in 0 : vector<1x128xf32>, vector<1x128xf32>, vector<1x128xf32>, vector<1x128xf32> -> vector<4x128xf32>
    %c360 = arith.constant 360 : index
    %c0_72 = arith.constant 0 : index
    %269 = vector.load %arg4[%c360, %c0_72] : memref<1064x256xf32, #tpu.memory_space<vmem>>, vector<128x128xf32>
    %cst_73 = arith.constant dense<0.000000e+00> : vector<4x128xf32>
    %270 = tpu.matmul %268, %269, %cst_73 {dimension_numbers = #tpu.dot_dimension_numbers<[1], [0], [0], [1], [0, 0, 1, 1], [], []>} : vector<4x128xf32>, vector<128x128xf32>, vector<4x128xf32> -> vector<4x128xf32>
    %cst_74 = arith.constant 5.000000e-02 : f32
    %271 = vector.broadcast %cst_74 : f32 to vector<4x128xf32>
    %272 = arith.mulf %270, %271 : vector<4x128xf32>
    %273 = vector.extract_strided_slice %272 {offsets = [0, 0], sizes = [2, 128], strides = [1, 1]} : vector<4x128xf32> to vector<2x128xf32>
    %274 = vector.extract_strided_slice %272 {offsets = [2, 0], sizes = [2, 128], strides = [1, 1]} : vector<4x128xf32> to vector<2x128xf32>
    %275 = arith.mulf %273, %273 : vector<2x128xf32>
    %276 = arith.subf %274, %275 : vector<2x128xf32>
    %cst_75 = arith.constant 0.000000e+00 : f32
    %277 = vector.broadcast %cst_75 : f32 to vector<2x128xf32>
    %278 = arith.maximumf %276, %277 : vector<2x128xf32>
    %279 = vector.extract_strided_slice %273 {offsets = [0, 0], sizes = [1, 128], strides = [1, 1]} : vector<2x128xf32> to vector<1x128xf32>
    %280 = vector.shape_cast %279 : vector<1x128xf32> to vector<1x128xf32>
    %281 = vector.broadcast %280 : vector<1x128xf32> to vector<5x128xf32>
    %282 = vector.extract_strided_slice %273 {offsets = [1, 0], sizes = [1, 128], strides = [1, 1]} : vector<2x128xf32> to vector<1x128xf32>
    %283 = vector.shape_cast %282 : vector<1x128xf32> to vector<1x128xf32>
    %284 = vector.broadcast %283 : vector<1x128xf32> to vector<5x128xf32>
    %285 = tpu.concatenate %281, %284 in 0 : vector<5x128xf32>, vector<5x128xf32> -> vector<10x128xf32>
    %286 = vector.extract_strided_slice %278 {offsets = [0, 0], sizes = [1, 128], strides = [1, 1]} : vector<2x128xf32> to vector<1x128xf32>
    %cst_76 = arith.constant 9.99999974E-6 : f32
    %287 = vector.broadcast %cst_76 : f32 to vector<1x128xf32>
    %288 = arith.addf %286, %287 : vector<1x128xf32>
    %289 = math.rsqrt %288 : vector<1x128xf32>
    %290 = vector.shape_cast %289 : vector<1x128xf32> to vector<1x128xf32>
    %291 = vector.broadcast %290 : vector<1x128xf32> to vector<5x128xf32>
    %292 = vector.extract_strided_slice %278 {offsets = [1, 0], sizes = [1, 128], strides = [1, 1]} : vector<2x128xf32> to vector<1x128xf32>
    %cst_77 = arith.constant 9.99999974E-6 : f32
    %293 = vector.broadcast %cst_77 : f32 to vector<1x128xf32>
    %294 = arith.addf %292, %293 : vector<1x128xf32>
    %295 = math.rsqrt %294 : vector<1x128xf32>
    %296 = vector.shape_cast %295 : vector<1x128xf32> to vector<1x128xf32>
    %297 = vector.broadcast %296 : vector<1x128xf32> to vector<5x128xf32>
    %298 = tpu.concatenate %291, %297 in 0 : vector<5x128xf32>, vector<5x128xf32> -> vector<10x128xf32>
    %299 = arith.subf %255, %285 : vector<10x128xf32>
    %300 = arith.mulf %299, %298 : vector<10x128xf32>
    %c344 = arith.constant 344 : index
    %c0_78 = arith.constant 0 : index
    %301 = vector.load %arg4[%c344, %c0_78] : memref<1064x256xf32, #tpu.memory_space<vmem>>, vector<1x128xf32>
    %302 = vector.broadcast %301 : vector<1x128xf32> to vector<10x128xf32>
    %303 = arith.mulf %300, %302 : vector<10x128xf32>
    %c352 = arith.constant 352 : index
    %c0_79 = arith.constant 0 : index
    %304 = vector.load %arg4[%c352, %c0_79] : memref<1064x256xf32, #tpu.memory_space<vmem>>, vector<1x128xf32>
    %305 = vector.broadcast %304 : vector<1x128xf32> to vector<10x128xf32>
    %306 = arith.addf %303, %305 : vector<10x128xf32>
    %cst_80 = arith.constant 0.000000e+00 : f32
    %307 = vector.broadcast %cst_80 : f32 to vector<10x128xf32>
    %308 = arith.subf %307, %306 : vector<10x128xf32>
    %309 = math.exp %308 : vector<10x128xf32>
    %cst_81 = arith.constant 1.000000e+00 : f32
    %310 = vector.broadcast %cst_81 : f32 to vector<10x128xf32>
    %311 = arith.addf %310, %309 : vector<10x128xf32>
    %312 = tpu.reciprocal %311 {approx = true} : vector<10x128xf32> -> vector<10x128xf32>
    %313 = arith.mulf %306, %312 : vector<10x128xf32>
    %c880 = arith.constant 880 : index
    %c0_82 = arith.constant 0 : index
    %314 = vector.load %arg3[%c880, %c0_82] : memref<1776x384xbf16, #tpu.memory_space<vmem>>, vector<12x10xbf16>
    %315 = arith.truncf %313 : vector<10x128xf32> to vector<10x128xbf16>
    %cst_83 = arith.constant dense<0.000000e+00> : vector<12x128xf32>
    %316 = tpu.matmul %314, %315, %cst_83 {dimension_numbers = #tpu.dot_dimension_numbers<[1], [0], [0], [1], [0, 0, 1, 1], [], []>} : vector<12x10xbf16>, vector<10x128xbf16>, vector<12x128xf32> -> vector<12x128xf32>
    %317 = vector.extract_strided_slice %316 {offsets = [0, 0], sizes = [4, 128], strides = [1, 1]} : vector<12x128xf32> to vector<4x128xf32>
    %318 = vector.extract_strided_slice %316 {offsets = [4, 0], sizes = [4, 128], strides = [1, 1]} : vector<12x128xf32> to vector<4x128xf32>
    %319 = vector.extract_strided_slice %316 {offsets = [8, 0], sizes = [4, 128], strides = [1, 1]} : vector<12x128xf32> to vector<4x128xf32>
    %320 = tpu.concatenate %317, %318, %319 in 1 : vector<4x128xf32>, vector<4x128xf32>, vector<4x128xf32> -> vector<4x384xf32>
    %321 = arith.truncf %320 : vector<4x384xf32> to vector<4x384xbf16>
    %c496 = arith.constant 496 : index
    %c0_84 = arith.constant 0 : index
    %322 = vector.load %arg3[%c496, %c0_84] : memref<1776x384xbf16, #tpu.memory_space<vmem>>, vector<384x256xbf16>
    %cst_85 = arith.constant dense<0.000000e+00> : vector<4x256xf32>
    %323 = tpu.matmul %321, %322, %cst_85 {dimension_numbers = #tpu.dot_dimension_numbers<[1], [0], [0], [1], [0, 0, 1, 1], [], []>} : vector<4x384xbf16>, vector<384x256xbf16>, vector<4x256xf32> -> vector<4x256xf32>
    %c896 = arith.constant 896 : index
    %c0_86 = arith.constant 0 : index
    %324 = vector.load %arg3[%c896, %c0_86] : memref<1776x384xbf16, #tpu.memory_space<vmem>>, vector<32x256xbf16>
    %cst_87 = arith.constant dense<0.000000e+00> : vector<2x256xf32>
    %325 = tpu.matmul %37, %324, %cst_87 {dimension_numbers = #tpu.dot_dimension_numbers<[1], [0], [0], [1], [0, 0, 1, 1], [], []>} : vector<2x32xbf16>, vector<32x256xbf16>, vector<2x256xf32> -> vector<2x256xf32>
    %c488 = arith.constant 488 : index
    %c0_88 = arith.constant 0 : index
    %326 = vector.load %arg4[%c488, %c0_88] : memref<1064x256xf32, #tpu.memory_space<vmem>>, vector<1x256xf32>
    %327 = vector.broadcast %326 : vector<1x256xf32> to vector<2x256xf32>
    %328 = arith.addf %325, %327 : vector<2x256xf32>
    %329 = vector.extract_strided_slice %328 {offsets = [0, 0], sizes = [1, 256], strides = [1, 1]} : vector<2x256xf32> to vector<1x256xf32>
    %330 = vector.shape_cast %329 : vector<1x256xf32> to vector<1x256xf32>
    %331 = vector.broadcast %330 : vector<1x256xf32> to vector<2x256xf32>
    %332 = vector.extract_strided_slice %328 {offsets = [1, 0], sizes = [1, 256], strides = [1, 1]} : vector<2x256xf32> to vector<1x256xf32>
    %333 = vector.shape_cast %332 : vector<1x256xf32> to vector<1x256xf32>
    %334 = vector.broadcast %333 : vector<1x256xf32> to vector<2x256xf32>
    %335 = tpu.concatenate %331, %334 in 0 : vector<2x256xf32>, vector<2x256xf32> -> vector<4x256xf32>
    %336 = arith.addf %323, %335 : vector<4x256xf32>
    %337 = vector.extract_strided_slice %336 {offsets = [0, 0], sizes = [2, 256], strides = [1, 1]} : vector<4x256xf32> to vector<2x256xf32>
    %cst_89 = arith.constant dense<0.000000e+00> : vector<256xf32>
    %338 = vector.multi_reduction <add>, %337, %cst_89 [0] : vector<2x256xf32> to vector<256xf32>
    %339 = vector.shape_cast %338 : vector<256xf32> to vector<1x256xf32>
    %340 = arith.mulf %337, %337 : vector<2x256xf32>
    %cst_90 = arith.constant dense<0.000000e+00> : vector<256xf32>
    %341 = vector.multi_reduction <add>, %340, %cst_90 [0] : vector<2x256xf32> to vector<256xf32>
    %342 = vector.shape_cast %341 : vector<256xf32> to vector<1x256xf32>
    %343 = vector.extract_strided_slice %336 {offsets = [2, 0], sizes = [2, 256], strides = [1, 1]} : vector<4x256xf32> to vector<2x256xf32>
    %cst_91 = arith.constant dense<0.000000e+00> : vector<256xf32>
    %344 = vector.multi_reduction <add>, %343, %cst_91 [0] : vector<2x256xf32> to vector<256xf32>
    %345 = vector.shape_cast %344 : vector<256xf32> to vector<1x256xf32>
    %346 = arith.mulf %343, %343 : vector<2x256xf32>
    %cst_92 = arith.constant dense<0.000000e+00> : vector<256xf32>
    %347 = vector.multi_reduction <add>, %346, %cst_92 [0] : vector<2x256xf32> to vector<256xf32>
    %348 = vector.shape_cast %347 : vector<256xf32> to vector<1x256xf32>
    %349 = tpu.concatenate %339, %345, %342, %348 in 0 : vector<1x256xf32>, vector<1x256xf32>, vector<1x256xf32>, vector<1x256xf32> -> vector<4x256xf32>
    %c512 = arith.constant 512 : index
    %c0_93 = arith.constant 0 : index
    %350 = vector.load %arg4[%c512, %c0_93] : memref<1064x256xf32, #tpu.memory_space<vmem>>, vector<256x256xf32>
    %cst_94 = arith.constant dense<0.000000e+00> : vector<4x256xf32>
    %351 = tpu.matmul %349, %350, %cst_94 {dimension_numbers = #tpu.dot_dimension_numbers<[1], [0], [0], [1], [0, 0, 1, 1], [], []>} : vector<4x256xf32>, vector<256x256xf32>, vector<4x256xf32> -> vector<4x256xf32>
    %cst_95 = arith.constant 6.250000e-02 : f32
    %352 = vector.broadcast %cst_95 : f32 to vector<4x256xf32>
    %353 = arith.mulf %351, %352 : vector<4x256xf32>
    %354 = vector.extract_strided_slice %353 {offsets = [0, 0], sizes = [2, 256], strides = [1, 1]} : vector<4x256xf32> to vector<2x256xf32>
    %355 = vector.extract_strided_slice %353 {offsets = [2, 0], sizes = [2, 256], strides = [1, 1]} : vector<4x256xf32> to vector<2x256xf32>
    %356 = arith.mulf %354, %354 : vector<2x256xf32>
    %357 = arith.subf %355, %356 : vector<2x256xf32>
    %cst_96 = arith.constant 0.000000e+00 : f32
    %358 = vector.broadcast %cst_96 : f32 to vector<2x256xf32>
    %359 = arith.maximumf %357, %358 : vector<2x256xf32>
    %360 = vector.extract_strided_slice %354 {offsets = [0, 0], sizes = [1, 256], strides = [1, 1]} : vector<2x256xf32> to vector<1x256xf32>
    %361 = vector.shape_cast %360 : vector<1x256xf32> to vector<1x256xf32>
    %362 = vector.broadcast %361 : vector<1x256xf32> to vector<2x256xf32>
    %363 = vector.extract_strided_slice %354 {offsets = [1, 0], sizes = [1, 256], strides = [1, 1]} : vector<2x256xf32> to vector<1x256xf32>
    %364 = vector.shape_cast %363 : vector<1x256xf32> to vector<1x256xf32>
    %365 = vector.broadcast %364 : vector<1x256xf32> to vector<2x256xf32>
    %366 = tpu.concatenate %362, %365 in 0 : vector<2x256xf32>, vector<2x256xf32> -> vector<4x256xf32>
    %367 = vector.extract_strided_slice %359 {offsets = [0, 0], sizes = [1, 256], strides = [1, 1]} : vector<2x256xf32> to vector<1x256xf32>
    %cst_97 = arith.constant 9.99999974E-6 : f32
    %368 = vector.broadcast %cst_97 : f32 to vector<1x256xf32>
    %369 = arith.addf %367, %368 : vector<1x256xf32>
    %370 = math.rsqrt %369 : vector<1x256xf32>
    %371 = vector.shape_cast %370 : vector<1x256xf32> to vector<1x256xf32>
    %372 = vector.broadcast %371 : vector<1x256xf32> to vector<2x256xf32>
    %373 = vector.extract_strided_slice %359 {offsets = [1, 0], sizes = [1, 256], strides = [1, 1]} : vector<2x256xf32> to vector<1x256xf32>
    %cst_98 = arith.constant 9.99999974E-6 : f32
    %374 = vector.broadcast %cst_98 : f32 to vector<1x256xf32>
    %375 = arith.addf %373, %374 : vector<1x256xf32>
    %376 = math.rsqrt %375 : vector<1x256xf32>
    %377 = vector.shape_cast %376 : vector<1x256xf32> to vector<1x256xf32>
    %378 = vector.broadcast %377 : vector<1x256xf32> to vector<2x256xf32>
    %379 = tpu.concatenate %372, %378 in 0 : vector<2x256xf32>, vector<2x256xf32> -> vector<4x256xf32>
    %380 = arith.subf %336, %366 : vector<4x256xf32>
    %381 = arith.mulf %380, %379 : vector<4x256xf32>
    %c496_99 = arith.constant 496 : index
    %c0_100 = arith.constant 0 : index
    %382 = vector.load %arg4[%c496_99, %c0_100] : memref<1064x256xf32, #tpu.memory_space<vmem>>, vector<1x256xf32>
    %383 = vector.broadcast %382 : vector<1x256xf32> to vector<4x256xf32>
    %384 = arith.mulf %381, %383 : vector<4x256xf32>
    %c504 = arith.constant 504 : index
    %c0_101 = arith.constant 0 : index
    %385 = vector.load %arg4[%c504, %c0_101] : memref<1064x256xf32, #tpu.memory_space<vmem>>, vector<1x256xf32>
    %386 = vector.broadcast %385 : vector<1x256xf32> to vector<4x256xf32>
    %387 = arith.addf %384, %386 : vector<4x256xf32>
    %cst_102 = arith.constant 0.000000e+00 : f32
    %388 = vector.broadcast %cst_102 : f32 to vector<4x256xf32>
    %389 = arith.subf %388, %387 : vector<4x256xf32>
    %390 = math.exp %389 : vector<4x256xf32>
    %cst_103 = arith.constant 1.000000e+00 : f32
    %391 = vector.broadcast %cst_103 : f32 to vector<4x256xf32>
    %392 = arith.addf %391, %390 : vector<4x256xf32>
    %393 = tpu.reciprocal %392 {approx = true} : vector<4x256xf32> -> vector<4x256xf32>
    %394 = arith.mulf %387, %393 : vector<4x256xf32>
    %395 = arith.truncf %394 : vector<4x256xf32> to vector<4x256xbf16>
    %c928 = arith.constant 928 : index
    %c0_104 = arith.constant 0 : index
    %396 = vector.load %arg3[%c928, %c0_104] : memref<1776x384xbf16, #tpu.memory_space<vmem>>, vector<256x384xbf16>
    %cst_105 = arith.constant dense<0.000000e+00> : vector<4x384xf32>
    %397 = tpu.matmul %395, %396, %cst_105 {dimension_numbers = #tpu.dot_dimension_numbers<[1], [0], [0], [1], [0, 0, 1, 1], [], []>} : vector<4x256xbf16>, vector<256x384xbf16>, vector<4x384xf32> -> vector<4x384xf32>
    %398 = vector.extract_strided_slice %397 {offsets = [0, 0], sizes = [4, 128], strides = [1, 1]} : vector<4x384xf32> to vector<4x128xf32>
    %399 = vector.extract_strided_slice %397 {offsets = [0, 128], sizes = [4, 128], strides = [1, 1]} : vector<4x384xf32> to vector<4x128xf32>
    %400 = vector.extract_strided_slice %397 {offsets = [0, 256], sizes = [4, 128], strides = [1, 1]} : vector<4x384xf32> to vector<4x128xf32>
    %401 = tpu.concatenate %398, %399, %400 in 0 : vector<4x128xf32>, vector<4x128xf32>, vector<4x128xf32> -> vector<12x128xf32>
    %c1184 = arith.constant 1184 : index
    %c0_106 = arith.constant 0 : index
    %402 = vector.load %arg3[%c1184, %c0_106] : memref<1776x384xbf16, #tpu.memory_space<vmem>>, vector<10x12xbf16>
    %403 = arith.truncf %401 : vector<12x128xf32> to vector<12x128xbf16>
    %cst_107 = arith.constant dense<0.000000e+00> : vector<10x128xf32>
    %404 = tpu.matmul %402, %403, %cst_107 {dimension_numbers = #tpu.dot_dimension_numbers<[1], [0], [0], [1], [0, 0, 1, 1], [], []>} : vector<10x12xbf16>, vector<12x128xbf16>, vector<10x128xf32> -> vector<10x128xf32>
    %c1200 = arith.constant 1200 : index
    %c0_108 = arith.constant 0 : index
    %405 = vector.load %arg3[%c1200, %c0_108] : memref<1776x384xbf16, #tpu.memory_space<vmem>>, vector<32x128xbf16>
    %cst_109 = arith.constant dense<0.000000e+00> : vector<2x128xf32>
    %406 = tpu.matmul %37, %405, %cst_109 {dimension_numbers = #tpu.dot_dimension_numbers<[1], [0], [0], [1], [0, 0, 1, 1], [], []>} : vector<2x32xbf16>, vector<32x128xbf16>, vector<2x128xf32> -> vector<2x128xf32>
    %c768 = arith.constant 768 : index
    %c0_110 = arith.constant 0 : index
    %407 = vector.load %arg4[%c768, %c0_110] : memref<1064x256xf32, #tpu.memory_space<vmem>>, vector<1x128xf32>
    %408 = vector.broadcast %407 : vector<1x128xf32> to vector<2x128xf32>
    %409 = arith.addf %406, %408 : vector<2x128xf32>
    %410 = vector.extract_strided_slice %409 {offsets = [0, 0], sizes = [1, 128], strides = [1, 1]} : vector<2x128xf32> to vector<1x128xf32>
    %411 = vector.shape_cast %410 : vector<1x128xf32> to vector<1x128xf32>
    %412 = vector.broadcast %411 : vector<1x128xf32> to vector<5x128xf32>
    %413 = vector.extract_strided_slice %409 {offsets = [1, 0], sizes = [1, 128], strides = [1, 1]} : vector<2x128xf32> to vector<1x128xf32>
    %414 = vector.shape_cast %413 : vector<1x128xf32> to vector<1x128xf32>
    %415 = vector.broadcast %414 : vector<1x128xf32> to vector<5x128xf32>
    %416 = tpu.concatenate %412, %415 in 0 : vector<5x128xf32>, vector<5x128xf32> -> vector<10x128xf32>
    %417 = arith.addf %404, %416 : vector<10x128xf32>
    %418 = vector.extract_strided_slice %417 {offsets = [0, 0], sizes = [5, 128], strides = [1, 1]} : vector<10x128xf32> to vector<5x128xf32>
    %cst_111 = arith.constant dense<0.000000e+00> : vector<128xf32>
    %419 = vector.multi_reduction <add>, %418, %cst_111 [0] : vector<5x128xf32> to vector<128xf32>
    %420 = vector.shape_cast %419 : vector<128xf32> to vector<1x128xf32>
    %421 = arith.mulf %418, %418 : vector<5x128xf32>
    %cst_112 = arith.constant dense<0.000000e+00> : vector<128xf32>
    %422 = vector.multi_reduction <add>, %421, %cst_112 [0] : vector<5x128xf32> to vector<128xf32>
    %423 = vector.shape_cast %422 : vector<128xf32> to vector<1x128xf32>
    %424 = vector.extract_strided_slice %417 {offsets = [5, 0], sizes = [5, 128], strides = [1, 1]} : vector<10x128xf32> to vector<5x128xf32>
    %cst_113 = arith.constant dense<0.000000e+00> : vector<128xf32>
    %425 = vector.multi_reduction <add>, %424, %cst_113 [0] : vector<5x128xf32> to vector<128xf32>
    %426 = vector.shape_cast %425 : vector<128xf32> to vector<1x128xf32>
    %427 = arith.mulf %424, %424 : vector<5x128xf32>
    %cst_114 = arith.constant dense<0.000000e+00> : vector<128xf32>
    %428 = vector.multi_reduction <add>, %427, %cst_114 [0] : vector<5x128xf32> to vector<128xf32>
    %429 = vector.shape_cast %428 : vector<128xf32> to vector<1x128xf32>
    %430 = tpu.concatenate %420, %426, %423, %429 in 0 : vector<1x128xf32>, vector<1x128xf32>, vector<1x128xf32>, vector<1x128xf32> -> vector<4x128xf32>
    %c792 = arith.constant 792 : index
    %c0_115 = arith.constant 0 : index
    %431 = vector.load %arg4[%c792, %c0_115] : memref<1064x256xf32, #tpu.memory_space<vmem>>, vector<128x128xf32>
    %cst_116 = arith.constant dense<0.000000e+00> : vector<4x128xf32>
    %432 = tpu.matmul %430, %431, %cst_116 {dimension_numbers = #tpu.dot_dimension_numbers<[1], [0], [0], [1], [0, 0, 1, 1], [], []>} : vector<4x128xf32>, vector<128x128xf32>, vector<4x128xf32> -> vector<4x128xf32>
    %cst_117 = arith.constant 5.000000e-02 : f32
    %433 = vector.broadcast %cst_117 : f32 to vector<4x128xf32>
    %434 = arith.mulf %432, %433 : vector<4x128xf32>
    %435 = vector.extract_strided_slice %434 {offsets = [0, 0], sizes = [2, 128], strides = [1, 1]} : vector<4x128xf32> to vector<2x128xf32>
    %436 = vector.extract_strided_slice %434 {offsets = [2, 0], sizes = [2, 128], strides = [1, 1]} : vector<4x128xf32> to vector<2x128xf32>
    %437 = arith.mulf %435, %435 : vector<2x128xf32>
    %438 = arith.subf %436, %437 : vector<2x128xf32>
    %cst_118 = arith.constant 0.000000e+00 : f32
    %439 = vector.broadcast %cst_118 : f32 to vector<2x128xf32>
    %440 = arith.maximumf %438, %439 : vector<2x128xf32>
    %441 = vector.extract_strided_slice %435 {offsets = [0, 0], sizes = [1, 128], strides = [1, 1]} : vector<2x128xf32> to vector<1x128xf32>
    %442 = vector.shape_cast %441 : vector<1x128xf32> to vector<1x128xf32>
    %443 = vector.broadcast %442 : vector<1x128xf32> to vector<5x128xf32>
    %444 = vector.extract_strided_slice %435 {offsets = [1, 0], sizes = [1, 128], strides = [1, 1]} : vector<2x128xf32> to vector<1x128xf32>
    %445 = vector.shape_cast %444 : vector<1x128xf32> to vector<1x128xf32>
    %446 = vector.broadcast %445 : vector<1x128xf32> to vector<5x128xf32>
    %447 = tpu.concatenate %443, %446 in 0 : vector<5x128xf32>, vector<5x128xf32> -> vector<10x128xf32>
    %448 = vector.extract_strided_slice %440 {offsets = [0, 0], sizes = [1, 128], strides = [1, 1]} : vector<2x128xf32> to vector<1x128xf32>
    %cst_119 = arith.constant 9.99999974E-6 : f32
    %449 = vector.broadcast %cst_119 : f32 to vector<1x128xf32>
    %450 = arith.addf %448, %449 : vector<1x128xf32>
    %451 = math.rsqrt %450 : vector<1x128xf32>
    %452 = vector.shape_cast %451 : vector<1x128xf32> to vector<1x128xf32>
    %453 = vector.broadcast %452 : vector<1x128xf32> to vector<5x128xf32>
    %454 = vector.extract_strided_slice %440 {offsets = [1, 0], sizes = [1, 128], strides = [1, 1]} : vector<2x128xf32> to vector<1x128xf32>
    %cst_120 = arith.constant 9.99999974E-6 : f32
    %455 = vector.broadcast %cst_120 : f32 to vector<1x128xf32>
    %456 = arith.addf %454, %455 : vector<1x128xf32>
    %457 = math.rsqrt %456 : vector<1x128xf32>
    %458 = vector.shape_cast %457 : vector<1x128xf32> to vector<1x128xf32>
    %459 = vector.broadcast %458 : vector<1x128xf32> to vector<5x128xf32>
    %460 = tpu.concatenate %453, %459 in 0 : vector<5x128xf32>, vector<5x128xf32> -> vector<10x128xf32>
    %461 = arith.subf %417, %447 : vector<10x128xf32>
    %462 = arith.mulf %461, %460 : vector<10x128xf32>
    %c776 = arith.constant 776 : index
    %c0_121 = arith.constant 0 : index
    %463 = vector.load %arg4[%c776, %c0_121] : memref<1064x256xf32, #tpu.memory_space<vmem>>, vector<1x128xf32>
    %464 = vector.broadcast %463 : vector<1x128xf32> to vector<10x128xf32>
    %465 = arith.mulf %462, %464 : vector<10x128xf32>
    %c784 = arith.constant 784 : index
    %c0_122 = arith.constant 0 : index
    %466 = vector.load %arg4[%c784, %c0_122] : memref<1064x256xf32, #tpu.memory_space<vmem>>, vector<1x128xf32>
    %467 = vector.broadcast %466 : vector<1x128xf32> to vector<10x128xf32>
    %468 = arith.addf %465, %467 : vector<10x128xf32>
    %cst_123 = arith.constant 0.000000e+00 : f32
    %469 = vector.broadcast %cst_123 : f32 to vector<10x128xf32>
    %470 = arith.subf %469, %468 : vector<10x128xf32>
    %471 = math.exp %470 : vector<10x128xf32>
    %cst_124 = arith.constant 1.000000e+00 : f32
    %472 = vector.broadcast %cst_124 : f32 to vector<10x128xf32>
    %473 = arith.addf %472, %471 : vector<10x128xf32>
    %474 = tpu.reciprocal %473 {approx = true} : vector<10x128xf32> -> vector<10x128xf32>
    %475 = arith.mulf %468, %474 : vector<10x128xf32>
    %476 = tpu.concatenate %475, %313 in 1 : vector<10x128xf32>, vector<10x128xf32> -> vector<10x256xf32>
    %477 = arith.truncf %476 : vector<10x256xf32> to vector<10x256xbf16>
    %c1232 = arith.constant 1232 : index
    %c0_125 = arith.constant 0 : index
    %478 = vector.load %arg3[%c1232, %c0_125] : memref<1776x384xbf16, #tpu.memory_space<vmem>>, vector<256x192xbf16>
    %cst_126 = arith.constant dense<0.000000e+00> : vector<10x192xf32>
    %479 = tpu.matmul %477, %478, %cst_126 {dimension_numbers = #tpu.dot_dimension_numbers<[1], [0], [0], [1], [0, 0, 1, 1], [], []>} : vector<10x256xbf16>, vector<256x192xbf16>, vector<10x192xf32> -> vector<10x192xf32>
    %480 = vector.extract_strided_slice %479 {offsets = [0, 0], sizes = [10, 64], strides = [1, 1]} : vector<10x192xf32> to vector<10x64xf32>
    %481 = vector.extract_strided_slice %479 {offsets = [0, 64], sizes = [10, 64], strides = [1, 1]} : vector<10x192xf32> to vector<10x64xf32>
    %482 = vector.extract_strided_slice %479 {offsets = [0, 128], sizes = [10, 64], strides = [1, 1]} : vector<10x192xf32> to vector<10x64xf32>
    %483 = tpu.concatenate %480, %481, %482 in 0 : vector<10x64xf32>, vector<10x64xf32>, vector<10x64xf32> -> vector<30x64xf32>
    %c1488 = arith.constant 1488 : index
    %c0_127 = arith.constant 0 : index
    %484 = vector.load %arg3[%c1488, %c0_127] : memref<1776x384xbf16, #tpu.memory_space<vmem>>, vector<24x30xbf16>
    %485 = arith.truncf %483 : vector<30x64xf32> to vector<30x64xbf16>
    %cst_128 = arith.constant dense<0.000000e+00> : vector<24x64xf32>
    %486 = tpu.matmul %484, %485, %cst_128 {dimension_numbers = #tpu.dot_dimension_numbers<[1], [0], [0], [1], [0, 0, 1, 1], [], []>} : vector<24x30xbf16>, vector<30x64xbf16>, vector<24x64xf32> -> vector<24x64xf32>
    %c1520 = arith.constant 1520 : index
    %c0_129 = arith.constant 0 : index
    %487 = vector.load %arg3[%c1520, %c0_129] : memref<1776x384xbf16, #tpu.memory_space<vmem>>, vector<32x64xbf16>
    %cst_130 = arith.constant dense<0.000000e+00> : vector<2x64xf32>
    %488 = tpu.matmul %37, %487, %cst_130 {dimension_numbers = #tpu.dot_dimension_numbers<[1], [0], [0], [1], [0, 0, 1, 1], [], []>} : vector<2x32xbf16>, vector<32x64xbf16>, vector<2x64xf32> -> vector<2x64xf32>
    %c920 = arith.constant 920 : index
    %c0_131 = arith.constant 0 : index
    %489 = vector.load %arg4[%c920, %c0_131] : memref<1064x256xf32, #tpu.memory_space<vmem>>, vector<1x64xf32>
    %490 = vector.broadcast %489 : vector<1x64xf32> to vector<2x64xf32>
    %491 = arith.addf %488, %490 : vector<2x64xf32>
    %492 = vector.extract_strided_slice %491 {offsets = [0, 0], sizes = [1, 64], strides = [1, 1]} : vector<2x64xf32> to vector<1x64xf32>
    %493 = vector.shape_cast %492 : vector<1x64xf32> to vector<1x64xf32>
    %494 = vector.broadcast %493 : vector<1x64xf32> to vector<12x64xf32>
    %495 = vector.extract_strided_slice %491 {offsets = [1, 0], sizes = [1, 64], strides = [1, 1]} : vector<2x64xf32> to vector<1x64xf32>
    %496 = vector.shape_cast %495 : vector<1x64xf32> to vector<1x64xf32>
    %497 = vector.broadcast %496 : vector<1x64xf32> to vector<12x64xf32>
    %498 = tpu.concatenate %494, %497 in 0 : vector<12x64xf32>, vector<12x64xf32> -> vector<24x64xf32>
    %499 = arith.addf %486, %498 : vector<24x64xf32>
    %500 = vector.extract_strided_slice %499 {offsets = [0, 0], sizes = [12, 64], strides = [1, 1]} : vector<24x64xf32> to vector<12x64xf32>
    %cst_132 = arith.constant dense<0.000000e+00> : vector<64xf32>
    %501 = vector.multi_reduction <add>, %500, %cst_132 [0] : vector<12x64xf32> to vector<64xf32>
    %502 = vector.shape_cast %501 : vector<64xf32> to vector<1x64xf32>
    %503 = arith.mulf %500, %500 : vector<12x64xf32>
    %cst_133 = arith.constant dense<0.000000e+00> : vector<64xf32>
    %504 = vector.multi_reduction <add>, %503, %cst_133 [0] : vector<12x64xf32> to vector<64xf32>
    %505 = vector.shape_cast %504 : vector<64xf32> to vector<1x64xf32>
    %506 = vector.extract_strided_slice %499 {offsets = [12, 0], sizes = [12, 64], strides = [1, 1]} : vector<24x64xf32> to vector<12x64xf32>
    %cst_134 = arith.constant dense<0.000000e+00> : vector<64xf32>
    %507 = vector.multi_reduction <add>, %506, %cst_134 [0] : vector<12x64xf32> to vector<64xf32>
    %508 = vector.shape_cast %507 : vector<64xf32> to vector<1x64xf32>
    %509 = arith.mulf %506, %506 : vector<12x64xf32>
    %cst_135 = arith.constant dense<0.000000e+00> : vector<64xf32>
    %510 = vector.multi_reduction <add>, %509, %cst_135 [0] : vector<12x64xf32> to vector<64xf32>
    %511 = vector.shape_cast %510 : vector<64xf32> to vector<1x64xf32>
    %512 = tpu.concatenate %502, %508, %505, %511 in 0 : vector<1x64xf32>, vector<1x64xf32>, vector<1x64xf32>, vector<1x64xf32> -> vector<4x64xf32>
    %c944 = arith.constant 944 : index
    %c0_136 = arith.constant 0 : index
    %513 = vector.load %arg4[%c944, %c0_136] : memref<1064x256xf32, #tpu.memory_space<vmem>>, vector<64x64xf32>
    %cst_137 = arith.constant dense<0.000000e+00> : vector<4x64xf32>
    %514 = tpu.matmul %512, %513, %cst_137 {dimension_numbers = #tpu.dot_dimension_numbers<[1], [0], [0], [1], [0, 0, 1, 1], [], []>} : vector<4x64xf32>, vector<64x64xf32>, vector<4x64xf32> -> vector<4x64xf32>
    %cst_138 = arith.constant 0.0416666679 : f32
    %515 = vector.broadcast %cst_138 : f32 to vector<4x64xf32>
    %516 = arith.mulf %514, %515 : vector<4x64xf32>
    %517 = vector.extract_strided_slice %516 {offsets = [0, 0], sizes = [2, 64], strides = [1, 1]} : vector<4x64xf32> to vector<2x64xf32>
    %518 = vector.extract_strided_slice %516 {offsets = [2, 0], sizes = [2, 64], strides = [1, 1]} : vector<4x64xf32> to vector<2x64xf32>
    %519 = arith.mulf %517, %517 : vector<2x64xf32>
    %520 = arith.subf %518, %519 : vector<2x64xf32>
    %cst_139 = arith.constant 0.000000e+00 : f32
    %521 = vector.broadcast %cst_139 : f32 to vector<2x64xf32>
    %522 = arith.maximumf %520, %521 : vector<2x64xf32>
    %523 = vector.extract_strided_slice %517 {offsets = [0, 0], sizes = [1, 64], strides = [1, 1]} : vector<2x64xf32> to vector<1x64xf32>
    %524 = vector.shape_cast %523 : vector<1x64xf32> to vector<1x64xf32>
    %525 = vector.broadcast %524 : vector<1x64xf32> to vector<12x64xf32>
    %526 = vector.extract_strided_slice %517 {offsets = [1, 0], sizes = [1, 64], strides = [1, 1]} : vector<2x64xf32> to vector<1x64xf32>
    %527 = vector.shape_cast %526 : vector<1x64xf32> to vector<1x64xf32>
    %528 = vector.broadcast %527 : vector<1x64xf32> to vector<12x64xf32>
    %529 = tpu.concatenate %525, %528 in 0 : vector<12x64xf32>, vector<12x64xf32> -> vector<24x64xf32>
    %530 = vector.extract_strided_slice %522 {offsets = [0, 0], sizes = [1, 64], strides = [1, 1]} : vector<2x64xf32> to vector<1x64xf32>
    %cst_140 = arith.constant 9.99999974E-6 : f32
    %531 = vector.broadcast %cst_140 : f32 to vector<1x64xf32>
    %532 = arith.addf %530, %531 : vector<1x64xf32>
    %533 = math.rsqrt %532 : vector<1x64xf32>
    %534 = vector.shape_cast %533 : vector<1x64xf32> to vector<1x64xf32>
    %535 = vector.broadcast %534 : vector<1x64xf32> to vector<12x64xf32>
    %536 = vector.extract_strided_slice %522 {offsets = [1, 0], sizes = [1, 64], strides = [1, 1]} : vector<2x64xf32> to vector<1x64xf32>
    %cst_141 = arith.constant 9.99999974E-6 : f32
    %537 = vector.broadcast %cst_141 : f32 to vector<1x64xf32>
    %538 = arith.addf %536, %537 : vector<1x64xf32>
    %539 = math.rsqrt %538 : vector<1x64xf32>
    %540 = vector.shape_cast %539 : vector<1x64xf32> to vector<1x64xf32>
    %541 = vector.broadcast %540 : vector<1x64xf32> to vector<12x64xf32>
    %542 = tpu.concatenate %535, %541 in 0 : vector<12x64xf32>, vector<12x64xf32> -> vector<24x64xf32>
    %543 = arith.subf %499, %529 : vector<24x64xf32>
    %544 = arith.mulf %543, %542 : vector<24x64xf32>
    %c928_142 = arith.constant 928 : index
    %c0_143 = arith.constant 0 : index
    %545 = vector.load %arg4[%c928_142, %c0_143] : memref<1064x256xf32, #tpu.memory_space<vmem>>, vector<1x64xf32>
    %546 = vector.broadcast %545 : vector<1x64xf32> to vector<24x64xf32>
    %547 = arith.mulf %544, %546 : vector<24x64xf32>
    %c936 = arith.constant 936 : index
    %c0_144 = arith.constant 0 : index
    %548 = vector.load %arg4[%c936, %c0_144] : memref<1064x256xf32, #tpu.memory_space<vmem>>, vector<1x64xf32>
    %549 = vector.broadcast %548 : vector<1x64xf32> to vector<24x64xf32>
    %550 = arith.addf %547, %549 : vector<24x64xf32>
    %cst_145 = arith.constant 0.000000e+00 : f32
    %551 = vector.broadcast %cst_145 : f32 to vector<24x64xf32>
    %552 = arith.subf %551, %550 : vector<24x64xf32>
    %553 = math.exp %552 : vector<24x64xf32>
    %cst_146 = arith.constant 1.000000e+00 : f32
    %554 = vector.broadcast %cst_146 : f32 to vector<24x64xf32>
    %555 = arith.addf %554, %553 : vector<24x64xf32>
    %556 = tpu.reciprocal %555 {approx = true} : vector<24x64xf32> -> vector<24x64xf32>
    %557 = arith.mulf %550, %556 : vector<24x64xf32>
    %558 = tpu.concatenate %557, %232 in 1 : vector<24x64xf32>, vector<24x64xf32> -> vector<24x128xf32>
    %559 = arith.truncf %558 : vector<24x128xf32> to vector<24x128xbf16>
    %c1552 = arith.constant 1552 : index
    %c0_147 = arith.constant 0 : index
    %560 = vector.load %arg3[%c1552, %c0_147] : memref<1776x384xbf16, #tpu.memory_space<vmem>>, vector<128x96xbf16>
    %cst_148 = arith.constant dense<0.000000e+00> : vector<24x96xf32>
    %561 = tpu.matmul %559, %560, %cst_148 {dimension_numbers = #tpu.dot_dimension_numbers<[1], [0], [0], [1], [0, 0, 1, 1], [], []>} : vector<24x128xbf16>, vector<128x96xbf16>, vector<24x96xf32> -> vector<24x96xf32>
    %562 = vector.extract_strided_slice %561 {offsets = [0, 0], sizes = [24, 32], strides = [1, 1]} : vector<24x96xf32> to vector<24x32xf32>
    %563 = vector.extract_strided_slice %561 {offsets = [0, 32], sizes = [24, 32], strides = [1, 1]} : vector<24x96xf32> to vector<24x32xf32>
    %564 = vector.extract_strided_slice %561 {offsets = [0, 64], sizes = [24, 32], strides = [1, 1]} : vector<24x96xf32> to vector<24x32xf32>
    %565 = tpu.concatenate %562, %563, %564 in 0 : vector<24x32xf32>, vector<24x32xf32>, vector<24x32xf32> -> vector<72x32xf32>
    %c1680 = arith.constant 1680 : index
    %c0_149 = arith.constant 0 : index
    %566 = vector.load %arg3[%c1680, %c0_149] : memref<1776x384xbf16, #tpu.memory_space<vmem>>, vector<52x72xbf16>
    %567 = arith.truncf %565 : vector<72x32xf32> to vector<72x32xbf16>
    %cst_150 = arith.constant dense<0.000000e+00> : vector<52x32xf32>
    %568 = tpu.matmul %566, %567, %cst_150 {dimension_numbers = #tpu.dot_dimension_numbers<[1], [0], [0], [1], [0, 0, 1, 1], [], []>} : vector<52x72xbf16>, vector<72x32xbf16>, vector<52x32xf32> -> vector<52x32xf32>
    %c1744 = arith.constant 1744 : index
    %c0_151 = arith.constant 0 : index
    %569 = vector.load %arg3[%c1744, %c0_151] : memref<1776x384xbf16, #tpu.memory_space<vmem>>, vector<32x32xbf16>
    %cst_152 = arith.constant dense<0.000000e+00> : vector<2x32xf32>
    %570 = tpu.matmul %37, %569, %cst_152 {dimension_numbers = #tpu.dot_dimension_numbers<[1], [0], [0], [1], [0, 0, 1, 1], [], []>} : vector<2x32xbf16>, vector<32x32xbf16>, vector<2x32xf32> -> vector<2x32xf32>
    %c1008 = arith.constant 1008 : index
    %c0_153 = arith.constant 0 : index
    %571 = vector.load %arg4[%c1008, %c0_153] : memref<1064x256xf32, #tpu.memory_space<vmem>>, vector<1x32xf32>
    %572 = vector.broadcast %571 : vector<1x32xf32> to vector<2x32xf32>
    %573 = arith.addf %570, %572 : vector<2x32xf32>
    %574 = vector.extract_strided_slice %573 {offsets = [0, 0], sizes = [1, 32], strides = [1, 1]} : vector<2x32xf32> to vector<1x32xf32>
    %575 = vector.shape_cast %574 : vector<1x32xf32> to vector<1x32xf32>
    %576 = vector.broadcast %575 : vector<1x32xf32> to vector<26x32xf32>
    %577 = vector.extract_strided_slice %573 {offsets = [1, 0], sizes = [1, 32], strides = [1, 1]} : vector<2x32xf32> to vector<1x32xf32>
    %578 = vector.shape_cast %577 : vector<1x32xf32> to vector<1x32xf32>
    %579 = vector.broadcast %578 : vector<1x32xf32> to vector<26x32xf32>
    %580 = tpu.concatenate %576, %579 in 0 : vector<26x32xf32>, vector<26x32xf32> -> vector<52x32xf32>
    %581 = arith.addf %568, %580 : vector<52x32xf32>
    %582 = vector.extract_strided_slice %581 {offsets = [0, 0], sizes = [26, 32], strides = [1, 1]} : vector<52x32xf32> to vector<26x32xf32>
    %cst_154 = arith.constant dense<0.000000e+00> : vector<32xf32>
    %583 = vector.multi_reduction <add>, %582, %cst_154 [0] : vector<26x32xf32> to vector<32xf32>
    %584 = vector.shape_cast %583 : vector<32xf32> to vector<1x32xf32>
    %585 = arith.mulf %582, %582 : vector<26x32xf32>
    %cst_155 = arith.constant dense<0.000000e+00> : vector<32xf32>
    %586 = vector.multi_reduction <add>, %585, %cst_155 [0] : vector<26x32xf32> to vector<32xf32>
    %587 = vector.shape_cast %586 : vector<32xf32> to vector<1x32xf32>
    %588 = vector.extract_strided_slice %581 {offsets = [26, 0], sizes = [26, 32], strides = [1, 1]} : vector<52x32xf32> to vector<26x32xf32>
    %cst_156 = arith.constant dense<0.000000e+00> : vector<32xf32>
    %589 = vector.multi_reduction <add>, %588, %cst_156 [0] : vector<26x32xf32> to vector<32xf32>
    %590 = vector.shape_cast %589 : vector<32xf32> to vector<1x32xf32>
    %591 = arith.mulf %588, %588 : vector<26x32xf32>
    %cst_157 = arith.constant dense<0.000000e+00> : vector<32xf32>
    %592 = vector.multi_reduction <add>, %591, %cst_157 [0] : vector<26x32xf32> to vector<32xf32>
    %593 = vector.shape_cast %592 : vector<32xf32> to vector<1x32xf32>
    %594 = tpu.concatenate %584, %590, %587, %593 in 0 : vector<1x32xf32>, vector<1x32xf32>, vector<1x32xf32>, vector<1x32xf32> -> vector<4x32xf32>
    %c1032 = arith.constant 1032 : index
    %c0_158 = arith.constant 0 : index
    %595 = vector.load %arg4[%c1032, %c0_158] : memref<1064x256xf32, #tpu.memory_space<vmem>>, vector<32x32xf32>
    %cst_159 = arith.constant dense<0.000000e+00> : vector<4x32xf32>
    %596 = tpu.matmul %594, %595, %cst_159 {dimension_numbers = #tpu.dot_dimension_numbers<[1], [0], [0], [1], [0, 0, 1, 1], [], []>} : vector<4x32xf32>, vector<32x32xf32>, vector<4x32xf32> -> vector<4x32xf32>
    %cst_160 = arith.constant 0.0384615399 : f32
    %597 = vector.broadcast %cst_160 : f32 to vector<4x32xf32>
    %598 = arith.mulf %596, %597 : vector<4x32xf32>
    %599 = vector.extract_strided_slice %598 {offsets = [0, 0], sizes = [2, 32], strides = [1, 1]} : vector<4x32xf32> to vector<2x32xf32>
    %600 = vector.extract_strided_slice %598 {offsets = [2, 0], sizes = [2, 32], strides = [1, 1]} : vector<4x32xf32> to vector<2x32xf32>
    %601 = arith.mulf %599, %599 : vector<2x32xf32>
    %602 = arith.subf %600, %601 : vector<2x32xf32>
    %cst_161 = arith.constant 0.000000e+00 : f32
    %603 = vector.broadcast %cst_161 : f32 to vector<2x32xf32>
    %604 = arith.maximumf %602, %603 : vector<2x32xf32>
    %605 = vector.extract_strided_slice %599 {offsets = [0, 0], sizes = [1, 32], strides = [1, 1]} : vector<2x32xf32> to vector<1x32xf32>
    %606 = vector.shape_cast %605 : vector<1x32xf32> to vector<1x32xf32>
    %607 = vector.broadcast %606 : vector<1x32xf32> to vector<26x32xf32>
    %608 = vector.extract_strided_slice %599 {offsets = [1, 0], sizes = [1, 32], strides = [1, 1]} : vector<2x32xf32> to vector<1x32xf32>
    %609 = vector.shape_cast %608 : vector<1x32xf32> to vector<1x32xf32>
    %610 = vector.broadcast %609 : vector<1x32xf32> to vector<26x32xf32>
    %611 = tpu.concatenate %607, %610 in 0 : vector<26x32xf32>, vector<26x32xf32> -> vector<52x32xf32>
    %612 = vector.extract_strided_slice %604 {offsets = [0, 0], sizes = [1, 32], strides = [1, 1]} : vector<2x32xf32> to vector<1x32xf32>
    %cst_162 = arith.constant 9.99999974E-6 : f32
    %613 = vector.broadcast %cst_162 : f32 to vector<1x32xf32>
    %614 = arith.addf %612, %613 : vector<1x32xf32>
    %615 = math.rsqrt %614 : vector<1x32xf32>
    %616 = vector.shape_cast %615 : vector<1x32xf32> to vector<1x32xf32>
    %617 = vector.broadcast %616 : vector<1x32xf32> to vector<26x32xf32>
    %618 = vector.extract_strided_slice %604 {offsets = [1, 0], sizes = [1, 32], strides = [1, 1]} : vector<2x32xf32> to vector<1x32xf32>
    %cst_163 = arith.constant 9.99999974E-6 : f32
    %619 = vector.broadcast %cst_163 : f32 to vector<1x32xf32>
    %620 = arith.addf %618, %619 : vector<1x32xf32>
    %621 = math.rsqrt %620 : vector<1x32xf32>
    %622 = vector.shape_cast %621 : vector<1x32xf32> to vector<1x32xf32>
    %623 = vector.broadcast %622 : vector<1x32xf32> to vector<26x32xf32>
    %624 = tpu.concatenate %617, %623 in 0 : vector<26x32xf32>, vector<26x32xf32> -> vector<52x32xf32>
    %625 = arith.subf %581, %611 : vector<52x32xf32>
    %626 = arith.mulf %625, %624 : vector<52x32xf32>
    %c1016 = arith.constant 1016 : index
    %c0_164 = arith.constant 0 : index
    %627 = vector.load %arg4[%c1016, %c0_164] : memref<1064x256xf32, #tpu.memory_space<vmem>>, vector<1x32xf32>
    %628 = vector.broadcast %627 : vector<1x32xf32> to vector<52x32xf32>
    %629 = arith.mulf %626, %628 : vector<52x32xf32>
    %c1024 = arith.constant 1024 : index
    %c0_165 = arith.constant 0 : index
    %630 = vector.load %arg4[%c1024, %c0_165] : memref<1064x256xf32, #tpu.memory_space<vmem>>, vector<1x32xf32>
    %631 = vector.broadcast %630 : vector<1x32xf32> to vector<52x32xf32>
    %632 = arith.addf %629, %631 : vector<52x32xf32>
    %cst_166 = arith.constant 0.000000e+00 : f32
    %633 = vector.broadcast %cst_166 : f32 to vector<52x32xf32>
    %634 = arith.subf %633, %632 : vector<52x32xf32>
    %635 = math.exp %634 : vector<52x32xf32>
    %cst_167 = arith.constant 1.000000e+00 : f32
    %636 = vector.broadcast %cst_167 : f32 to vector<52x32xf32>
    %637 = arith.addf %636, %635 : vector<52x32xf32>
    %638 = tpu.reciprocal %637 {approx = true} : vector<52x32xf32> -> vector<52x32xf32>
    %639 = arith.mulf %632, %638 : vector<52x32xf32>
    %640 = tpu.concatenate %639, %151 in 1 : vector<52x32xf32>, vector<52x32xf32> -> vector<52x64xf32>
    %c176 = arith.constant 176 : index
    %c0_168 = arith.constant 0 : index
    %641 = vector.load %arg4[%c176, %c0_168] : memref<1064x256xf32, #tpu.memory_space<vmem>>, vector<3x64xf32>
    %642 = vector.extract_strided_slice %641 {offsets = [0, 0], sizes = [1, 64], strides = [1, 1]} : vector<3x64xf32> to vector<1x64xf32>
    %643 = vector.broadcast %642 : vector<1x64xf32> to vector<52x64xf32>
    %644 = arith.mulf %640, %643 : vector<52x64xf32>
    %cst_169 = arith.constant dense<0.000000e+00> : vector<52xf32>
    %645 = vector.multi_reduction <add>, %644, %cst_169 [1] : vector<52x64xf32> to vector<52xf32>
    %646 = vector.shape_cast %645 : vector<52xf32> to vector<52x1xf32>
    %647 = vector.extract_strided_slice %641 {offsets = [1, 0], sizes = [1, 64], strides = [1, 1]} : vector<3x64xf32> to vector<1x64xf32>
    %648 = vector.broadcast %647 : vector<1x64xf32> to vector<52x64xf32>
    %649 = arith.mulf %640, %648 : vector<52x64xf32>
    %cst_170 = arith.constant dense<0.000000e+00> : vector<52xf32>
    %650 = vector.multi_reduction <add>, %649, %cst_170 [1] : vector<52x64xf32> to vector<52xf32>
    %651 = vector.shape_cast %650 : vector<52xf32> to vector<52x1xf32>
    %652 = vector.extract_strided_slice %641 {offsets = [2, 0], sizes = [1, 64], strides = [1, 1]} : vector<3x64xf32> to vector<1x64xf32>
    %653 = vector.broadcast %652 : vector<1x64xf32> to vector<52x64xf32>
    %654 = arith.mulf %640, %653 : vector<52x64xf32>
    %cst_171 = arith.constant dense<0.000000e+00> : vector<52xf32>
    %655 = vector.multi_reduction <add>, %654, %cst_171 [1] : vector<52x64xf32> to vector<52xf32>
    %656 = vector.shape_cast %655 : vector<52xf32> to vector<52x1xf32>
    %c184 = arith.constant 184 : index
    %c0_172 = arith.constant 0 : index
    %657 = vector.load %arg4[%c184, %c0_172] : memref<1064x256xf32, #tpu.memory_space<vmem>>, vector<1x1xf32>
    %c128_173 = arith.constant 128 : index
    %c0_174 = arith.constant 0 : index
    %658 = vector.load %arg4[%c128_173, %c0_174] : memref<1064x256xf32, #tpu.memory_space<vmem>>, vector<28x16xf32>
    %c160 = arith.constant 160 : index
    %c0_175 = arith.constant 0 : index
    %659 = vector.load %arg4[%c160, %c0_175] : memref<1064x256xf32, #tpu.memory_space<vmem>>, vector<1x16xf32>
    %660 = vector.shape_cast %657 : vector<1x1xf32> to vector<1x1xf32>
    %661 = vector.broadcast %660 : vector<1x1xf32> to vector<28x1xf32>
    %662 = vector.extract_strided_slice %646 {offsets = [0, 0], sizes = [26, 1], strides = [1, 1]} : vector<52x1xf32> to vector<26x1xf32>
    %cst_176 = arith.constant 0.000000e+00 : f32
    %663 = vector.broadcast %cst_176 : f32 to vector<2x1xf32>
    %664 = tpu.concatenate %662, %663 in 0 : vector<26x1xf32>, vector<2x1xf32> -> vector<28x1xf32>
    %665 = arith.addf %661, %664 : vector<28x1xf32>
    %666 = vector.extract_strided_slice %651 {offsets = [0, 0], sizes = [26, 1], strides = [1, 1]} : vector<52x1xf32> to vector<26x1xf32>
    %cst_177 = arith.constant 0.000000e+00 : f32
    %667 = vector.broadcast %cst_177 : f32 to vector<1x1xf32>
    %cst_178 = arith.constant 0.000000e+00 : f32
    %668 = vector.broadcast %cst_178 : f32 to vector<1x1xf32>
    %669 = tpu.concatenate %667, %666, %668 in 0 : vector<1x1xf32>, vector<26x1xf32>, vector<1x1xf32> -> vector<28x1xf32>
    %670 = arith.addf %665, %669 : vector<28x1xf32>
    %671 = vector.extract_strided_slice %656 {offsets = [0, 0], sizes = [26, 1], strides = [1, 1]} : vector<52x1xf32> to vector<26x1xf32>
    %cst_179 = arith.constant 0.000000e+00 : f32
    %672 = vector.broadcast %cst_179 : f32 to vector<2x1xf32>
    %673 = tpu.concatenate %672, %671 in 0 : vector<2x1xf32>, vector<26x1xf32> -> vector<28x1xf32>
    %674 = arith.addf %670, %673 : vector<28x1xf32>
    %675 = vector.broadcast %674 : vector<28x1xf32> to vector<28x16xf32>
    %676 = arith.mulf %675, %658 : vector<28x16xf32>
    %cst_180 = arith.constant dense<0.000000e+00> : vector<16xf32>
    %677 = vector.multi_reduction <add>, %676, %cst_180 [0] : vector<28x16xf32> to vector<16xf32>
    %678 = vector.shape_cast %677 : vector<16xf32> to vector<1x16xf32>
    %679 = arith.addf %678, %659 : vector<1x16xf32>
    %680 = vector.shape_cast %657 : vector<1x1xf32> to vector<1x1xf32>
    %681 = vector.broadcast %680 : vector<1x1xf32> to vector<28x1xf32>
    %682 = vector.extract_strided_slice %646 {offsets = [26, 0], sizes = [26, 1], strides = [1, 1]} : vector<52x1xf32> to vector<26x1xf32>
    %cst_181 = arith.constant 0.000000e+00 : f32
    %683 = vector.broadcast %cst_181 : f32 to vector<2x1xf32>
    %684 = tpu.concatenate %682, %683 in 0 : vector<26x1xf32>, vector<2x1xf32> -> vector<28x1xf32>
    %685 = arith.addf %681, %684 : vector<28x1xf32>
    %686 = vector.extract_strided_slice %651 {offsets = [26, 0], sizes = [26, 1], strides = [1, 1]} : vector<52x1xf32> to vector<26x1xf32>
    %cst_182 = arith.constant 0.000000e+00 : f32
    %687 = vector.broadcast %cst_182 : f32 to vector<1x1xf32>
    %cst_183 = arith.constant 0.000000e+00 : f32
    %688 = vector.broadcast %cst_183 : f32 to vector<1x1xf32>
    %689 = tpu.concatenate %687, %686, %688 in 0 : vector<1x1xf32>, vector<26x1xf32>, vector<1x1xf32> -> vector<28x1xf32>
    %690 = arith.addf %685, %689 : vector<28x1xf32>
    %691 = vector.extract_strided_slice %656 {offsets = [26, 0], sizes = [26, 1], strides = [1, 1]} : vector<52x1xf32> to vector<26x1xf32>
    %cst_184 = arith.constant 0.000000e+00 : f32
    %692 = vector.broadcast %cst_184 : f32 to vector<2x1xf32>
    %693 = tpu.concatenate %692, %691 in 0 : vector<2x1xf32>, vector<26x1xf32> -> vector<28x1xf32>
    %694 = arith.addf %690, %693 : vector<28x1xf32>
    %695 = vector.broadcast %694 : vector<28x1xf32> to vector<28x16xf32>
    %696 = arith.mulf %695, %658 : vector<28x16xf32>
    %cst_185 = arith.constant dense<0.000000e+00> : vector<16xf32>
    %697 = vector.multi_reduction <add>, %696, %cst_185 [0] : vector<28x16xf32> to vector<16xf32>
    %698 = vector.shape_cast %697 : vector<16xf32> to vector<1x16xf32>
    %699 = arith.addf %698, %659 : vector<1x16xf32>
    %700 = tpu.concatenate %679, %699 in 0 : vector<1x16xf32>, vector<1x16xf32> -> vector<2x16xf32>
    %cst_186 = arith.constant 6.43775177 : f32
    %701 = vector.broadcast %cst_186 : f32 to vector<2x1xf32>
    %702 = arith.mulf %701, %2 : vector<2x1xf32>
    %703 = math.exp %702 : vector<2x1xf32>
    %cst_187 = arith.constant 1.000000e+00 : f32
    %704 = vector.broadcast %cst_187 : f32 to vector<2x1xf32>
    %705 = arith.subf %703, %704 : vector<2x1xf32>
    %cst_188 = arith.constant 6.43775177 : f32
    %706 = vector.broadcast %cst_188 : f32 to vector<2x1xf32>
    %707 = arith.divf %705, %706 : vector<2x1xf32>
    %708 = math.sqrt %707 : vector<2x1xf32>
    %709 = tpu.reciprocal %708 {approx = true} : vector<2x1xf32> -> vector<2x1xf32>
    %710 = vector.broadcast %709 : vector<2x1xf32> to vector<2x16xf32>
    %711 = arith.mulf %700, %710 : vector<2x16xf32>
    %c0_189 = arith.constant 0 : index
    %c0_190 = arith.constant 0 : index
    %712 = vector.load %arg5[%c0_189, %c0_190] : memref<2x16xf32, #tpu.memory_space<vmem>>, vector<2x16xf32>
    tpu.vector_store %arg5[%c0_189, %c0_190], %711 {strides = array<i32>} : memref<2x16xf32, #tpu.memory_space<vmem>>, vector<2x16xf32>,
    return
  }
}

</mosaic_0001>

<llo_original>
// kernel: tpu_custom_call.1
$region0: #{tpu_custom_call.1}
  #allocation0 [shape = 'u32[]', space=smem, size = 0x4, offset = 0x4, fixed_abs, tag = 'smem constant byte address 0x4 - core index']
  #allocation1 [shape = 'u32[144,128]{1,0:T(1,128)}', space=vmem, size = 0x12000, scoped, tag = 'internal scratch']
  %s0 = inlined_call_operand.vmem [shape: f32[16,2], index: 0, kind: input, shape index: {}]
  %s1 = inlined_call_operand.hbm [shape: f32[2,8], index: 1, kind: input, shape index: {}]
  %s2 = inlined_call_operand.vmem [shape: f32[2,1], index: 2, kind: input, shape index: {}]
  %s3 = inlined_call_operand.hbm [shape: bf16[1776,384], index: 3, kind: input, shape index: {}]
  %s4 = inlined_call_operand.hbm [shape: f32[1064,256], index: 4, kind: input, shape index: {}]
  %s5 = inlined_call_operand.hbm [shape: f32[2,16], index: 5, kind: output, shape index: {}]
  %s6 = sld [smem:[#allocation0]]
  $region42: #{tpu_custom_call.1} parent=0
    _
  %s8 = ssub.s32 1, %s6
  %s9 = scalar_select 0, %s8, %s6
  $region1: #{tpu_custom_call.1} parent=0
    #allocation2 [shape = 'u8[1024]{0}', space=vmem, size = 0x400, scoped, tag = 'input window, operand 1, single buffered']
    #allocation3 [shape = 's32[1]{0}', space=sflag, size = 0x4, scoped, tag = 'scoped memory for tpu_custom_call.1']
    #allocation4 [shape = 's32[1]{0}', space=sflag, size = 0x4, scoped, tag = 'scoped memory for tpu_custom_call.1']
    #allocation5 [shape = 'u8[1363968]{0}', space=vmem, size = 0x14d000, scoped, tag = 'input window, operand 3, single buffered']
    #allocation6 [shape = 's32[1]{0}', space=sflag, size = 0x4, scoped, tag = 'scoped memory for tpu_custom_call.1']
    #allocation7 [shape = 'u8[1089536]{0}', space=vmem, size = 0x10a000, scoped, tag = 'input window, operand 4, single buffered']
    #allocation8 [shape = 'u8[1024]{0}', space=vmem, size = 0x400, scoped, tag = 'output window, operand 0, single buffered']
    %10 = vsyncpa [#allocation3], 0
    %11 = vsyncpa [#allocation6], 0
    %12 = vsyncpa [#allocation4], 0
    // Predicated region
    $region2: #{tpu_custom_call.1} parent=1 // pred_check
      _
    $region3: #{tpu_custom_call.1} parent=1 // pred_check_branch
      %14 = sbr.rel (0) target = $region5
    $region4: #{tpu_custom_call.1} parent=1 // pred_region
      _
    $region5: #{tpu_custom_call.1} parent=1 // pred_fallthru
      _
    // Predicated region
    $region6: #{tpu_custom_call.1} parent=1 // pred_check
      _
    $region7: #{tpu_custom_call.1} parent=1 // pred_check_branch
      %16 = sbr.rel (0) target = $region9
    $region8: #{tpu_custom_call.1} parent=1 // pred_region
      %s18 = ssub.s32 32, 32
      %19 = vsyncadd [#allocation3], %s18
      %s21 = sshll.u32 [#allocation2], 4
      %s22 = int_to_ptr.vmem [resolvable:$true] %s21
      %24 = dma.hbm_to_vmem [thread:$0]  %s1, 32, %s22, [#allocation3]
    $region9: #{tpu_custom_call.1} parent=1 // pred_fallthru
      _
    // Predicated region
    $region10: #{tpu_custom_call.1} parent=1 // pred_check
      _
    $region11: #{tpu_custom_call.1} parent=1 // pred_check_branch
      %26 = sbr.rel (0) target = $region13
    $region12: #{tpu_custom_call.1} parent=1 // pred_region
      _
    $region13: #{tpu_custom_call.1} parent=1 // pred_fallthru
      _
    // Predicated region
    $region14: #{tpu_custom_call.1} parent=1 // pred_check
      _
    $region15: #{tpu_custom_call.1} parent=1 // pred_check_branch
      %28 = sbr.rel (0) target = $region17
    $region16: #{tpu_custom_call.1} parent=1 // pred_region
      %s30 = ssub.s32 42624, 42624
      %31 = vsyncadd [#allocation6], %s30
      %s32 = sshll.u32 [#allocation5], 4
      %s33 = int_to_ptr.vmem [resolvable:$true] %s32
      %38 = dma.hbm_to_vmem [thread:$0]  %s3, 42624, %s33, [#allocation6], 192, 192, 12
    $region17: #{tpu_custom_call.1} parent=1 // pred_fallthru
      _
    // Predicated region
    $region18: #{tpu_custom_call.1} parent=1 // pred_check
      _
    $region19: #{tpu_custom_call.1} parent=1 // pred_check_branch
      %40 = sbr.rel (0) target = $region21
    $region20: #{tpu_custom_call.1} parent=1 // pred_region
      %s42 = ssub.s32 34048, 34048
      %43 = vsyncadd [#allocation6], %s42
      %s44 = sshll.u32 [#allocation7], 4
      %s45 = int_to_ptr.vmem [resolvable:$true] %s44
      %50 = dma.hbm_to_vmem [thread:$0]  %s4, 34048, %s45, [#allocation6], 256, 256, 16
    $region21: #{tpu_custom_call.1} parent=1 // pred_fallthru
      _
    // Predicated region
    $region22: #{tpu_custom_call.1} parent=1 // pred_check
      _
    $region23: #{tpu_custom_call.1} parent=1 // pred_check_branch
      %52 = sbr.rel (0) target = $region25
    $region24: #{tpu_custom_call.1} parent=1 // pred_region
      %53 = dma.done [#allocation3], 32
    $region25: #{tpu_custom_call.1} parent=1 // pred_fallthru
      _
    // Predicated region
    $region26: #{tpu_custom_call.1} parent=1 // pred_check
      _
    $region27: #{tpu_custom_call.1} parent=1 // pred_check_branch
      %55 = sbr.rel (0) target = $region29
    $region28: #{tpu_custom_call.1} parent=1 // pred_region
      %56 = dma.done [#allocation6], 42624
    $region29: #{tpu_custom_call.1} parent=1 // pred_fallthru
      _
    // Predicated region
    $region30: #{tpu_custom_call.1} parent=1 // pred_check
      _
    $region31: #{tpu_custom_call.1} parent=1 // pred_check_branch
      %58 = sbr.rel (0) target = $region33
    $region32: #{tpu_custom_call.1} parent=1 // pred_region
      %59 = dma.done [#allocation6], 34048
    $region33: #{tpu_custom_call.1} parent=1 // pred_fallthru
      _
    %v61 = vld [vmem:[%s0] sm:$0xff]
    %v62 = vld [vmem:[%s0 + $0x8] sm:$0xff]
    %v63 = vld [vmem:[#allocation2] sm:$0x3]
    %v64 = vld [vmem:[%s2] sm:$0x3]
    %v65 = vld [vmem:[#allocation7] ss:$0 sm:$0xff]
    %67 = vset.pattern.permute.xlu0 0
    %68 = vperm.xlu0 %67, %v64
    %v69 = vpop.permute.xlu0 %68
    %v71 = vmul.f32 %v69, %v65
    %v72 = vmul.f32 %v71, 6.2831855
    %v73 = vand.u32 2147483647, %v72
    %vm74 = vcmp.le.f32.partialorder %v73, 0.7853982
    %vm75 = vcmp.lt.s32.totalorder %v72, 0
    %v76 = vand.u32 %v72, 2139095040
    %v77 = vshrl.u32 %v76, 23
    %v78 = vsub.s32 %v77, 127
    %v79 = vand.u32 2147483647, %v72
    %v80 = vand.u32 %v79, 8388607
    %v81 = vor.u32 %v80, 8388608
    %v82 = vsub.s32 0, %v81
    %v83 = vadd.s32 %v78, 1
    %vm84 = vcmp.gt.s32.totalorder %v83, 0
    %v85 = vsel %vm84, %v83, 0
    %v86 = vshrl.u32 %v85, 5
    %v87 = vand.u32 %v85, 31
    %v88 = vsub.s32 32, %v87
    %v89 = vshrl.u32 683565275, %v88
    %v90 = vshll.u32 683565275, %v87
    %v91 = vshrl.u32 2475754826, %v88
    %v92 = vor.u32 %v90, %v91
    %v93 = vshll.u32 2475754826, %v87
    %v94 = vshrl.u32 2131351028, %v88
    %v95 = vor.u32 %v93, %v94
    %v96 = vshll.u32 2131351028, %v87
    %v97 = vshrl.u32 2102212464, %v88
    %v98 = vor.u32 %v96, %v97
    %v99 = vshll.u32 2102212464, %v87
    %v100 = vshrl.u32 920167782, %v88
    %v101 = vor.u32 %v99, %v100
    %v102 = vshll.u32 920167782, %v87
    %v103 = vshrl.u32 1326507024, %v88
    %v104 = vor.u32 %v102, %v103
    %vm105 = vcmp.lt.s32.totalorder %v86, 1
    %vm106 = vcmp.lt.s32.totalorder %v86, 2
    %vm107 = vcmp.lt.s32.totalorder %v86, 3
    %vm108 = vcmp.lt.s32.totalorder %v86, 4
    %v109 = vsel %vm105, %v89, %v92
    %v110 = vsel %vm108, %v98, 2102212464
    %v111 = vsel %vm107, %v95, %v110
    %v112 = vsel %vm106, %v109, %v111
    %v113 = vsel %vm105, %v92, %v95
    %v114 = vsel %vm108, %v101, 920167782
    %v115 = vsel %vm107, %v98, %v114
    %v116 = vsel %vm106, %v113, %v115
    %v117 = vsel %vm105, %v95, %v98
    %v118 = vsel %vm108, %v104, 1326507024
    %v119 = vsel %vm107, %v101, %v118
    %v120 = vsel %vm106, %v117, %v119
    %v121 = vshll.u32 %v81, 8
    %v122 = vmul.u32.u64.compose %v121, %v120
    %v123 = vextract.low.u32 %v122
    %v124 = vextract.high.u32 %v122
    %v125 = vmul.u32.u64.compose %v121, %v116
    %v126 = vextract.low.u32 %v125
    %v127 = vextract.high.u32 %v125
    %v128 = vmul.u32 %v121, %v112
    %v129 = vadd.s32 %v124, %v126
    %vm130 = vc.u32 %v124, %v126
    %v131 = vadd.s32 %v127, 1
    %v132 = vsel %vm130, %v131, %v127
    %v133 = vadd.s32 %v128, %v132
    %v134 = vadd.s32 %v133, 536870912
    %v135 = vshrl.u32 %v134, 30
    %v136 = vshll.u32 %v135, 30
    %v137 = vsub.s32 %v133, %v136
    %vm138 = vcmp.lt.s32.totalorder %v137, 0
    %v139 = vsub.s32 0, %v137
    %v140 = vsel %vm138, %v139, %v137
    %v141 = vclz %v140
    %v142 = vsub.s32 %v141, 2
    %vm143 = vcmp.gt.s32.totalorder 0, %v142
    %v144 = vsel %vm143, 0, %v142
    %v145 = vsub.s32 32, %v144
    %v146 = vshll.u32 %v137, %v144
    %v147 = vshrl.u32 %v129, %v145
    %v148 = vor.u32 %v146, %v147
    %v149 = vsub.s32 4294967266, %v144
    %v150 = vadd.s32 %v149, 127
    %v151 = vshll.u32 %v150, 23
    %v152 = vor.u32 4788187, %v151
    %v153 = vand.u32 2147483647, %v152
    %v155 = vcvt.s32.f32 %v148
    %v156 = vmul.f32 %v155, %v153
    %v157 = vxor.u32 %v156, 2147483648
    %v158 = vsel %vm75, %v157, %v156
    %v159 = vsub.s32 4, %v135
    %v160 = vsel %vm75, %v159, %v135
    %v161 = vsel %vm74, %v72, %v158
    %v162 = vsel %vm74, 0, %v160
    %v163 = vcosq.f32.pop %v161
    %v164 = vsinq.f32.pop %v161
    %vm165 = vweird.f32 %v72
    %v166 = vadd.s32 %v162, 3
    %v167 = vand.u32 %v166, 3
    %vm168 = vcmp.lt.s32.totalorder %v167, 2
    %vm169 = vcmp.eq.s32.totalorder %v167, 0
    %v170 = vxor.u32 %v164, 2147483648
    %v171 = vsel %vm169, %v163, %v170
    %vm172 = vcmp.eq.s32.totalorder %v167, 2
    %v173 = vxor.u32 %v163, 2147483648
    %v174 = vsel %vm172, %v173, %v164
    %v175 = vsel %vm168, %v171, %v174
    %v176 = vsel %vm165, nan, %v175
    %v177 = vand.u32 2147483647, %v72
    %vm178 = vcmp.le.f32.partialorder %v177, 0.7853982
    %vm179 = vcmp.lt.s32.totalorder %v72, 0
    %v180 = vand.u32 %v72, 2139095040
    %v181 = vshrl.u32 %v180, 23
    %v182 = vsub.s32 %v181, 127
    %v183 = vand.u32 2147483647, %v72
    %v184 = vand.u32 %v183, 8388607
    %v185 = vor.u32 %v184, 8388608
    %v186 = vsub.s32 0, %v185
    %v187 = vadd.s32 %v182, 1
    %vm188 = vcmp.gt.s32.totalorder %v187, 0
    %v189 = vsel %vm188, %v187, 0
    %v190 = vshrl.u32 %v189, 5
    %v191 = vand.u32 %v189, 31
    %v192 = vsub.s32 32, %v191
    %v193 = vshrl.u32 683565275, %v192
    %v194 = vshll.u32 683565275, %v191
    %v195 = vshrl.u32 2475754826, %v192
    %v196 = vor.u32 %v194, %v195
    %v197 = vshll.u32 2475754826, %v191
    %v198 = vshrl.u32 2131351028, %v192
    %v199 = vor.u32 %v197, %v198
    %v200 = vshll.u32 2131351028, %v191
    %v201 = vshrl.u32 2102212464, %v192
    %v202 = vor.u32 %v200, %v201
    %v203 = vshll.u32 2102212464, %v191
    %v204 = vshrl.u32 920167782, %v192
    %v205 = vor.u32 %v203, %v204
    %v206 = vshll.u32 920167782, %v191
    %v207 = vshrl.u32 1326507024, %v192
    %v208 = vor.u32 %v206, %v207
    %vm209 = vcmp.lt.s32.totalorder %v190, 1
    %vm210 = vcmp.lt.s32.totalorder %v190, 2
    %vm211 = vcmp.lt.s32.totalorder %v190, 3
    %vm212 = vcmp.lt.s32.totalorder %v190, 4
    %v213 = vsel %vm209, %v193, %v196
    %v214 = vsel %vm212, %v202, 2102212464
    %v215 = vsel %vm211, %v199, %v214
    %v216 = vsel %vm210, %v213, %v215
    %v217 = vsel %vm209, %v196, %v199
    %v218 = vsel %vm212, %v205, 920167782
    %v219 = vsel %vm211, %v202, %v218
    %v220 = vsel %vm210, %v217, %v219
    %v221 = vsel %vm209, %v199, %v202
    %v222 = vsel %vm212, %v208, 1326507024
    %v223 = vsel %vm211, %v205, %v222
    %v224 = vsel %vm210, %v221, %v223
    %v225 = vshll.u32 %v185, 8
    %v226 = vmul.u32.u64.compose %v225, %v224
    %v227 = vextract.low.u32 %v226
    %v228 = vextract.high.u32 %v226
    %v229 = vmul.u32.u64.compose %v225, %v220
    %v230 = vextract.low.u32 %v229
    %v231 = vextract.high.u32 %v229
    %v232 = vmul.u32 %v225, %v216
    %v233 = vadd.s32 %v228, %v230
    %vm234 = vc.u32 %v228, %v230
    %v235 = vadd.s32 %v231, 1
    %v236 = vsel %vm234, %v235, %v231
    %v237 = vadd.s32 %v232, %v236
    %v238 = vadd.s32 %v237, 536870912
    %v239 = vshrl.u32 %v238, 30
    %v240 = vshll.u32 %v239, 30
    %v241 = vsub.s32 %v237, %v240
    %vm242 = vcmp.lt.s32.totalorder %v241, 0
    %v243 = vsub.s32 0, %v241
    %v244 = vsel %vm242, %v243, %v241
    %v245 = vclz %v244
    %v246 = vsub.s32 %v245, 2
    %vm247 = vcmp.gt.s32.totalorder 0, %v246
    %v248 = vsel %vm247, 0, %v246
    %v249 = vsub.s32 32, %v248
    %v250 = vshll.u32 %v241, %v248
    %v251 = vshrl.u32 %v233, %v249
    %v252 = vor.u32 %v250, %v251
    %v253 = vsub.s32 4294967266, %v248
    %v254 = vadd.s32 %v253, 127
    %v255 = vshll.u32 %v254, 23
    %v256 = vor.u32 4788187, %v255
    %v257 = vand.u32 2147483647, %v256
    %v259 = vcvt.s32.f32 %v252
    %v260 = vmul.f32 %v259, %v257
    %v261 = vxor.u32 %v260, 2147483648
    %v262 = vsel %vm179, %v261, %v260
    %v263 = vsub.s32 4, %v239
    %v264 = vsel %vm179, %v263, %v239
    %v265 = vsel %vm178, %v72, %v262
    %v266 = vsel %vm178, 0, %v264
    %v267 = vcosq.f32.pop %v265
    %v268 = vsinq.f32.pop %v265
    %vm269 = vweird.f32 %v72
    %v270 = vand.u32 %v266, 3
    %vm271 = vcmp.lt.s32.totalorder %v270, 2
    %vm272 = vcmp.eq.s32.totalorder %v270, 0
    %v273 = vxor.u32 %v268, 2147483648
    %v274 = vsel %vm272, %v267, %v273
    %vm275 = vcmp.eq.s32.totalorder %v270, 2
    %v276 = vxor.u32 %v267, 2147483648
    %v277 = vsel %vm275, %v276, %v268
    %v278 = vsel %vm271, %v274, %v277
    %v279 = vsel %vm269, nan, %v278
    %281 = vrot.lane.b32.xlu0 %v279, 16
    %v282 = vpop.permute.xlu0 %281
    %vm284 = vcmask 130048
    %v285 = vsel %vm284, %v176, %v282
    %v286 = vld [vmem:[#allocation7 + $0x10] sm:$0xff]
    %v287 = vld [vmem:[#allocation7 + $0x20] sm:$0xff]
    %v288 = vld [vmem:[#allocation7 + $0x30] sm:$0xff]
    %v289 = vld [vmem:[#allocation7 + $0x40] sm:$0xff]
    %v290 = vld [vmem:[#allocation7 + $0x50] ss:$0 sm:$0xff]
    %vm291 = vcmask 261120
    %v293 = vsel %vm291, %v285, 0
    %295 = vmatprep.subr.mxu0 0.0
    %296 = vmatpush1.msra.mxu0 %v286
    %297 = vmatprep.subr.mxu0 0.0
    %298 = vmatpush1.msra.mxu0 %v287
    %299 = vmatprep.subr.mxu0 0.0
    %300 = vmatpush1.msra.mxu0 %v288
    %301 = vmatprep.subr.mxu0 0.0
    %302 = vmatpush1.msra.mxu0 %v289
    %303 = vmatprep.subr.mxu0 0.0
    %304 = vmatpush1.msra.mxu0 0.0
    %305 = vmatprep.subr.mxu0 0.0
    %306 = vmatpush1.msra.mxu0 0.0
    %307 = vmatprep.subr.mxu0 0.0
    %308 = vmatpush1.msra.mxu0 0.0
    %309 = vmatprep.subr.mxu0 0.0
    %310 = vmatpush1.msra.mxu0 0.0
    %311 = vmatprep.subr.mxu0 0.0
    %312 = vmatpush1.msra.mxu0 0.0
    %313 = vmatprep.subr.mxu0 0.0
    %314 = vmatpush1.msra.mxu0 0.0
    %315 = vmatprep.subr.mxu0 0.0
    %316 = vmatpush1.msra.mxu0 0.0
    %317 = vmatprep.subr.mxu0 0.0
    %318 = vmatpush1.msra.mxu0 0.0
    %319 = vmatprep.subr.mxu0 0.0
    %320 = vmatpush1.msra.mxu0 0.0
    %321 = vmatprep.subr.mxu0 0.0
    %322 = vmatpush1.msra.mxu0 0.0
    %323 = vmatprep.subr.mxu0 0.0
    %324 = vmatpush1.msra.mxu0 0.0
    %325 = vmatprep.subr.mxu0 0.0
    %326 = vmatpush1.msra.mxu0 0.0
    %327 = vmatprep.subr.mxu0 0.0
    %328 = vmatpush1.msra.mxu0 0.0
    %329 = vmatprep.subr.mxu0 0.0
    %330 = vmatpush1.msra.mxu0 0.0
    %331 = vmatprep.subr.mxu0 0.0
    %332 = vmatpush1.msra.mxu0 0.0
    %333 = vmatprep.subr.mxu0 0.0
    %334 = vmatpush1.msra.mxu0 0.0
    %335 = vmatprep.subr.mxu0 0.0
    %336 = vmatpush1.msra.mxu0 0.0
    %337 = vmatprep.subr.mxu0 0.0
    %338 = vmatpush1.msra.mxu0 0.0
    %339 = vmatprep.subr.mxu0 0.0
    %340 = vmatpush1.msra.mxu0 0.0
    %341 = vmatprep.subr.mxu0 0.0
    %342 = vmatpush1.msra.mxu0 0.0
    %343 = vmatprep.subr.mxu0 0.0
    %344 = vmatpush1.msra.mxu0 0.0
    %345 = vmatprep.subr.mxu0 0.0
    %346 = vmatpush1.msra.mxu0 0.0
    %347 = vmatprep.subr.mxu0 0.0
    %348 = vmatpush1.msra.mxu0 0.0
    %349 = vmatprep.subr.mxu0 0.0
    %350 = vmatpush1.msra.mxu0 0.0
    %351 = vmatprep.subr.mxu0 0.0
    %352 = vmatpush1.msra.mxu0 0.0
    %353 = vmatprep.subr.mxu0 0.0
    %354 = vmatpush1.msra.mxu0 0.0
    %355 = vmatprep.subr.mxu0 0.0
    %356 = vmatpush1.msra.mxu0 0.0
    %357 = vmatprep.subr.mxu0 0.0
    %358 = vmatpush1.msra.mxu0 0.0
    %359 = vmatprep.mubr.f32.mxu0 0.0
    %360 = vmatmul.mubr.f32.gmra.mrb[0].mxu0 %v293
    %v361 = vpop.f32.mrb[0].mxu0
    %v362 = vadd.f32 %v290, %v361
    %v363 = vpop.f32.mrb[0].mxu0
    %364 = vdwg.mxu0
    %v365 = vsub.f32 0.0, %v362
    %v366 = vmul.f32 %v365, 1.442695
    %v367 = vpow.pop %v366
    %v368 = vadd.f32 %v367, 1.0
    %v369 = vrcp.pop %v368
    %v370 = vmul.f32 %v362, %v369
    %v371 = vld [vmem:[#allocation7 + $0x60] sm:$0xff]
    %v372 = vld [vmem:[#allocation7 + $0x70] ss:$0 sm:$0xff]
    %vm373 = vcmask 64512
    %v375 = vsel %vm373, %v63, 0
    %377 = vmatprep.subr.mxu0 0.0
    %378 = vmatpush1.msra.mxu0 %v371
    %379 = vmatprep.subr.mxu0 0.0
    %380 = vmatpush1.msra.mxu0 0.0
    %381 = vmatprep.subr.mxu0 0.0
    %382 = vmatpush1.msra.mxu0 0.0
    %383 = vmatprep.subr.mxu0 0.0
    %384 = vmatpush1.msra.mxu0 0.0
    %385 = vmatprep.subr.mxu0 0.0
    %386 = vmatpush1.msra.mxu0 0.0
    %387 = vmatprep.subr.mxu0 0.0
    %388 = vmatpush1.msra.mxu0 0.0
    %389 = vmatprep.subr.mxu0 0.0
    %390 = vmatpush1.msra.mxu0 0.0
    %391 = vmatprep.subr.mxu0 0.0
    %392 = vmatpush1.msra.mxu0 0.0
    %393 = vmatprep.subr.mxu0 0.0
    %394 = vmatpush1.msra.mxu0 0.0
    %395 = vmatprep.subr.mxu0 0.0
    %396 = vmatpush1.msra.mxu0 0.0
    %397 = vmatprep.subr.mxu0 0.0
    %398 = vmatpush1.msra.mxu0 0.0
    %399 = vmatprep.subr.mxu0 0.0
    %400 = vmatpush1.msra.mxu0 0.0
    %401 = vmatprep.subr.mxu0 0.0
    %402 = vmatpush1.msra.mxu0 0.0
    %403 = vmatprep.subr.mxu0 0.0
    %404 = vmatpush1.msra.mxu0 0.0
    %405 = vmatprep.subr.mxu0 0.0
    %406 = vmatpush1.msra.mxu0 0.0
    %407 = vmatprep.subr.mxu0 0.0
    %408 = vmatpush1.msra.mxu0 0.0
    %409 = vmatprep.subr.mxu0 0.0
    %410 = vmatpush1.msra.mxu0 0.0
    %411 = vmatprep.subr.mxu0 0.0
    %412 = vmatpush1.msra.mxu0 0.0
    %413 = vmatprep.subr.mxu0 0.0
    %414 = vmatpush1.msra.mxu0 0.0
    %415 = vmatprep.subr.mxu0 0.0
    %416 = vmatpush1.msra.mxu0 0.0
    %417 = vmatprep.subr.mxu0 0.0
    %418 = vmatpush1.msra.mxu0 0.0
    %419 = vmatprep.subr.mxu0 0.0
    %420 = vmatpush1.msra.mxu0 0.0
    %421 = vmatprep.subr.mxu0 0.0
    %422 = vmatpush1.msra.mxu0 0.0
    %423 = vmatprep.subr.mxu0 0.0
    %424 = vmatpush1.msra.mxu0 0.0
    %425 = vmatprep.subr.mxu0 0.0
    %426 = vmatpush1.msra.mxu0 0.0
    %427 = vmatprep.subr.mxu0 0.0
    %428 = vmatpush1.msra.mxu0 0.0
    %429 = vmatprep.subr.mxu0 0.0
    %430 = vmatpush1.msra.mxu0 0.0
    %431 = vmatprep.subr.mxu0 0.0
    %432 = vmatpush1.msra.mxu0 0.0
    %433 = vmatprep.subr.mxu0 0.0
    %434 = vmatpush1.msra.mxu0 0.0
    %435 = vmatprep.subr.mxu0 0.0
    %436 = vmatpush1.msra.mxu0 0.0
    %437 = vmatprep.subr.mxu0 0.0
    %438 = vmatpush1.msra.mxu0 0.0
    %439 = vmatprep.subr.mxu0 0.0
    %440 = vmatpush1.msra.mxu0 0.0
    %441 = vmatprep.mubr.f32.mxu0 0.0
    %442 = vmatmul.mubr.f32.gmra.mrb[0].mxu0 %v375
    %v443 = vpop.f32.mrb[0].mxu0
    %v444 = vadd.f32 %v372, %v443
    %v445 = vpop.f32.mrb[0].mxu0
    %446 = vdwg.mxu0
    %v447 = vsub.f32 0.0, %v444
    %v448 = vmul.f32 %v447, 1.442695
    %v449 = vpow.pop %v448
    %v450 = vadd.f32 %v449, 1.0
    %v451 = vrcp.pop %v450
    %v452 = vmul.f32 %v444, %v451
    %v453 = vadd.f32 %v370, %v452
    %v454 = vpack.c.bf16 %v453, %v453
    %v455 = vld [vmem:[#allocation7 + $0x80] sm:$0xff]
    %v456 = vld [vmem:[#allocation7 + $0x90] sm:$0xff]
    %v457 = vld [vmem:[#allocation7 + $0xa0] sm:$0xff]
    %v458 = vld [vmem:[#allocation7 + $0xb0] sm:$0xf]
    %v459 = vld [vmem:[#allocation7 + $0xc0] sm:$0xff]
    %v460 = vld [vmem:[#allocation7 + $0xd0] sm:$0xff]
    %v461 = vld [vmem:[#allocation7 + $0xe0] sm:$0xff]
    %v462 = vld [vmem:[#allocation7 + $0xf0] sm:$0xf]
    %464 = vset.pattern.permute.xlu0 0
    %465 = vperm.xlu0 %464, %v459
    %v466 = vpop.permute.xlu0 %465
    %469 = vset.pattern.permute.xlu0 0
    %470 = vperm.xlu0 %469, %v460
    %v471 = vpop.permute.xlu0 %470
    %474 = vset.pattern.permute.xlu0 0
    %475 = vperm.xlu0 %474, %v461
    %v476 = vpop.permute.xlu0 %475
    %479 = vset.pattern.permute.xlu0 0
    %480 = vperm.xlu0 %479, %v462
    %v481 = vpop.permute.xlu0 %480
    %v484 = vsel %vm284, %v455, 0
    %v487 = vsel %vm284, %v456, 0
    %v490 = vsel %vm284, %v457, 0
    %v493 = vsel %vm284, %v458, 0
    %495 = vmatprep.subr.mxu0 0.0
    %496 = vmatpush1.msra.mxu0 %v61
    %497 = vmatprep.subr.mxu0 0.0
    %498 = vmatpush1.msra.mxu0 %v62
    %499 = vmatprep.subr.mxu0 0.0
    %500 = vmatpush1.msra.mxu0 0.0
    %501 = vmatprep.subr.mxu0 0.0
    %502 = vmatpush1.msra.mxu0 0.0
    %503 = vmatprep.subr.mxu0 0.0
    %504 = vmatpush1.msra.mxu0 0.0
    %505 = vmatprep.subr.mxu0 0.0
    %506 = vmatpush1.msra.mxu0 0.0
    %507 = vmatprep.subr.mxu0 0.0
    %508 = vmatpush1.msra.mxu0 0.0
    %509 = vmatprep.subr.mxu0 0.0
    %510 = vmatpush1.msra.mxu0 0.0
    %511 = vmatprep.subr.mxu0 0.0
    %512 = vmatpush1.msra.mxu0 0.0
    %513 = vmatprep.subr.mxu0 0.0
    %514 = vmatpush1.msra.mxu0 0.0
    %515 = vmatprep.subr.mxu0 0.0
    %516 = vmatpush1.msra.mxu0 0.0
    %517 = vmatprep.subr.mxu0 0.0
    %518 = vmatpush1.msra.mxu0 0.0
    %519 = vmatprep.subr.mxu0 0.0
    %520 = vmatpush1.msra.mxu0 0.0
    %521 = vmatprep.subr.mxu0 0.0
    %522 = vmatpush1.msra.mxu0 0.0
    %523 = vmatprep.subr.mxu0 0.0
    %524 = vmatpush1.msra.mxu0 0.0
    %525 = vmatprep.subr.mxu0 0.0
    %526 = vmatpush1.msra.mxu0 0.0
    %527 = vmatprep.subr.mxu0 0.0
    %528 = vmatpush1.msra.mxu0 0.0
    %529 = vmatprep.subr.mxu0 0.0
    %530 = vmatpush1.msra.mxu0 0.0
    %531 = vmatprep.subr.mxu0 0.0
    %532 = vmatpush1.msra.mxu0 0.0
    %533 = vmatprep.subr.mxu0 0.0
    %534 = vmatpush1.msra.mxu0 0.0
    %535 = vmatprep.subr.mxu0 0.0
    %536 = vmatpush1.msra.mxu0 0.0
    %537 = vmatprep.subr.mxu0 0.0
    %538 = vmatpush1.msra.mxu0 0.0
    %539 = vmatprep.subr.mxu0 0.0
    %540 = vmatpush1.msra.mxu0 0.0
    %541 = vmatprep.subr.mxu0 0.0
    %542 = vmatpush1.msra.mxu0 0.0
    %543 = vmatprep.subr.mxu0 0.0
    %544 = vmatpush1.msra.mxu0 0.0
    %545 = vmatprep.subr.mxu0 0.0
    %546 = vmatpush1.msra.mxu0 0.0
    %547 = vmatprep.subr.mxu0 0.0
    %548 = vmatpush1.msra.mxu0 0.0
    %549 = vmatprep.subr.mxu0 0.0
    %550 = vmatpush1.msra.mxu0 0.0
    %551 = vmatprep.subr.mxu0 0.0
    %552 = vmatpush1.msra.mxu0 0.0
    %553 = vmatprep.subr.mxu0 0.0
    %554 = vmatpush1.msra.mxu0 0.0
    %555 = vmatprep.subr.mxu0 0.0
    %556 = vmatpush1.msra.mxu0 0.0
    %557 = vmatprep.subr.mxu0 0.0
    %558 = vmatpush1.msra.mxu0 0.0
    %559 = vmatprep.mubr.f32.mxu0 0.0
    %560 = vmatmul.mubr.f32.gmra.mrb[0].mxu0 %v484
    %v561 = vpop.f32.mrb[0].mxu0
    %v562 = vadd.f32 %v466, %v561
    %v563 = vpop.f32.mrb[0].mxu0
    %564 = vmatprep.mubr.f32.mxu0 0.0
    %565 = vmatmul.mubr.f32.gmra.mrb[0].mxu0 %v487
    %v566 = vpop.f32.mrb[0].mxu0
    %v567 = vadd.f32 %v471, %v566
    %v568 = vpop.f32.mrb[0].mxu0
    %569 = vmatprep.mubr.f32.mxu0 0.0
    %570 = vmatmul.mubr.f32.gmra.mrb[0].mxu0 %v490
    %v571 = vpop.f32.mrb[0].mxu0
    %v572 = vadd.f32 %v476, %v571
    %v573 = vpop.f32.mrb[0].mxu0
    %574 = vmatprep.mubr.f32.mxu0 0.0
    %575 = vmatmul.mubr.f32.gmra.mrb[0].mxu0 %v493
    %v576 = vpop.f32.mrb[0].mxu0
    %v577 = vadd.f32 %v481, %v576
    %v578 = vpop.f32.mrb[0].mxu0
    %579 = vdwg.mxu0
    %v580 = vld [vmem:[#allocation7 + $0x150] sm:$0x7]
    %582 = vset.pattern.permute.xlu0 0
    %583 = vperm.xlu0 %582, %v562
    %v584 = vpop.permute.xlu0 %583
    %587 = vset.pattern.permute.xlu0 0
    %588 = vperm.xlu0 %587, %v567
    %v589 = vpop.permute.xlu0 %588
    %592 = vset.pattern.permute.xlu0 0
    %593 = vperm.xlu0 %592, %v572
    %v594 = vpop.permute.xlu0 %593
    %597 = vset.pattern.permute.xlu0 0
    %598 = vperm.xlu0 %597, %v577
    %v599 = vpop.permute.xlu0 %598
    %v601 = vlaneseq
    %v602 = vshrl.u32 %v601, 7
    %v603 = vsub.s32 0, %v602
    %v604 = vrot.slane %v580, %v603
    %v605 = vmul.f32 %v584, %v604
    %v606 = vmul.f32 %v589, %v604
    %v607 = vmul.f32 %v594, %v604
    %v608 = vmul.f32 %v599, %v604
    %v609 = vlaneseq
    %v610 = vshrl.u32 %v609, 7
    %v611 = vsub.s32 1, %v610
    %v612 = vrot.slane %v580, %v611
    %v613 = vmul.f32 %v584, %v612
    %v614 = vmul.f32 %v589, %v612
    %v615 = vmul.f32 %v594, %v612
    %v616 = vmul.f32 %v599, %v612
    %vm621 = vcmask 1046528
    %v622 = vrot.slane %v613, 1
    %v623 = vrot.slane %v614, 1
    %v624 = vsel %vm621, %v622, %v623
    %v625 = vrot.slane %v615, 1
    %v626 = vsel %vm621, %v623, %v625
    %v627 = vrot.slane %v616, 1
    %v628 = vsel %vm621, %v625, %v627
    %v633 = vadd.f32 %v605, %v624
    %v634 = vadd.f32 %v606, %v626
    %v635 = vadd.f32 %v607, %v628
    %v636 = vadd.f32 %v608, %v627
    %v637 = vlaneseq
    %v638 = vshrl.u32 %v637, 7
    %v639 = vsub.s32 2, %v638
    %v640 = vrot.slane %v580, %v639
    %v641 = vmul.f32 %v584, %v640
    %v642 = vmul.f32 %v589, %v640
    %v643 = vmul.f32 %v594, %v640
    %v644 = vmul.f32 %v599, %v640
    %vm649 = vcmask 1045504
    %v650 = vrot.slane %v641, 2
    %v651 = vrot.slane %v642, 2
    %v652 = vsel %vm649, %v650, %v651
    %v653 = vrot.slane %v643, 2
    %v654 = vsel %vm649, %v651, %v653
    %v655 = vrot.slane %v644, 2
    %v656 = vsel %vm649, %v653, %v655
    %v661 = vadd.f32 %v633, %v652
    %v662 = vadd.f32 %v634, %v654
    %v663 = vadd.f32 %v635, %v656
    %v664 = vadd.f32 %v636, %v655
    %665 = vset.pattern.permute.xlu0 1
    %666 = vperm.xlu0 %665, %v562
    %v667 = vpop.permute.xlu0 %666
    %669 = vset.pattern.permute.xlu0 1
    %670 = vperm.xlu0 %669, %v567
    %v671 = vpop.permute.xlu0 %670
    %673 = vset.pattern.permute.xlu0 1
    %674 = vperm.xlu0 %673, %v572
    %v675 = vpop.permute.xlu0 %674
    %677 = vset.pattern.permute.xlu0 1
    %678 = vperm.xlu0 %677, %v577
    %v679 = vpop.permute.xlu0 %678
    %v681 = vmul.f32 %v667, %v604
    %v682 = vmul.f32 %v671, %v604
    %v683 = vmul.f32 %v675, %v604
    %v684 = vmul.f32 %v679, %v604
    %v685 = vmul.f32 %v667, %v612
    %v686 = vmul.f32 %v671, %v612
    %v687 = vmul.f32 %v675, %v612
    %v688 = vmul.f32 %v679, %v612
    %v693 = vrot.slane %v685, 1
    %v694 = vrot.slane %v686, 1
    %v695 = vsel %vm621, %v693, %v694
    %v696 = vrot.slane %v687, 1
    %v697 = vsel %vm621, %v694, %v696
    %v698 = vrot.slane %v688, 1
    %v699 = vsel %vm621, %v696, %v698
    %v704 = vadd.f32 %v681, %v695
    %v705 = vadd.f32 %v682, %v697
    %v706 = vadd.f32 %v683, %v699
    %v707 = vadd.f32 %v684, %v698
    %v708 = vmul.f32 %v667, %v640
    %v709 = vmul.f32 %v671, %v640
    %v710 = vmul.f32 %v675, %v640
    %v711 = vmul.f32 %v679, %v640
    %v716 = vrot.slane %v708, 2
    %v717 = vrot.slane %v709, 2
    %v718 = vsel %vm649, %v716, %v717
    %v719 = vrot.slane %v710, 2
    %v720 = vsel %vm649, %v717, %v719
    %v721 = vrot.slane %v711, 2
    %v722 = vsel %vm649, %v719, %v721
    %v727 = vadd.f32 %v704, %v718
    %v728 = vadd.f32 %v705, %v720
    %v729 = vadd.f32 %v706, %v722
    %v730 = vadd.f32 %v707, %v721
    %vm735 = vcmask 1041408
    %v736 = vrot.slane %v727, 6
    %v737 = vrot.slane %v728, 6
    %v738 = vsel %vm735, %v736, %v737
    %v739 = vrot.slane %v729, 6
    %v740 = vsel %vm735, %v737, %v739
    %v741 = vrot.slane %v730, 6
    %v742 = vsel %vm735, %v739, %v741
    %v747 = vsel %vm735, %v664, %v736
    %v748 = vld [vmem:[#allocation5] sm:$0xf]
    %v749 = vld [vmem:[#allocation5 + $0xc] sm:$0xf]
    %v750 = vld [vmem:[#allocation5 + $0x18] sm:$0xf]
    %v751 = vld [vmem:[#allocation5 + $0x24] sm:$0xf]
    %v752 = vld [vmem:[#allocation7 + $0x180] ss:$0 sm:$0xff]
    %v757 = vunpack.c.l.b16 %v748
    %v758 = vunpack.c.l.b16 %v749
    %v759 = vunpack.c.l.b16 %v750
    %v760 = vunpack.c.l.b16 %v751
    %v761 = vpack.c.b16 %v758, %v757
    %v762 = vpack.c.b16 %v760, %v759
    %v766 = vsel %vm291, %v454, 0
    %768 = vmatprep.subr.bf16.mxu0 0
    %769 = vmatpush1.bf16.msra.mxu0 %v761
    %770 = vmatprep.subr.bf16.mxu0 0
    %771 = vmatpush1.bf16.msra.mxu0 %v762
    %772 = vmatprep.subr.bf16.mxu0 0
    %773 = vmatpush1.bf16.msra.mxu0 0
    %774 = vmatprep.subr.bf16.mxu0 0
    %775 = vmatpush1.bf16.msra.mxu0 0
    %776 = vmatprep.subr.bf16.mxu0 0
    %777 = vmatpush1.bf16.msra.mxu0 0
    %778 = vmatprep.subr.bf16.mxu0 0
    %779 = vmatpush1.bf16.msra.mxu0 0
    %780 = vmatprep.subr.bf16.mxu0 0
    %781 = vmatpush1.bf16.msra.mxu0 0
    %782 = vmatprep.subr.bf16.mxu0 0
    %783 = vmatpush1.bf16.msra.mxu0 0
    %784 = vmatprep.subr.bf16.mxu0 0
    %785 = vmatpush1.bf16.msra.mxu0 0
    %786 = vmatprep.subr.bf16.mxu0 0
    %787 = vmatpush1.bf16.msra.mxu0 0
    %788 = vmatprep.subr.bf16.mxu0 0
    %789 = vmatpush1.bf16.msra.mxu0 0
    %790 = vmatprep.subr.bf16.mxu0 0
    %791 = vmatpush1.bf16.msra.mxu0 0
    %792 = vmatprep.subr.bf16.mxu0 0
    %793 = vmatpush1.bf16.msra.mxu0 0
    %794 = vmatprep.subr.bf16.mxu0 0
    %795 = vmatpush1.bf16.msra.mxu0 0
    %796 = vmatprep.subr.bf16.mxu0 0
    %797 = vmatpush1.bf16.msra.mxu0 0
    %798 = vmatprep.subr.bf16.mxu0 0
    %799 = vmatpush1.bf16.msra.mxu0 0
    %800 = vmatprep.mubr.bf16.mxu0 0
    %801 = vmatmul.mubr.bf16.gmra.mrb[0].mxu0 %v766
    %v802 = vpop.f32.mrb[0].mxu0
    %v803 = vadd.f32 %v752, %v802
    %v804 = vpop.f32.mrb[0].mxu0
    %v805 = vpop.f32.mrb[0].mxu0
    %v806 = vpop.f32.mrb[0].mxu0
    %807 = vdwg.mxu0
    %v808 = vlaneseq
    %v809 = vshrl.u32 %v808, 7
    %v810 = vsub.s32 0, %v809
    %v811 = vrot.slane %v803, %v810
    %v812 = vlaneseq
    %v813 = vshrl.u32 %v812, 7
    %v814 = vsub.s32 1, %v813
    %v815 = vrot.slane %v803, %v814
    %v816 = vsel %vm735, %v811, %v815
    %v817 = vadd.f32 %v661, %v811
    %v818 = vadd.f32 %v662, %v811
    %v819 = vadd.f32 %v663, %v811
    %v820 = vadd.f32 %v747, %v816
    %v821 = vadd.f32 %v738, %v815
    %v822 = vadd.f32 %v740, %v815
    %v823 = vadd.f32 %v742, %v815
    %v824 = vsel %vm291, %v817, 0.0
    %v825 = vsel %vm291, %v818, 0.0
    %v826 = vadd.f32 %v824, %v825
    %v827 = vsel %vm291, %v819, 0.0
    %v828 = vadd.f32 %v826, %v827
    %vm829 = vcmask 254976
    %v830 = vsel %vm829, %v820, 0.0
    %v831 = vadd.f32 %v828, %v830
    %v832 = vrot.slane %v831, 4
    %v833 = vadd.f32 %v831, %v832
    %v834 = vrot.slane %v833, 2
    %v835 = vadd.f32 %v833, %v834
    %v836 = vrot.slane %v835, 1
    %v837 = vadd.f32 %v835, %v836
    %v838 = vmul.f32 %v817, %v817
    %v839 = vmul.f32 %v818, %v818
    %v840 = vmul.f32 %v819, %v819
    %v841 = vmul.f32 %v820, %v820
    %v842 = vsel %vm291, %v838, 0.0
    %v843 = vsel %vm291, %v839, 0.0
    %v844 = vadd.f32 %v842, %v843
    %v845 = vsel %vm291, %v840, 0.0
    %v846 = vadd.f32 %v844, %v845
    %v847 = vsel %vm829, %v841, 0.0
    %v848 = vadd.f32 %v846, %v847
    %v849 = vrot.slane %v848, 4
    %v850 = vadd.f32 %v848, %v849
    %v851 = vrot.slane %v850, 2
    %v852 = vadd.f32 %v850, %v851
    %v853 = vrot.slane %v852, 1
    %v854 = vadd.f32 %v852, %v853
    %v859 = vrot.slane %v820, 2
    %v860 = vrot.slane %v821, 2
    %v861 = vsel %vm649, %v859, %v860
    %v862 = vrot.slane %v822, 2
    %v863 = vsel %vm649, %v860, %v862
    %v864 = vrot.slane %v823, 2
    %v865 = vsel %vm649, %v862, %v864
    %v870 = vsel %vm291, %v861, 0.0
    %v871 = vsel %vm291, %v863, 0.0
    %v872 = vadd.f32 %v870, %v871
    %v873 = vsel %vm291, %v865, 0.0
    %v874 = vadd.f32 %v872, %v873
    %v875 = vsel %vm829, %v864, 0.0
    %v876 = vadd.f32 %v874, %v875
    %v877 = vrot.slane %v876, 4
    %v878 = vadd.f32 %v876, %v877
    %v879 = vrot.slane %v878, 2
    %v880 = vadd.f32 %v878, %v879
    %v881 = vrot.slane %v880, 1
    %v882 = vadd.f32 %v880, %v881
    %v883 = vmul.f32 %v821, %v821
    %v884 = vmul.f32 %v822, %v822
    %v885 = vmul.f32 %v823, %v823
    %v890 = vrot.slane %v841, 2
    %v891 = vrot.slane %v883, 2
    %v892 = vsel %vm649, %v890, %v891
    %v893 = vrot.slane %v884, 2
    %v894 = vsel %vm649, %v891, %v893
    %v895 = vrot.slane %v885, 2
    %v896 = vsel %vm649, %v893, %v895
    %v901 = vsel %vm291, %v892, 0.0
    %v902 = vsel %vm291, %v894, 0.0
    %v903 = vadd.f32 %v901, %v902
    %v904 = vsel %vm291, %v896, 0.0
    %v905 = vadd.f32 %v903, %v904
    %v906 = vsel %vm829, %v895, 0.0
    %v907 = vadd.f32 %v905, %v906
    %v908 = vrot.slane %v907, 4
    %v909 = vadd.f32 %v907, %v908
    %v910 = vrot.slane %v909, 2
    %v911 = vadd.f32 %v909, %v910
    %v912 = vrot.slane %v911, 1
    %v913 = vadd.f32 %v911, %v912
    %vm914 = vcmask 1040384
    %v915 = vsel %vm914, %v837, %v882
    %v916 = vsel %vm735, %v915, %v854
    %vm917 = vcmask 1042432
    %v918 = vsel %vm917, %v916, %v913
    %v919 = vld [vmem:[#allocation7 + $0x1b0] sm:$0xff]
    %v920 = vld [vmem:[#allocation7 + $0x1c0] sm:$0xff]
    %v921 = vld [vmem:[#allocation7 + $0x1d0] sm:$0xff]
    %v922 = vld [vmem:[#allocation7 + $0x1e0] sm:$0xff]
    %v924 = vsel %vm291, %v918, 0
    %926 = vmatprep.subr.mxu0 0.0
    %927 = vmatpush1.msra.mxu0 %v919
    %928 = vmatprep.subr.mxu0 0.0
    %929 = vmatpush1.msra.mxu0 %v920
    %930 = vmatprep.subr.mxu0 0.0
    %931 = vmatpush1.msra.mxu0 %v921
    %932 = vmatprep.subr.mxu0 0.0
    %933 = vmatpush1.msra.mxu0 %v922
    %934 = vmatprep.subr.mxu0 0.0
    %935 = vmatpush1.msra.mxu0 0.0
    %936 = vmatprep.subr.mxu0 0.0
    %937 = vmatpush1.msra.mxu0 0.0
    %938 = vmatprep.subr.mxu0 0.0
    %939 = vmatpush1.msra.mxu0 0.0
    %940 = vmatprep.subr.mxu0 0.0
    %941 = vmatpush1.msra.mxu0 0.0
    %942 = vmatprep.subr.mxu0 0.0
    %943 = vmatpush1.msra.mxu0 0.0
    %944 = vmatprep.subr.mxu0 0.0
    %945 = vmatpush1.msra.mxu0 0.0
    %946 = vmatprep.subr.mxu0 0.0
    %947 = vmatpush1.msra.mxu0 0.0
    %948 = vmatprep.subr.mxu0 0.0
    %949 = vmatpush1.msra.mxu0 0.0
    %950 = vmatprep.subr.mxu0 0.0
    %951 = vmatpush1.msra.mxu0 0.0
    %952 = vmatprep.subr.mxu0 0.0
    %953 = vmatpush1.msra.mxu0 0.0
    %954 = vmatprep.subr.mxu0 0.0
    %955 = vmatpush1.msra.mxu0 0.0
    %956 = vmatprep.subr.mxu0 0.0
    %957 = vmatpush1.msra.mxu0 0.0
    %958 = vmatprep.subr.mxu0 0.0
    %959 = vmatpush1.msra.mxu0 0.0
    %960 = vmatprep.subr.mxu0 0.0
    %961 = vmatpush1.msra.mxu0 0.0
    %962 = vmatprep.subr.mxu0 0.0
    %963 = vmatpush1.msra.mxu0 0.0
    %964 = vmatprep.subr.mxu0 0.0
    %965 = vmatpush1.msra.mxu0 0.0
    %966 = vmatprep.subr.mxu0 0.0
    %967 = vmatpush1.msra.mxu0 0.0
    %968 = vmatprep.subr.mxu0 0.0
    %969 = vmatpush1.msra.mxu0 0.0
    %970 = vmatprep.subr.mxu0 0.0
    %971 = vmatpush1.msra.mxu0 0.0
    %972 = vmatprep.subr.mxu0 0.0
    %973 = vmatpush1.msra.mxu0 0.0
    %974 = vmatprep.subr.mxu0 0.0
    %975 = vmatpush1.msra.mxu0 0.0
    %976 = vmatprep.subr.mxu0 0.0
    %977 = vmatpush1.msra.mxu0 0.0
    %978 = vmatprep.subr.mxu0 0.0
    %979 = vmatpush1.msra.mxu0 0.0
    %980 = vmatprep.subr.mxu0 0.0
    %981 = vmatpush1.msra.mxu0 0.0
    %982 = vmatprep.subr.mxu0 0.0
    %983 = vmatpush1.msra.mxu0 0.0
    %984 = vmatprep.subr.mxu0 0.0
    %985 = vmatpush1.msra.mxu0 0.0
    %986 = vmatprep.subr.mxu0 0.0
    %987 = vmatpush1.msra.mxu0 0.0
    %988 = vmatprep.subr.mxu0 0.0
    %989 = vmatpush1.msra.mxu0 0.0
    %990 = vmatprep.mubr.f32.mxu0 0.0
    %991 = vmatmul.mubr.f32.gmra.mrb[0].mxu0 %v924
    %v992 = vpop.f32.mrb[0].mxu0
    %v993 = vadd.f32 0.0, %v992
    %v994 = vpop.f32.mrb[0].mxu0
    %995 = vdwg.mxu0
    %v996 = vmul.f32 %v993, 0.0048076925
    %v997 = vmul.f32 %v996, %v996
    %v999 = vrot.slane %v997, 6
    %v1001 = vsub.f32 %v996, %v999
    %v1002 = vmax.f32 %v1001, 0.0
    %v1003 = vlaneseq
    %v1004 = vshrl.u32 %v1003, 7
    %v1005 = vsub.s32 0, %v1004
    %v1006 = vrot.slane %v996, %v1005
    %v1007 = vlaneseq
    %v1008 = vshrl.u32 %v1007, 7
    %v1009 = vsub.s32 1, %v1008
    %v1010 = vrot.slane %v996, %v1009
    %v1011 = vsel %vm735, %v1006, %v1010
    %v1012 = vadd.f32 %v1002, 1e-05
    %v1013 = vrsqrt.pop %v1012
    %v1014 = vlaneseq
    %v1015 = vshrl.u32 %v1014, 7
    %v1016 = vsub.s32 2, %v1015
    %v1017 = vrot.slane %v1013, %v1016
    %v1018 = vlaneseq
    %v1019 = vshrl.u32 %v1018, 7
    %v1020 = vsub.s32 3, %v1019
    %v1021 = vrot.slane %v1013, %v1020
    %v1022 = vsel %vm735, %v1017, %v1021
    %v1023 = vsub.f32 %v817, %v1006
    %v1024 = vsub.f32 %v818, %v1006
    %v1025 = vsub.f32 %v819, %v1006
    %v1026 = vsub.f32 %v820, %v1011
    %v1027 = vsub.f32 %v821, %v1010
    %v1028 = vsub.f32 %v822, %v1010
    %v1029 = vsub.f32 %v823, %v1010
    %v1030 = vmul.f32 %v1023, %v1017
    %v1031 = vmul.f32 %v1024, %v1017
    %v1032 = vmul.f32 %v1025, %v1017
    %v1033 = vmul.f32 %v1026, %v1022
    %v1034 = vmul.f32 %v1027, %v1021
    %v1035 = vmul.f32 %v1028, %v1021
    %v1036 = vmul.f32 %v1029, %v1021
    %v1037 = vld [vmem:[#allocation7 + $0x190] ss:$0 sm:$0xff]
    %v1038 = vmul.f32 %v1030, %v1037
    %v1039 = vmul.f32 %v1031, %v1037
    %v1040 = vmul.f32 %v1032, %v1037
    %v1041 = vmul.f32 %v1033, %v1037
    %v1042 = vmul.f32 %v1034, %v1037
    %v1043 = vmul.f32 %v1035, %v1037
    %v1044 = vmul.f32 %v1036, %v1037
    %v1045 = vld [vmem:[#allocation7 + $0x1a0] ss:$0 sm:$0xff]
    %v1046 = vadd.f32 %v1038, %v1045
    %v1047 = vadd.f32 %v1039, %v1045
    %v1048 = vadd.f32 %v1040, %v1045
    %v1049 = vadd.f32 %v1041, %v1045
    %v1050 = vadd.f32 %v1042, %v1045
    %v1051 = vadd.f32 %v1043, %v1045
    %v1052 = vadd.f32 %v1044, %v1045
    %v1053 = vsub.f32 0.0, %v1046
    %v1054 = vsub.f32 0.0, %v1047
    %v1055 = vsub.f32 0.0, %v1048
    %v1056 = vsub.f32 0.0, %v1049
    %v1057 = vsub.f32 0.0, %v1050
    %v1058 = vsub.f32 0.0, %v1051
    %v1059 = vsub.f32 0.0, %v1052
    %v1060 = vmul.f32 %v1053, 1.442695
    %v1061 = vpow.pop %v1060
    %v1062 = vmul.f32 %v1054, 1.442695
    %v1063 = vpow.pop %v1062
    %v1064 = vmul.f32 %v1055, 1.442695
    %v1065 = vpow.pop %v1064
    %v1066 = vmul.f32 %v1056, 1.442695
    %v1067 = vpow.pop %v1066
    %v1068 = vmul.f32 %v1057, 1.442695
    %v1069 = vpow.pop %v1068
    %v1070 = vmul.f32 %v1058, 1.442695
    %v1071 = vpow.pop %v1070
    %v1072 = vmul.f32 %v1059, 1.442695
    %v1073 = vpow.pop %v1072
    %v1074 = vadd.f32 %v1061, 1.0
    %v1075 = vadd.f32 %v1063, 1.0
    %v1076 = vadd.f32 %v1065, 1.0
    %v1077 = vadd.f32 %v1067, 1.0
    %v1078 = vadd.f32 %v1069, 1.0
    %v1079 = vadd.f32 %v1071, 1.0
    %v1080 = vadd.f32 %v1073, 1.0
    %v1081 = vrcp.pop %v1074
    %v1082 = vrcp.pop %v1075
    %v1083 = vrcp.pop %v1076
    %v1084 = vrcp.pop %v1077
    %v1085 = vrcp.pop %v1078
    %v1086 = vrcp.pop %v1079
    %v1087 = vrcp.pop %v1080
    %v1088 = vmul.f32 %v1046, %v1081
    %v1089 = vmul.f32 %v1047, %v1082
    %v1090 = vmul.f32 %v1048, %v1083
    %v1091 = vmul.f32 %v1049, %v1084
    %v1092 = vmul.f32 %v1050, %v1085
    %v1093 = vmul.f32 %v1051, %v1086
    %v1094 = vmul.f32 %v1052, %v1087
    %v1095 = vld [vmem:[#allocation5 + $0xc0] sm:$0xf]
    %v1096 = vld [vmem:[#allocation5 + $0xcc] sm:$0xf]
    %v1097 = vld [vmem:[#allocation5 + $0xd8] sm:$0xf]
    %v1098 = vld [vmem:[#allocation5 + $0xe4] sm:$0xf]
    %v1099 = vld [vmem:[#allocation5 + $0xf0] sm:$0xf]
    %v1100 = vld [vmem:[#allocation5 + $0xfc] sm:$0xf]
    %v1101 = vld [vmem:[#allocation5 + $0x108] sm:$0xf]
    %v1102 = vld [vmem:[#allocation5 + $0x114] sm:$0xf]
    %v1103 = vld [vmem:[#allocation5 + $0x120] sm:$0xf]
    %v1104 = vpack.c.bf16 %v1089, %v1088
    %v1105 = vpack.c.bf16 %v1091, %v1090
    %v1106 = vpack.c.bf16 %v1093, %v1092
    %v1107 = vpack.c.bf16 %v1094, %v1094
    %v1117 = vunpack.c.l.b16 %v1095
    %v1118 = vunpack.c.l.b16 %v1096
    %v1119 = vunpack.c.l.b16 %v1097
    %v1120 = vunpack.c.l.b16 %v1098
    %v1121 = vunpack.c.l.b16 %v1099
    %v1122 = vunpack.c.l.b16 %v1100
    %v1123 = vunpack.c.l.b16 %v1101
    %v1124 = vunpack.c.l.b16 %v1102
    %v1125 = vunpack.c.l.b16 %v1103
    %v1126 = vpack.c.b16 %v1118, %v1117
    %v1127 = vpack.c.b16 %v1120, %v1119
    %v1128 = vpack.c.b16 %v1122, %v1121
    %v1129 = vpack.c.b16 %v1124, %v1123
    %v1130 = vpack.c.b16 %v1125, %v1125
    %vm1131 = vcmask 424960
    %v1133 = vsel %vm1131, %v1126, 0
    %v1136 = vsel %vm1131, %v1127, 0
    %v1139 = vsel %vm1131, %v1128, 0
    %v1142 = vsel %vm1131, %v1129, 0
    %v1145 = vsel %vm1131, %v1130, 0
    %v1148 = vsel %vm735, %v1107, 0
    %1150 = vmatprep.subr.bf16.mxu0 0
    %1151 = vmatpush1.bf16.msra.mxu0 %v1104
    %1152 = vmatprep.subr.bf16.mxu0 0
    %1153 = vmatpush1.bf16.msra.mxu0 %v1105
    %1154 = vmatprep.subr.bf16.mxu0 0
    %1155 = vmatpush1.bf16.msra.mxu0 %v1106
    %1156 = vmatprep.subr.bf16.mxu0 0
    %1157 = vmatpush1.bf16.msra.mxu0 %v1148
    %1158 = vmatprep.subr.bf16.mxu0 0
    %1159 = vmatpush1.bf16.msra.mxu0 0
    %1160 = vmatprep.subr.bf16.mxu0 0
    %1161 = vmatpush1.bf16.msra.mxu0 0
    %1162 = vmatprep.subr.bf16.mxu0 0
    %1163 = vmatpush1.bf16.msra.mxu0 0
    %1164 = vmatprep.subr.bf16.mxu0 0
    %1165 = vmatpush1.bf16.msra.mxu0 0
    %1166 = vmatprep.subr.bf16.mxu0 0
    %1167 = vmatpush1.bf16.msra.mxu0 0
    %1168 = vmatprep.subr.bf16.mxu0 0
    %1169 = vmatpush1.bf16.msra.mxu0 0
    %1170 = vmatprep.subr.bf16.mxu0 0
    %1171 = vmatpush1.bf16.msra.mxu0 0
    %1172 = vmatprep.subr.bf16.mxu0 0
    %1173 = vmatpush1.bf16.msra.mxu0 0
    %1174 = vmatprep.subr.bf16.mxu0 0
    %1175 = vmatpush1.bf16.msra.mxu0 0
    %1176 = vmatprep.subr.bf16.mxu0 0
    %1177 = vmatpush1.bf16.msra.mxu0 0
    %1178 = vmatprep.subr.bf16.mxu0 0
    %1179 = vmatpush1.bf16.msra.mxu0 0
    %1180 = vmatprep.subr.bf16.mxu0 0
    %1181 = vmatpush1.bf16.msra.mxu0 0
    %1182 = vmatprep.mubr.bf16.mxu0 0
    %1183 = vmatmul.mubr.bf16.gmra.mrb[0].mxu0 %v1133
    %v1184 = vpop.f32.mrb[0].mxu0
    %v1185 = vadd.f32 0.0, %v1184
    %v1186 = vpop.f32.mrb[0].mxu0
    %v1187 = vpop.f32.mrb[0].mxu0
    %v1188 = vadd.f32 0.0, %v1187
    %v1189 = vpop.f32.mrb[0].mxu0
    %1190 = vmatprep.mubr.bf16.mxu0 0
    %1191 = vmatmul.mubr.bf16.gmra.mrb[0].mxu0 %v1136
    %v1192 = vpop.f32.mrb[0].mxu0
    %v1193 = vadd.f32 0.0, %v1192
    %v1194 = vpop.f32.mrb[0].mxu0
    %v1195 = vpop.f32.mrb[0].mxu0
    %v1196 = vadd.f32 0.0, %v1195
    %v1197 = vpop.f32.mrb[0].mxu0
    %1198 = vmatprep.mubr.bf16.mxu0 0
    %1199 = vmatmul.mubr.bf16.gmra.mrb[0].mxu0 %v1139
    %v1200 = vpop.f32.mrb[0].mxu0
    %v1201 = vadd.f32 0.0, %v1200
    %v1202 = vpop.f32.mrb[0].mxu0
    %v1203 = vpop.f32.mrb[0].mxu0
    %v1204 = vadd.f32 0.0, %v1203
    %v1205 = vpop.f32.mrb[0].mxu0
    %1206 = vmatprep.mubr.bf16.mxu0 0
    %1207 = vmatmul.mubr.bf16.gmra.mrb[0].mxu0 %v1142
    %v1208 = vpop.f32.mrb[0].mxu0
    %v1209 = vadd.f32 0.0, %v1208
    %v1210 = vpop.f32.mrb[0].mxu0
    %v1211 = vpop.f32.mrb[0].mxu0
    %v1212 = vadd.f32 0.0, %v1211
    %v1213 = vpop.f32.mrb[0].mxu0
    %1214 = vmatprep.mubr.bf16.mxu0 0
    %1215 = vmatmul.mubr.bf16.gmra.mrb[0].mxu0 %v1145
    %v1216 = vpop.f32.mrb[0].mxu0
    %v1217 = vadd.f32 0.0, %v1216
    %v1218 = vpop.f32.mrb[0].mxu0
    %v1219 = vpop.f32.mrb[0].mxu0
    %v1220 = vpop.f32.mrb[0].mxu0
    %1221 = vdwg.mxu0
    %1225 = vrot.lane.b32.xlu0 %v1196, 32
    %v1226 = vpop.permute.xlu0 %1225
    %1227 = vrot.lane.b32.xlu0 %v1201, 32
    %v1228 = vpop.permute.xlu0 %1227
    %1229 = vrot.lane.b32.xlu0 %v1204, 32
    %v1230 = vpop.permute.xlu0 %1229
    %1237 = vrot.lane.b32.xlu0 %v1209, 64
    %v1238 = vpop.permute.xlu0 %1237
    %1239 = vrot.lane.b32.xlu0 %v1212, 64
    %v1240 = vpop.permute.xlu0 %1239
    %1241 = vrot.lane.b32.xlu0 %v1217, 64
    %v1242 = vpop.permute.xlu0 %1241
    %v1246 = vsel %vm291, %v1185, %v1226
    %v1247 = vsel %vm291, %v1188, %v1228
    %v1248 = vsel %vm291, %v1193, %v1230
    %vm1249 = vcmask 523264
    %v1250 = vsel %vm1249, %v1246, %v1238
    %v1251 = vsel %vm1249, %v1247, %v1240
    %v1252 = vsel %vm1249, %v1248, %v1242
    %v1253 = vpack.c.bf16 %v1251, %v1250
    %v1254 = vpack.c.bf16 %v1252, %v1252
    %v1255 = vld [vmem:[#allocation5 + $0x30] sm:$0xf]
    %v1256 = vld [vmem:[#allocation5 + $0x3c] sm:$0xf]
    %v1257 = vld [vmem:[#allocation5 + $0x48] sm:$0xf]
    %v1258 = vld [vmem:[#allocation5 + $0x54] sm:$0xf]
    %v1259 = vld [vmem:[#allocation5 + $0x60] sm:$0xf]
    %v1260 = vld [vmem:[#allocation5 + $0x6c] sm:$0xf]
    %v1261 = vld [vmem:[#allocation5 + $0x78] sm:$0xf]
    %v1262 = vld [vmem:[#allocation5 + $0x84] sm:$0xf]
    %v1263 = vld [vmem:[#allocation5 + $0x90] sm:$0xf]
    %v1264 = vld [vmem:[#allocation5 + $0x9c] sm:$0xf]
    %v1265 = vld [vmem:[#allocation5 + $0xa8] sm:$0xf]
    %v1266 = vld [vmem:[#allocation5 + $0xb4] sm:$0xf]
    %v1267 = vld [vmem:[#allocation5 + $0x138] sm:$0xf]
    %v1268 = vld [vmem:[#allocation5 + $0x144] sm:$0xf]
    %v1269 = vld [vmem:[#allocation5 + $0x150] sm:$0xf]
    %v1270 = vld [vmem:[#allocation5 + $0x15c] sm:$0xf]
    %v1271 = vld [vmem:[#allocation7 + $0x1f0] ss:$0 sm:$0xff]
    %v1276 = vunpack.c.l.b16 %v1267
    %v1277 = vunpack.c.l.b16 %v1268
    %v1278 = vunpack.c.l.b16 %v1269
    %v1279 = vunpack.c.l.b16 %v1270
    %v1280 = vpack.c.b16 %v1277, %v1276
    %v1281 = vpack.c.b16 %v1279, %v1278
    %1284 = vmatprep.subr.bf16.mxu0 0
    %1285 = vmatpush1.bf16.msra.mxu0 %v1280
    %1286 = vmatprep.subr.bf16.mxu0 0
    %1287 = vmatpush1.bf16.msra.mxu0 %v1281
    %1288 = vmatprep.subr.bf16.mxu0 0
    %1289 = vmatpush1.bf16.msra.mxu0 0
    %1290 = vmatprep.subr.bf16.mxu0 0
    %1291 = vmatpush1.bf16.msra.mxu0 0
    %1292 = vmatprep.subr.bf16.mxu0 0
    %1293 = vmatpush1.bf16.msra.mxu0 0
    %1294 = vmatprep.subr.bf16.mxu0 0
    %1295 = vmatpush1.bf16.msra.mxu0 0
    %1296 = vmatprep.subr.bf16.mxu0 0
    %1297 = vmatpush1.bf16.msra.mxu0 0
    %1298 = vmatprep.subr.bf16.mxu0 0
    %1299 = vmatpush1.bf16.msra.mxu0 0
    %1300 = vmatprep.subr.bf16.mxu0 0
    %1301 = vmatpush1.bf16.msra.mxu0 0
    %1302 = vmatprep.subr.bf16.mxu0 0
    %1303 = vmatpush1.bf16.msra.mxu0 0
    %1304 = vmatprep.subr.bf16.mxu0 0
    %1305 = vmatpush1.bf16.msra.mxu0 0
    %1306 = vmatprep.subr.bf16.mxu0 0
    %1307 = vmatpush1.bf16.msra.mxu0 0
    %1308 = vmatprep.subr.bf16.mxu0 0
    %1309 = vmatpush1.bf16.msra.mxu0 0
    %1310 = vmatprep.subr.bf16.mxu0 0
    %1311 = vmatpush1.bf16.msra.mxu0 0
    %1312 = vmatprep.subr.bf16.mxu0 0
    %1313 = vmatpush1.bf16.msra.mxu0 0
    %1314 = vmatprep.subr.bf16.mxu0 0
    %1315 = vmatpush1.bf16.msra.mxu0 0
    %1316 = vmatprep.mubr.bf16.mxu0 0
    %1317 = vmatmul.mubr.bf16.gmra.mrb[0].mxu0 %v766
    %v1318 = vpop.f32.mrb[0].mxu0
    %v1319 = vadd.f32 %v1271, %v1318
    %v1320 = vpop.f32.mrb[0].mxu0
    %v1321 = vpop.f32.mrb[0].mxu0
    %v1322 = vpop.f32.mrb[0].mxu0
    %1323 = vdwg.mxu0
    %v1324 = vlaneseq
    %v1325 = vshrl.u32 %v1324, 7
    %v1326 = vsub.s32 0, %v1325
    %v1327 = vrot.slane %v1319, %v1326
    %v1328 = vlaneseq
    %v1329 = vshrl.u32 %v1328, 7
    %v1330 = vsub.s32 1, %v1329
    %v1331 = vrot.slane %v1319, %v1330
    %vm1332 = vcmask 1043456
    %v1333 = vsel %vm1332, %v1327, %v1331
    %v1346 = vunpack.c.l.b16 %v1255
    %v1347 = vunpack.c.l.b16 %v1256
    %v1348 = vunpack.c.l.b16 %v1257
    %v1349 = vunpack.c.l.b16 %v1258
    %v1350 = vunpack.c.l.b16 %v1259
    %v1351 = vunpack.c.l.b16 %v1260
    %v1352 = vunpack.c.l.b16 %v1261
    %v1353 = vunpack.c.l.b16 %v1262
    %v1354 = vunpack.c.l.b16 %v1263
    %v1355 = vunpack.c.l.b16 %v1264
    %v1356 = vunpack.c.l.b16 %v1265
    %v1357 = vunpack.c.l.b16 %v1266
    %v1358 = vpack.c.b16 %v1347, %v1346
    %v1359 = vpack.c.b16 %v1349, %v1348
    %v1360 = vpack.c.b16 %v1351, %v1350
    %v1361 = vpack.c.b16 %v1353, %v1352
    %v1362 = vpack.c.b16 %v1355, %v1354
    %v1363 = vpack.c.b16 %v1357, %v1356
    %vm1370 = vcmask 785408
    %v1372 = vsel %vm1370, %v1253, 0
    %v1375 = vsel %vm1370, %v1254, 0
    %1377 = vmatprep.subr.bf16.mxu0 0
    %1378 = vmatpush1.bf16.msra.mxu0 %v1358
    %1379 = vmatprep.subr.bf16.mxu0 0
    %1380 = vmatpush1.bf16.msra.mxu0 %v1359
    %1381 = vmatprep.subr.bf16.mxu0 0
    %1382 = vmatpush1.bf16.msra.mxu0 %v1360
    %1383 = vmatprep.subr.bf16.mxu0 0
    %1384 = vmatpush1.bf16.msra.mxu0 %v1361
    %1385 = vmatprep.subr.bf16.mxu0 0
    %1386 = vmatpush1.bf16.msra.mxu0 %v1362
    %1387 = vmatprep.subr.bf16.mxu0 0
    %1388 = vmatpush1.bf16.msra.mxu0 %v1363
    %1389 = vmatprep.subr.bf16.mxu0 0
    %1390 = vmatpush1.bf16.msra.mxu0 0
    %1391 = vmatprep.subr.bf16.mxu0 0
    %1392 = vmatpush1.bf16.msra.mxu0 0
    %1393 = vmatprep.subr.bf16.mxu0 0
    %1394 = vmatpush1.bf16.msra.mxu0 0
    %1395 = vmatprep.subr.bf16.mxu0 0
    %1396 = vmatpush1.bf16.msra.mxu0 0
    %1397 = vmatprep.subr.bf16.mxu0 0
    %1398 = vmatpush1.bf16.msra.mxu0 0
    %1399 = vmatprep.subr.bf16.mxu0 0
    %1400 = vmatpush1.bf16.msra.mxu0 0
    %1401 = vmatprep.subr.bf16.mxu0 0
    %1402 = vmatpush1.bf16.msra.mxu0 0
    %1403 = vmatprep.subr.bf16.mxu0 0
    %1404 = vmatpush1.bf16.msra.mxu0 0
    %1405 = vmatprep.subr.bf16.mxu0 0
    %1406 = vmatpush1.bf16.msra.mxu0 0
    %1407 = vmatprep.subr.bf16.mxu0 0
    %1408 = vmatpush1.bf16.msra.mxu0 0
    %1409 = vmatprep.mubr.bf16.mxu0 0
    %1410 = vmatmul.mubr.bf16.gmra.mrb[0].mxu0 %v1372
    %v1411 = vpop.f32.mrb[0].mxu0
    %v1412 = vadd.f32 %v1327, %v1411
    %v1413 = vpop.f32.mrb[0].mxu0
    %v1414 = vpop.f32.mrb[0].mxu0
    %v1415 = vadd.f32 %v1333, %v1414
    %v1416 = vpop.f32.mrb[0].mxu0
    %1417 = vmatprep.mubr.bf16.mxu0 0
    %1418 = vmatmul.mubr.bf16.gmra.mrb[0].mxu0 %v1375
    %v1419 = vpop.f32.mrb[0].mxu0
    %v1420 = vadd.f32 %v1331, %v1419
    %v1421 = vpop.f32.mrb[0].mxu0
    %v1422 = vpop.f32.mrb[0].mxu0
    %v1423 = vpop.f32.mrb[0].mxu0
    %1424 = vdwg.mxu0
    %v1425 = vsel %vm1249, %v1412, 0.0
    %vm1426 = vcmask 519168
    %v1427 = vsel %vm1426, %v1415, 0.0
    %v1428 = vadd.f32 %v1425, %v1427
    %v1429 = vrot.slane %v1428, 4
    %v1430 = vadd.f32 %v1428, %v1429
    %v1431 = vrot.slane %v1430, 2
    %v1432 = vadd.f32 %v1430, %v1431
    %v1433 = vrot.slane %v1432, 1
    %v1434 = vadd.f32 %v1432, %v1433
    %v1435 = vmul.f32 %v1412, %v1412
    %v1436 = vmul.f32 %v1415, %v1415
    %v1437 = vsel %vm1249, %v1435, 0.0
    %v1438 = vsel %vm1426, %v1436, 0.0
    %v1439 = vadd.f32 %v1437, %v1438
    %v1440 = vrot.slane %v1439, 4
    %v1441 = vadd.f32 %v1439, %v1440
    %v1442 = vrot.slane %v1441, 2
    %v1443 = vadd.f32 %v1441, %v1442
    %v1444 = vrot.slane %v1443, 1
    %v1445 = vadd.f32 %v1443, %v1444
    %v1448 = vrot.slane %v1415, 4
    %v1449 = vrot.slane %v1420, 4
    %v1450 = vsel %vm1332, %v1448, %v1449
    %v1453 = vsel %vm1249, %v1450, 0.0
    %v1454 = vsel %vm1426, %v1449, 0.0
    %v1455 = vadd.f32 %v1453, %v1454
    %v1456 = vrot.slane %v1455, 4
    %v1457 = vadd.f32 %v1455, %v1456
    %v1458 = vrot.slane %v1457, 2
    %v1459 = vadd.f32 %v1457, %v1458
    %v1460 = vrot.slane %v1459, 1
    %v1461 = vadd.f32 %v1459, %v1460
    %v1462 = vmul.f32 %v1420, %v1420
    %v1465 = vrot.slane %v1436, 4
    %v1466 = vrot.slane %v1462, 4
    %v1467 = vsel %vm1332, %v1465, %v1466
    %v1470 = vsel %vm1249, %v1467, 0.0
    %v1471 = vsel %vm1426, %v1466, 0.0
    %v1472 = vadd.f32 %v1470, %v1471
    %v1473 = vrot.slane %v1472, 4
    %v1474 = vadd.f32 %v1472, %v1473
    %v1475 = vrot.slane %v1474, 2
    %v1476 = vadd.f32 %v1474, %v1475
    %v1477 = vrot.slane %v1476, 1
    %v1478 = vadd.f32 %v1476, %v1477
    %v1479 = vsel %vm914, %v1434, %v1461
    %v1480 = vsel %vm735, %v1479, %v1445
    %v1481 = vsel %vm917, %v1480, %v1478
    %v1482 = vld [vmem:[#allocation7 + $0x220] sm:$0xff]
    %v1483 = vld [vmem:[#allocation7 + $0x230] sm:$0xff]
    %v1484 = vld [vmem:[#allocation7 + $0x240] sm:$0xff]
    %v1485 = vld [vmem:[#allocation7 + $0x250] sm:$0xff]
    %v1486 = vld [vmem:[#allocation7 + $0x260] sm:$0xff]
    %v1487 = vld [vmem:[#allocation7 + $0x270] sm:$0xff]
    %v1488 = vld [vmem:[#allocation7 + $0x280] sm:$0xff]
    %v1489 = vld [vmem:[#allocation7 + $0x290] sm:$0xff]
    %v1491 = vsel %vm1249, %v1481, 0
    %1493 = vmatprep.subr.mxu0 0.0
    %1494 = vmatpush1.msra.mxu0 %v1482
    %1495 = vmatprep.subr.mxu0 0.0
    %1496 = vmatpush1.msra.mxu0 %v1483
    %1497 = vmatprep.subr.mxu0 0.0
    %1498 = vmatpush1.msra.mxu0 %v1484
    %1499 = vmatprep.subr.mxu0 0.0
    %1500 = vmatpush1.msra.mxu0 %v1485
    %1501 = vmatprep.subr.mxu0 0.0
    %1502 = vmatpush1.msra.mxu0 %v1486
    %1503 = vmatprep.subr.mxu0 0.0
    %1504 = vmatpush1.msra.mxu0 %v1487
    %1505 = vmatprep.subr.mxu0 0.0
    %1506 = vmatpush1.msra.mxu0 %v1488
    %1507 = vmatprep.subr.mxu0 0.0
    %1508 = vmatpush1.msra.mxu0 %v1489
    %1509 = vmatprep.subr.mxu0 0.0
    %1510 = vmatpush1.msra.mxu0 0.0
    %1511 = vmatprep.subr.mxu0 0.0
    %1512 = vmatpush1.msra.mxu0 0.0
    %1513 = vmatprep.subr.mxu0 0.0
    %1514 = vmatpush1.msra.mxu0 0.0
    %1515 = vmatprep.subr.mxu0 0.0
    %1516 = vmatpush1.msra.mxu0 0.0
    %1517 = vmatprep.subr.mxu0 0.0
    %1518 = vmatpush1.msra.mxu0 0.0
    %1519 = vmatprep.subr.mxu0 0.0
    %1520 = vmatpush1.msra.mxu0 0.0
    %1521 = vmatprep.subr.mxu0 0.0
    %1522 = vmatpush1.msra.mxu0 0.0
    %1523 = vmatprep.subr.mxu0 0.0
    %1524 = vmatpush1.msra.mxu0 0.0
    %1525 = vmatprep.subr.mxu0 0.0
    %1526 = vmatpush1.msra.mxu0 0.0
    %1527 = vmatprep.subr.mxu0 0.0
    %1528 = vmatpush1.msra.mxu0 0.0
    %1529 = vmatprep.subr.mxu0 0.0
    %1530 = vmatpush1.msra.mxu0 0.0
    %1531 = vmatprep.subr.mxu0 0.0
    %1532 = vmatpush1.msra.mxu0 0.0
    %1533 = vmatprep.subr.mxu0 0.0
    %1534 = vmatpush1.msra.mxu0 0.0
    %1535 = vmatprep.subr.mxu0 0.0
    %1536 = vmatpush1.msra.mxu0 0.0
    %1537 = vmatprep.subr.mxu0 0.0
    %1538 = vmatpush1.msra.mxu0 0.0
    %1539 = vmatprep.subr.mxu0 0.0
    %1540 = vmatpush1.msra.mxu0 0.0
    %1541 = vmatprep.subr.mxu0 0.0
    %1542 = vmatpush1.msra.mxu0 0.0
    %1543 = vmatprep.subr.mxu0 0.0
    %1544 = vmatpush1.msra.mxu0 0.0
    %1545 = vmatprep.subr.mxu0 0.0
    %1546 = vmatpush1.msra.mxu0 0.0
    %1547 = vmatprep.subr.mxu0 0.0
    %1548 = vmatpush1.msra.mxu0 0.0
    %1549 = vmatprep.subr.mxu0 0.0
    %1550 = vmatpush1.msra.mxu0 0.0
    %1551 = vmatprep.subr.mxu0 0.0
    %1552 = vmatpush1.msra.mxu0 0.0
    %1553 = vmatprep.subr.mxu0 0.0
    %1554 = vmatpush1.msra.mxu0 0.0
    %1555 = vmatprep.subr.mxu0 0.0
    %1556 = vmatpush1.msra.mxu0 0.0
    %1557 = vmatprep.mubr.f32.mxu0 0.0
    %1558 = vmatmul.mubr.f32.gmra.mrb[0].mxu0 %v1491
    %v1559 = vpop.f32.mrb[0].mxu0
    %v1560 = vadd.f32 0.0, %v1559
    %v1561 = vpop.f32.mrb[0].mxu0
    %1562 = vdwg.mxu0
    %v1563 = vmul.f32 %v1560, 0.041666668
    %v1564 = vmul.f32 %v1563, %v1563
    %v1566 = vrot.slane %v1564, 6
    %v1568 = vsub.f32 %v1563, %v1566
    %v1569 = vmax.f32 %v1568, 0.0
    %v1570 = vlaneseq
    %v1571 = vshrl.u32 %v1570, 7
    %v1572 = vsub.s32 0, %v1571
    %v1573 = vrot.slane %v1563, %v1572
    %v1574 = vlaneseq
    %v1575 = vshrl.u32 %v1574, 7
    %v1576 = vsub.s32 1, %v1575
    %v1577 = vrot.slane %v1563, %v1576
    %v1578 = vsel %vm1332, %v1573, %v1577
    %v1579 = vadd.f32 %v1569, 1e-05
    %v1580 = vrsqrt.pop %v1579
    %v1581 = vlaneseq
    %v1582 = vshrl.u32 %v1581, 7
    %v1583 = vsub.s32 2, %v1582
    %v1584 = vrot.slane %v1580, %v1583
    %v1585 = vlaneseq
    %v1586 = vshrl.u32 %v1585, 7
    %v1587 = vsub.s32 3, %v1586
    %v1588 = vrot.slane %v1580, %v1587
    %v1589 = vsel %vm1332, %v1584, %v1588
    %v1590 = vsub.f32 %v1412, %v1573
    %v1591 = vsub.f32 %v1415, %v1578
    %v1592 = vsub.f32 %v1420, %v1577
    %v1593 = vmul.f32 %v1590, %v1584
    %v1594 = vmul.f32 %v1591, %v1589
    %v1595 = vmul.f32 %v1592, %v1588
    %v1596 = vld [vmem:[#allocation7 + $0x200] ss:$0 sm:$0xff]
    %v1597 = vmul.f32 %v1593, %v1596
    %v1598 = vmul.f32 %v1594, %v1596
    %v1599 = vmul.f32 %v1595, %v1596
    %v1600 = vld [vmem:[#allocation7 + $0x210] ss:$0 sm:$0xff]
    %v1601 = vadd.f32 %v1597, %v1600
    %v1602 = vadd.f32 %v1598, %v1600
    %v1603 = vadd.f32 %v1599, %v1600
    %v1604 = vsub.f32 0.0, %v1601
    %v1605 = vsub.f32 0.0, %v1602
    %v1606 = vsub.f32 0.0, %v1603
    %v1607 = vmul.f32 %v1604, 1.442695
    %v1608 = vpow.pop %v1607
    %v1609 = vmul.f32 %v1605, 1.442695
    %v1610 = vpow.pop %v1609
    %v1611 = vmul.f32 %v1606, 1.442695
    %v1612 = vpow.pop %v1611
    %v1613 = vadd.f32 %v1608, 1.0
    %v1614 = vadd.f32 %v1610, 1.0
    %v1615 = vadd.f32 %v1612, 1.0
    %v1616 = vrcp.pop %v1613
    %v1617 = vrcp.pop %v1614
    %v1618 = vrcp.pop %v1615
    %v1619 = vmul.f32 %v1601, %v1616
    %v1620 = vmul.f32 %v1602, %v1617
    %v1621 = vmul.f32 %v1603, %v1618
    %v1622 = vld [vmem:[#allocation5 + $0x288] sm:$0xf]
    %v1623 = vld [vmem:[#allocation5 + $0x294] sm:$0xf]
    %v1624 = vld [vmem:[#allocation5 + $0x2a0] sm:$0xf]
    %v1625 = vld [vmem:[#allocation5 + $0x2ac] sm:$0x7]
    %v1626 = vpack.c.bf16 %v1620, %v1619
    %v1627 = vpack.c.bf16 %v1621, %v1621
    %v1632 = vunpack.c.l.b16 %v1622
    %v1633 = vunpack.c.l.b16 %v1623
    %v1634 = vunpack.c.l.b16 %v1624
    %v1635 = vunpack.c.l.b16 %v1625
    %v1636 = vpack.c.b16 %v1633, %v1632
    %v1637 = vpack.c.b16 %v1635, %v1634
    %vm1638 = vcmask 195584
    %v1640 = vsel %vm1638, %v1636, 0
    %v1643 = vsel %vm1638, %v1637, 0
    %v1646 = vsel %vm1332, %v1627, 0
    %1648 = vmatprep.subr.bf16.mxu0 0
    %1649 = vmatpush1.bf16.msra.mxu0 %v1626
    %1650 = vmatprep.subr.bf16.mxu0 0
    %1651 = vmatpush1.bf16.msra.mxu0 %v1646
    %1652 = vmatprep.subr.bf16.mxu0 0
    %1653 = vmatpush1.bf16.msra.mxu0 0
    %1654 = vmatprep.subr.bf16.mxu0 0
    %1655 = vmatpush1.bf16.msra.mxu0 0
    %1656 = vmatprep.subr.bf16.mxu0 0
    %1657 = vmatpush1.bf16.msra.mxu0 0
    %1658 = vmatprep.subr.bf16.mxu0 0
    %1659 = vmatpush1.bf16.msra.mxu0 0
    %1660 = vmatprep.subr.bf16.mxu0 0
    %1661 = vmatpush1.bf16.msra.mxu0 0
    %1662 = vmatprep.subr.bf16.mxu0 0
    %1663 = vmatpush1.bf16.msra.mxu0 0
    %1664 = vmatprep.subr.bf16.mxu0 0
    %1665 = vmatpush1.bf16.msra.mxu0 0
    %1666 = vmatprep.subr.bf16.mxu0 0
    %1667 = vmatpush1.bf16.msra.mxu0 0
    %1668 = vmatprep.subr.bf16.mxu0 0
    %1669 = vmatpush1.bf16.msra.mxu0 0
    %1670 = vmatprep.subr.bf16.mxu0 0
    %1671 = vmatpush1.bf16.msra.mxu0 0
    %1672 = vmatprep.subr.bf16.mxu0 0
    %1673 = vmatpush1.bf16.msra.mxu0 0
    %1674 = vmatprep.subr.bf16.mxu0 0
    %1675 = vmatpush1.bf16.msra.mxu0 0
    %1676 = vmatprep.subr.bf16.mxu0 0
    %1677 = vmatpush1.bf16.msra.mxu0 0
    %1678 = vmatprep.subr.bf16.mxu0 0
    %1679 = vmatpush1.bf16.msra.mxu0 0
    %1680 = vmatprep.mubr.bf16.mxu0 0
    %1681 = vmatmul.mubr.bf16.gmra.mrb[0].mxu0 %v1640
    %v1682 = vpop.f32.mrb[0].mxu0
    %v1683 = vadd.f32 0.0, %v1682
    %v1684 = vpop.f32.mrb[0].mxu0
    %v1685 = vpop.f32.mrb[0].mxu0
    %v1686 = vadd.f32 0.0, %v1685
    %v1687 = vpop.f32.mrb[0].mxu0
    %1688 = vmatprep.mubr.bf16.mxu0 0
    %1689 = vmatmul.mubr.bf16.gmra.mrb[0].mxu0 %v1643
    %v1690 = vpop.f32.mrb[0].mxu0
    %v1691 = vadd.f32 0.0, %v1690
    %v1692 = vpop.f32.mrb[0].mxu0
    %v1693 = vpop.f32.mrb[0].mxu0
    %v1694 = vadd.f32 0.0, %v1693
    %v1695 = vpop.f32.mrb[0].mxu0
    %1696 = vdwg.mxu0
    %v1699 = vrot.slane %v1686, 2
    %v1700 = vrot.slane %v1691, 2
    %v1701 = vsel %vm649, %v1699, %v1700
    %1702 = vrot.lane.b32.xlu0 %v1701, 64
    %v1703 = vpop.permute.xlu0 %1702
    %1704 = vrot.lane.b32.xlu0 %v1700, 64
    %v1705 = vpop.permute.xlu0 %1704
    %v1709 = vrot.slane %v1691, 4
    %v1710 = vrot.slane %v1694, 4
    %v1711 = vsel %vm1332, %v1709, %v1710
    %v1714 = vsel %vm1249, %v1683, %v1703
    %v1715 = vsel %vm1249, %v1686, %v1705
    %v1716 = vpack.c.bf16 %v1715, %v1714
    %v1717 = vpack.c.bf16 %v1710, %v1711
    %v1718 = vld [vmem:[#allocation5 + $0x168] sm:$0xf]
    %v1719 = vld [vmem:[#allocation5 + $0x174] sm:$0xf]
    %v1720 = vld [vmem:[#allocation5 + $0x180] sm:$0xf]
    %v1721 = vld [vmem:[#allocation5 + $0x18c] sm:$0xf]
    %v1722 = vld [vmem:[#allocation5 + $0x198] sm:$0xf]
    %v1723 = vld [vmem:[#allocation5 + $0x1a4] sm:$0xf]
    %v1724 = vld [vmem:[#allocation5 + $0x1b0] sm:$0xf]
    %v1725 = vld [vmem:[#allocation5 + $0x1bc] sm:$0xf]
    %v1726 = vld [vmem:[#allocation5 + $0x1c8] sm:$0xf]
    %v1727 = vld [vmem:[#allocation5 + $0x1d4] sm:$0xf]
    %v1728 = vld [vmem:[#allocation5 + $0x1e0] sm:$0xf]
    %v1729 = vld [vmem:[#allocation5 + $0x1ec] sm:$0xf]
    %v1730 = vld [vmem:[#allocation5 + $0x1f8] sm:$0xf]
    %v1731 = vld [vmem:[#allocation5 + $0x204] sm:$0xf]
    %v1732 = vld [vmem:[#allocation5 + $0x210] sm:$0xf]
    %v1733 = vld [vmem:[#allocation5 + $0x21c] sm:$0xf]
    %v1734 = vld [vmem:[#allocation5 + $0x228] sm:$0xf]
    %v1735 = vld [vmem:[#allocation5 + $0x234] sm:$0xf]
    %v1736 = vld [vmem:[#allocation5 + $0x240] sm:$0xf]
    %v1737 = vld [vmem:[#allocation5 + $0x24c] sm:$0xf]
    %v1738 = vld [vmem:[#allocation5 + $0x258] sm:$0xf]
    %v1739 = vld [vmem:[#allocation5 + $0x264] sm:$0xf]
    %v1740 = vld [vmem:[#allocation5 + $0x270] sm:$0xf]
    %v1741 = vld [vmem:[#allocation5 + $0x27c] sm:$0xf]
    %v1742 = vld [vmem:[#allocation5 + $0x2b8] sm:$0xf]
    %v1743 = vld [vmem:[#allocation5 + $0x2c4] sm:$0xf]
    %v1744 = vld [vmem:[#allocation5 + $0x2d0] sm:$0xf]
    %v1745 = vld [vmem:[#allocation5 + $0x2dc] sm:$0xf]
    %v1746 = vld [vmem:[#allocation7 + $0x2a0] ss:$0 sm:$0xff]
    %v1751 = vunpack.c.l.b16 %v1742
    %v1752 = vunpack.c.l.b16 %v1743
    %v1753 = vunpack.c.l.b16 %v1744
    %v1754 = vunpack.c.l.b16 %v1745
    %v1755 = vpack.c.b16 %v1752, %v1751
    %v1756 = vpack.c.b16 %v1754, %v1753
    %1759 = vmatprep.subr.bf16.mxu0 0
    %1760 = vmatpush1.bf16.msra.mxu0 %v1755
    %1761 = vmatprep.subr.bf16.mxu0 0
    %1762 = vmatpush1.bf16.msra.mxu0 %v1756
    %1763 = vmatprep.subr.bf16.mxu0 0
    %1764 = vmatpush1.bf16.msra.mxu0 0
    %1765 = vmatprep.subr.bf16.mxu0 0
    %1766 = vmatpush1.bf16.msra.mxu0 0
    %1767 = vmatprep.subr.bf16.mxu0 0
    %1768 = vmatpush1.bf16.msra.mxu0 0
    %1769 = vmatprep.subr.bf16.mxu0 0
    %1770 = vmatpush1.bf16.msra.mxu0 0
    %1771 = vmatprep.subr.bf16.mxu0 0
    %1772 = vmatpush1.bf16.msra.mxu0 0
    %1773 = vmatprep.subr.bf16.mxu0 0
    %1774 = vmatpush1.bf16.msra.mxu0 0
    %1775 = vmatprep.subr.bf16.mxu0 0
    %1776 = vmatpush1.bf16.msra.mxu0 0
    %1777 = vmatprep.subr.bf16.mxu0 0
    %1778 = vmatpush1.bf16.msra.mxu0 0
    %1779 = vmatprep.subr.bf16.mxu0 0
    %1780 = vmatpush1.bf16.msra.mxu0 0
    %1781 = vmatprep.subr.bf16.mxu0 0
    %1782 = vmatpush1.bf16.msra.mxu0 0
    %1783 = vmatprep.subr.bf16.mxu0 0
    %1784 = vmatpush1.bf16.msra.mxu0 0
    %1785 = vmatprep.subr.bf16.mxu0 0
    %1786 = vmatpush1.bf16.msra.mxu0 0
    %1787 = vmatprep.subr.bf16.mxu0 0
    %1788 = vmatpush1.bf16.msra.mxu0 0
    %1789 = vmatprep.subr.bf16.mxu0 0
    %1790 = vmatpush1.bf16.msra.mxu0 0
    %1791 = vmatprep.mubr.bf16.mxu0 0
    %1792 = vmatmul.mubr.bf16.gmra.mrb[0].mxu0 %v766
    %v1793 = vpop.f32.mrb[0].mxu0
    %v1794 = vadd.f32 %v1746, %v1793
    %v1795 = vpop.f32.mrb[0].mxu0
    %v1796 = vpop.f32.mrb[0].mxu0
    %v1797 = vpop.f32.mrb[0].mxu0
    %1798 = vdwg.mxu0
    %v1799 = vlaneseq
    %v1800 = vshrl.u32 %v1799, 7
    %v1801 = vsub.s32 0, %v1800
    %v1802 = vrot.slane %v1794, %v1801
    %v1803 = vlaneseq
    %v1804 = vshrl.u32 %v1803, 7
    %v1805 = vsub.s32 1, %v1804
    %v1806 = vrot.slane %v1794, %v1805
    %vm1807 = vcmask 1044480
    %v1808 = vsel %vm1807, %v1802, %v1806
    %v1833 = vunpack.c.l.b16 %v1718
    %v1834 = vunpack.c.l.b16 %v1719
    %v1835 = vunpack.c.l.b16 %v1720
    %v1836 = vunpack.c.l.b16 %v1721
    %v1837 = vunpack.c.l.b16 %v1722
    %v1838 = vunpack.c.l.b16 %v1723
    %v1839 = vunpack.c.l.b16 %v1724
    %v1840 = vunpack.c.l.b16 %v1725
    %v1841 = vunpack.c.l.b16 %v1726
    %v1842 = vunpack.c.l.b16 %v1727
    %v1843 = vunpack.c.l.b16 %v1728
    %v1844 = vunpack.c.l.b16 %v1729
    %v1845 = vunpack.c.l.b16 %v1730
    %v1846 = vunpack.c.l.b16 %v1731
    %v1847 = vunpack.c.l.b16 %v1732
    %v1848 = vunpack.c.l.b16 %v1733
    %v1849 = vunpack.c.l.b16 %v1734
    %v1850 = vunpack.c.l.b16 %v1735
    %v1851 = vunpack.c.l.b16 %v1736
    %v1852 = vunpack.c.l.b16 %v1737
    %v1853 = vunpack.c.l.b16 %v1738
    %v1854 = vunpack.c.l.b16 %v1739
    %v1855 = vunpack.c.l.b16 %v1740
    %v1856 = vunpack.c.l.b16 %v1741
    %v1857 = vpack.c.b16 %v1834, %v1833
    %v1858 = vpack.c.b16 %v1836, %v1835
    %v1859 = vpack.c.b16 %v1838, %v1837
    %v1860 = vpack.c.b16 %v1840, %v1839
    %v1861 = vpack.c.b16 %v1842, %v1841
    %v1862 = vpack.c.b16 %v1844, %v1843
    %v1863 = vpack.c.b16 %v1846, %v1845
    %v1864 = vpack.c.b16 %v1848, %v1847
    %v1865 = vpack.c.b16 %v1850, %v1849
    %v1866 = vpack.c.b16 %v1852, %v1851
    %v1867 = vpack.c.b16 %v1854, %v1853
    %v1868 = vpack.c.b16 %v1856, %v1855
    %v1882 = vsel %vm1249, %v1717, 0
    %1884 = vmatprep.subr.bf16.mxu0 0
    %1885 = vmatpush1.bf16.msra.mxu0 %v1857
    %1886 = vmatprep.subr.bf16.mxu0 0
    %1887 = vmatpush1.bf16.msra.mxu0 %v1858
    %1888 = vmatprep.subr.bf16.mxu0 0
    %1889 = vmatpush1.bf16.msra.mxu0 %v1859
    %1890 = vmatprep.subr.bf16.mxu0 0
    %1891 = vmatpush1.bf16.msra.mxu0 %v1860
    %1892 = vmatprep.subr.bf16.mxu0 0
    %1893 = vmatpush1.bf16.msra.mxu0 %v1861
    %1894 = vmatprep.subr.bf16.mxu0 0
    %1895 = vmatpush1.bf16.msra.mxu0 %v1862
    %1896 = vmatprep.subr.bf16.mxu0 0
    %1897 = vmatpush1.bf16.msra.mxu0 %v1863
    %1898 = vmatprep.subr.bf16.mxu0 0
    %1899 = vmatpush1.bf16.msra.mxu0 %v1864
    %1900 = vmatprep.subr.bf16.mxu0 0
    %1901 = vmatpush1.bf16.msra.mxu0 %v1865
    %1902 = vmatprep.subr.bf16.mxu0 0
    %1903 = vmatpush1.bf16.msra.mxu0 %v1866
    %1904 = vmatprep.subr.bf16.mxu0 0
    %1905 = vmatpush1.bf16.msra.mxu0 %v1867
    %1906 = vmatprep.subr.bf16.mxu0 0
    %1907 = vmatpush1.bf16.msra.mxu0 %v1868
    %1908 = vmatprep.subr.bf16.mxu0 0
    %1909 = vmatpush1.bf16.msra.mxu0 0
    %1910 = vmatprep.subr.bf16.mxu0 0
    %1911 = vmatpush1.bf16.msra.mxu0 0
    %1912 = vmatprep.subr.bf16.mxu0 0
    %1913 = vmatpush1.bf16.msra.mxu0 0
    %1914 = vmatprep.subr.bf16.mxu0 0
    %1915 = vmatpush1.bf16.msra.mxu0 0
    %1916 = vmatprep.mubr.bf16.mxu0 %v1882
    %1917 = vmatmul.mubr.bf16.gmra.mrb[0].mxu0 %v1716
    %v1918 = vpop.f32.mrb[0].mxu0
    %v1919 = vadd.f32 %v1808, %v1918
    %v1920 = vpop.f32.mrb[0].mxu0
    %v1921 = vpop.f32.mrb[0].mxu0
    %v1922 = vadd.f32 %v1806, %v1921
    %v1923 = vpop.f32.mrb[0].mxu0
    %1924 = vdwg.mxu0
    %v1925 = vsel %vm1807, %v1919, 0.0
    %v1926 = vrot.slane %v1925, 4
    %v1927 = vadd.f32 %v1925, %v1926
    %v1928 = vrot.slane %v1927, 2
    %v1929 = vadd.f32 %v1927, %v1928
    %v1930 = vrot.slane %v1929, 1
    %v1931 = vadd.f32 %v1929, %v1930
    %v1932 = vmul.f32 %v1919, %v1919
    %v1933 = vsel %vm1807, %v1932, 0.0
    %v1934 = vrot.slane %v1933, 4
    %v1935 = vadd.f32 %v1933, %v1934
    %v1936 = vrot.slane %v1935, 2
    %v1937 = vadd.f32 %v1935, %v1936
    %v1938 = vrot.slane %v1937, 1
    %v1939 = vadd.f32 %v1937, %v1938
    %v1942 = vrot.slane %v1919, 5
    %v1943 = vrot.slane %v1922, 5
    %v1944 = vsel %vm917, %v1942, %v1943
    %v1946 = vsel %vm1807, %v1944, 0.0
    %v1947 = vrot.slane %v1946, 4
    %v1948 = vadd.f32 %v1946, %v1947
    %v1949 = vrot.slane %v1948, 2
    %v1950 = vadd.f32 %v1948, %v1949
    %v1951 = vrot.slane %v1950, 1
    %v1952 = vadd.f32 %v1950, %v1951
    %v1953 = vmul.f32 %v1922, %v1922
    %v1956 = vrot.slane %v1932, 5
    %v1957 = vrot.slane %v1953, 5
    %v1958 = vsel %vm917, %v1956, %v1957
    %v1960 = vsel %vm1807, %v1958, 0.0
    %v1961 = vrot.slane %v1960, 4
    %v1962 = vadd.f32 %v1960, %v1961
    %v1963 = vrot.slane %v1962, 2
    %v1964 = vadd.f32 %v1962, %v1963
    %v1965 = vrot.slane %v1964, 1
    %v1966 = vadd.f32 %v1964, %v1965
    %v1967 = vsel %vm914, %v1931, %v1952
    %v1968 = vsel %vm735, %v1967, %v1939
    %v1969 = vsel %vm917, %v1968, %v1966
    %v1970 = vld [vmem:[#allocation7 + $0x2d0] sm:$0xff]
    %v1971 = vld [vmem:[#allocation7 + $0x2e0] sm:$0xff]
    %v1972 = vld [vmem:[#allocation7 + $0x2f0] sm:$0xff]
    %v1973 = vld [vmem:[#allocation7 + $0x300] sm:$0xff]
    %v1974 = vld [vmem:[#allocation7 + $0x310] sm:$0xff]
    %v1975 = vld [vmem:[#allocation7 + $0x320] sm:$0xff]
    %v1976 = vld [vmem:[#allocation7 + $0x330] sm:$0xff]
    %v1977 = vld [vmem:[#allocation7 + $0x340] sm:$0xff]
    %v1978 = vld [vmem:[#allocation7 + $0x350] sm:$0xff]
    %v1979 = vld [vmem:[#allocation7 + $0x360] sm:$0xff]
    %v1980 = vld [vmem:[#allocation7 + $0x370] sm:$0xff]
    %v1981 = vld [vmem:[#allocation7 + $0x380] sm:$0xff]
    %v1982 = vld [vmem:[#allocation7 + $0x390] sm:$0xff]
    %v1983 = vld [vmem:[#allocation7 + $0x3a0] sm:$0xff]
    %v1984 = vld [vmem:[#allocation7 + $0x3b0] sm:$0xff]
    %v1985 = vld [vmem:[#allocation7 + $0x3c0] sm:$0xff]
    %1986 = vmatprep.subr.mxu0 0.0
    %1987 = vmatpush1.msra.mxu0 %v1970
    %1988 = vmatprep.subr.mxu0 0.0
    %1989 = vmatpush1.msra.mxu0 %v1971
    %1990 = vmatprep.subr.mxu0 0.0
    %1991 = vmatpush1.msra.mxu0 %v1972
    %1992 = vmatprep.subr.mxu0 0.0
    %1993 = vmatpush1.msra.mxu0 %v1973
    %1994 = vmatprep.subr.mxu0 0.0
    %1995 = vmatpush1.msra.mxu0 %v1974
    %1996 = vmatprep.subr.mxu0 0.0
    %1997 = vmatpush1.msra.mxu0 %v1975
    %1998 = vmatprep.subr.mxu0 0.0
    %1999 = vmatpush1.msra.mxu0 %v1976
    %2000 = vmatprep.subr.mxu0 0.0
    %2001 = vmatpush1.msra.mxu0 %v1977
    %2002 = vmatprep.subr.mxu0 0.0
    %2003 = vmatpush1.msra.mxu0 %v1978
    %2004 = vmatprep.subr.mxu0 0.0
    %2005 = vmatpush1.msra.mxu0 %v1979
    %2006 = vmatprep.subr.mxu0 0.0
    %2007 = vmatpush1.msra.mxu0 %v1980
    %2008 = vmatprep.subr.mxu0 0.0
    %2009 = vmatpush1.msra.mxu0 %v1981
    %2010 = vmatprep.subr.mxu0 0.0
    %2011 = vmatpush1.msra.mxu0 %v1982
    %2012 = vmatprep.subr.mxu0 0.0
    %2013 = vmatpush1.msra.mxu0 %v1983
    %2014 = vmatprep.subr.mxu0 0.0
    %2015 = vmatpush1.msra.mxu0 %v1984
    %2016 = vmatprep.subr.mxu0 0.0
    %2017 = vmatpush1.msra.mxu0 %v1985
    %2018 = vmatprep.subr.mxu0 0.0
    %2019 = vmatpush1.msra.mxu0 0.0
    %2020 = vmatprep.subr.mxu0 0.0
    %2021 = vmatpush1.msra.mxu0 0.0
    %2022 = vmatprep.subr.mxu0 0.0
    %2023 = vmatpush1.msra.mxu0 0.0
    %2024 = vmatprep.subr.mxu0 0.0
    %2025 = vmatpush1.msra.mxu0 0.0
    %2026 = vmatprep.subr.mxu0 0.0
    %2027 = vmatpush1.msra.mxu0 0.0
    %2028 = vmatprep.subr.mxu0 0.0
    %2029 = vmatpush1.msra.mxu0 0.0
    %2030 = vmatprep.subr.mxu0 0.0
    %2031 = vmatpush1.msra.mxu0 0.0
    %2032 = vmatprep.subr.mxu0 0.0
    %2033 = vmatpush1.msra.mxu0 0.0
    %2034 = vmatprep.subr.mxu0 0.0
    %2035 = vmatpush1.msra.mxu0 0.0
    %2036 = vmatprep.subr.mxu0 0.0
    %2037 = vmatpush1.msra.mxu0 0.0
    %2038 = vmatprep.subr.mxu0 0.0
    %2039 = vmatpush1.msra.mxu0 0.0
    %2040 = vmatprep.subr.mxu0 0.0
    %2041 = vmatpush1.msra.mxu0 0.0
    %2042 = vmatprep.subr.mxu0 0.0
    %2043 = vmatpush1.msra.mxu0 0.0
    %2044 = vmatprep.subr.mxu0 0.0
    %2045 = vmatpush1.msra.mxu0 0.0
    %2046 = vmatprep.subr.mxu0 0.0
    %2047 = vmatpush1.msra.mxu0 0.0
    %2048 = vmatprep.subr.mxu0 0.0
    %2049 = vmatpush1.msra.mxu0 0.0
    %2050 = vmatprep.mubr.f32.mxu0 0.0
    %2051 = vmatmul.mubr.f32.gmra.mrb[0].mxu0 %v1969
    %v2052 = vpop.f32.mrb[0].mxu0
    %v2053 = vadd.f32 0.0, %v2052
    %v2054 = vpop.f32.mrb[0].mxu0
    %2055 = vdwg.mxu0
    %v2056 = vmul.f32 %v2053, 0.05
    %v2057 = vmul.f32 %v2056, %v2056
    %v2059 = vrot.slane %v2057, 6
    %v2061 = vsub.f32 %v2056, %v2059
    %v2062 = vmax.f32 %v2061, 0.0
    %v2063 = vlaneseq
    %v2064 = vshrl.u32 %v2063, 7
    %v2065 = vsub.s32 0, %v2064
    %v2066 = vrot.slane %v2056, %v2065
    %v2067 = vlaneseq
    %v2068 = vshrl.u32 %v2067, 7
    %v2069 = vsub.s32 1, %v2068
    %v2070 = vrot.slane %v2056, %v2069
    %v2071 = vsel %vm1807, %v2066, %v2070
    %v2072 = vadd.f32 %v2062, 1e-05
    %v2073 = vrsqrt.pop %v2072
    %v2074 = vlaneseq
    %v2075 = vshrl.u32 %v2074, 7
    %v2076 = vsub.s32 2, %v2075
    %v2077 = vrot.slane %v2073, %v2076
    %v2078 = vlaneseq
    %v2079 = vshrl.u32 %v2078, 7
    %v2080 = vsub.s32 3, %v2079
    %v2081 = vrot.slane %v2073, %v2080
    %v2082 = vsel %vm1807, %v2077, %v2081
    %v2083 = vsub.f32 %v1919, %v2071
    %v2084 = vsub.f32 %v1922, %v2070
    %v2085 = vmul.f32 %v2083, %v2082
    %v2086 = vmul.f32 %v2084, %v2081
    %v2087 = vld [vmem:[#allocation7 + $0x2b0] ss:$0 sm:$0xff]
    %v2088 = vmul.f32 %v2085, %v2087
    %v2089 = vmul.f32 %v2086, %v2087
    %v2090 = vld [vmem:[#allocation7 + $0x2c0] ss:$0 sm:$0xff]
    %v2091 = vadd.f32 %v2088, %v2090
    %v2092 = vadd.f32 %v2089, %v2090
    %v2093 = vsub.f32 0.0, %v2091
    %v2094 = vsub.f32 0.0, %v2092
    %v2095 = vmul.f32 %v2093, 1.442695
    %v2096 = vpow.pop %v2095
    %v2097 = vmul.f32 %v2094, 1.442695
    %v2098 = vpow.pop %v2097
    %v2099 = vadd.f32 %v2096, 1.0
    %v2100 = vadd.f32 %v2098, 1.0
    %v2101 = vrcp.pop %v2099
    %v2102 = vrcp.pop %v2100
    %v2103 = vmul.f32 %v2091, %v2101
    %v2104 = vmul.f32 %v2092, %v2102
    %v2105 = vld [vmem:[#allocation5 + $0x528] sm:$0xf]
    %v2106 = vld [vmem:[#allocation5 + $0x534] sm:$0x3]
    %v2107 = vpack.c.bf16 %v2104, %v2103
    %v2110 = vunpack.c.l.b16 %v2105
    %v2111 = vunpack.c.l.b16 %v2106
    %v2112 = vpack.c.b16 %v2111, %v2110
    %vm2113 = vcmask 80896
    %v2115 = vsel %vm2113, %v2112, 0
    %v2118 = vsel %vm1807, %v2107, 0
    %2120 = vmatprep.subr.bf16.mxu0 0
    %2121 = vmatpush1.bf16.msra.mxu0 %v2118
    %2122 = vmatprep.subr.bf16.mxu0 0
    %2123 = vmatpush1.bf16.msra.mxu0 0
    %2124 = vmatprep.subr.bf16.mxu0 0
    %2125 = vmatpush1.bf16.msra.mxu0 0
    %2126 = vmatprep.subr.bf16.mxu0 0
    %2127 = vmatpush1.bf16.msra.mxu0 0
    %2128 = vmatprep.subr.bf16.mxu0 0
    %2129 = vmatpush1.bf16.msra.mxu0 0
    %2130 = vmatprep.subr.bf16.mxu0 0
    %2131 = vmatpush1.bf16.msra.mxu0 0
    %2132 = vmatprep.subr.bf16.mxu0 0
    %2133 = vmatpush1.bf16.msra.mxu0 0
    %2134 = vmatprep.subr.bf16.mxu0 0
    %2135 = vmatpush1.bf16.msra.mxu0 0
    %2136 = vmatprep.subr.bf16.mxu0 0
    %2137 = vmatpush1.bf16.msra.mxu0 0
    %2138 = vmatprep.subr.bf16.mxu0 0
    %2139 = vmatpush1.bf16.msra.mxu0 0
    %2140 = vmatprep.subr.bf16.mxu0 0
    %2141 = vmatpush1.bf16.msra.mxu0 0
    %2142 = vmatprep.subr.bf16.mxu0 0
    %2143 = vmatpush1.bf16.msra.mxu0 0
    %2144 = vmatprep.subr.bf16.mxu0 0
    %2145 = vmatpush1.bf16.msra.mxu0 0
    %2146 = vmatprep.subr.bf16.mxu0 0
    %2147 = vmatpush1.bf16.msra.mxu0 0
    %2148 = vmatprep.subr.bf16.mxu0 0
    %2149 = vmatpush1.bf16.msra.mxu0 0
    %2150 = vmatprep.subr.bf16.mxu0 0
    %2151 = vmatpush1.bf16.msra.mxu0 0
    %2152 = vmatprep.mubr.bf16.mxu0 0
    %2153 = vmatmul.mubr.bf16.gmra.mrb[0].mxu0 %v2115
    %v2154 = vpop.f32.mrb[0].mxu0
    %v2155 = vadd.f32 0.0, %v2154
    %v2156 = vpop.f32.mrb[0].mxu0
    %v2157 = vpop.f32.mrb[0].mxu0
    %v2158 = vadd.f32 0.0, %v2157
    %v2159 = vpop.f32.mrb[0].mxu0
    %2160 = vdwg.mxu0
    %v2162 = vrot.slane %v2155, 4
    %v2164 = vpack.c.bf16 %v2155, %v2155
    %v2165 = vpack.c.bf16 %v2162, %v2162
    %v2166 = vpack.c.bf16 %v2158, %v2158
    %v2167 = vld [vmem:[#allocation5 + $0x2e8] sm:$0xff]
    %v2168 = vld [vmem:[#allocation5 + $0x2f4] sm:$0xff]
    %v2169 = vld [vmem:[#allocation5 + $0x300] sm:$0xff]
    %v2170 = vld [vmem:[#allocation5 + $0x30c] sm:$0xff]
    %v2171 = vld [vmem:[#allocation5 + $0x318] sm:$0xff]
    %v2172 = vld [vmem:[#allocation5 + $0x324] sm:$0xff]
    %v2173 = vld [vmem:[#allocation5 + $0x330] sm:$0xff]
    %v2174 = vld [vmem:[#allocation5 + $0x33c] sm:$0xff]
    %v2175 = vld [vmem:[#allocation5 + $0x348] sm:$0xff]
    %v2176 = vld [vmem:[#allocation5 + $0x354] sm:$0xff]
    %v2177 = vld [vmem:[#allocation5 + $0x360] sm:$0xff]
    %v2178 = vld [vmem:[#allocation5 + $0x36c] sm:$0xff]
    %v2179 = vld [vmem:[#allocation5 + $0x378] sm:$0xff]
    %v2180 = vld [vmem:[#allocation5 + $0x384] sm:$0xff]
    %v2181 = vld [vmem:[#allocation5 + $0x390] sm:$0xff]
    %v2182 = vld [vmem:[#allocation5 + $0x39c] sm:$0xff]
    %v2183 = vld [vmem:[#allocation5 + $0x3a8] sm:$0xff]
    %v2184 = vld [vmem:[#allocation5 + $0x3b4] sm:$0xff]
    %v2185 = vld [vmem:[#allocation5 + $0x3c0] sm:$0xff]
    %v2186 = vld [vmem:[#allocation5 + $0x3cc] sm:$0xff]
    %v2187 = vld [vmem:[#allocation5 + $0x3d8] sm:$0xff]
    %v2188 = vld [vmem:[#allocation5 + $0x3e4] sm:$0xff]
    %v2189 = vld [vmem:[#allocation5 + $0x3f0] sm:$0xff]
    %v2190 = vld [vmem:[#allocation5 + $0x3fc] sm:$0xff]
    %v2191 = vld [vmem:[#allocation5 + $0x408] sm:$0xff]
    %v2192 = vld [vmem:[#allocation5 + $0x414] sm:$0xff]
    %v2193 = vld [vmem:[#allocation5 + $0x420] sm:$0xff]
    %v2194 = vld [vmem:[#allocation5 + $0x42c] sm:$0xff]
    %v2195 = vld [vmem:[#allocation5 + $0x438] sm:$0xff]
    %v2196 = vld [vmem:[#allocation5 + $0x444] sm:$0xff]
    %v2197 = vld [vmem:[#allocation5 + $0x450] sm:$0xff]
    %v2198 = vld [vmem:[#allocation5 + $0x45c] sm:$0xff]
    %v2199 = vld [vmem:[#allocation5 + $0x468] sm:$0xff]
    %v2200 = vld [vmem:[#allocation5 + $0x474] sm:$0xff]
    %v2201 = vld [vmem:[#allocation5 + $0x480] sm:$0xff]
    %v2202 = vld [vmem:[#allocation5 + $0x48c] sm:$0xff]
    %v2203 = vld [vmem:[#allocation5 + $0x498] sm:$0xff]
    %v2204 = vld [vmem:[#allocation5 + $0x4a4] sm:$0xff]
    %v2205 = vld [vmem:[#allocation5 + $0x4b0] sm:$0xff]
    %v2206 = vld [vmem:[#allocation5 + $0x4bc] sm:$0xff]
    %v2207 = vld [vmem:[#allocation5 + $0x4c8] sm:$0xff]
    %v2208 = vld [vmem:[#allocation5 + $0x4d4] sm:$0xff]
    %v2209 = vld [vmem:[#allocation5 + $0x4e0] sm:$0xff]
    %v2210 = vld [vmem:[#allocation5 + $0x4ec] sm:$0xff]
    %v2211 = vld [vmem:[#allocation5 + $0x4f8] sm:$0xff]
    %v2212 = vld [vmem:[#allocation5 + $0x504] sm:$0xff]
    %v2213 = vld [vmem:[#allocation5 + $0x510] sm:$0xff]
    %v2214 = vld [vmem:[#allocation5 + $0x51c] sm:$0xff]
    %v2215 = vld [vmem:[#allocation5 + $0x540] sm:$0xff]
    %v2216 = vld [vmem:[#allocation5 + $0x54c] sm:$0xff]
    %v2217 = vld [vmem:[#allocation5 + $0x558] sm:$0xff]
    %v2218 = vld [vmem:[#allocation5 + $0x564] sm:$0xff]
    %s2219 = scalar_lea.vmem [#allocation7], 976
    %v2220 = vld [vmem:[%s2219] ss:$8 sm:$0x3]
    %v2222 = vlaneseq
    %v2223 = vshrl.u32 %v2222, 7
    %v2224 = vsub.s32 0, %v2223
    %v2225 = vrot.slane %v2220, %v2224
    %v2226 = vlaneseq
    %v2227 = vshrl.u32 %v2226, 7
    %v2228 = vsub.s32 1, %v2227
    %v2229 = vrot.slane %v2220, %v2228
    %v2236 = vunpack.c.l.b16 %v2215
    %v2237 = vunpack.c.h.b16 %v2215
    %v2238 = vunpack.c.l.b16 %v2216
    %v2239 = vunpack.c.h.b16 %v2216
    %v2240 = vunpack.c.l.b16 %v2217
    %v2241 = vunpack.c.h.b16 %v2217
    %v2242 = vunpack.c.l.b16 %v2218
    %v2243 = vunpack.c.h.b16 %v2218
    %v2244 = vpack.c.b16 %v2238, %v2236
    %v2245 = vpack.c.b16 %v2239, %v2237
    %v2246 = vpack.c.b16 %v2242, %v2240
    %v2247 = vpack.c.b16 %v2243, %v2241
    %2252 = vmatprep.subr.bf16.mxu0 %v2245
    %2253 = vmatpush1.bf16.msra.mxu0 %v2244
    %2254 = vmatprep.subr.bf16.mxu0 %v2247
    %2255 = vmatpush1.bf16.msra.mxu0 %v2246
    %2256 = vmatprep.subr.bf16.mxu0 0
    %2257 = vmatpush1.bf16.msra.mxu0 0
    %2258 = vmatprep.subr.bf16.mxu0 0
    %2259 = vmatpush1.bf16.msra.mxu0 0
    %2260 = vmatprep.subr.bf16.mxu0 0
    %2261 = vmatpush1.bf16.msra.mxu0 0
    %2262 = vmatprep.subr.bf16.mxu0 0
    %2263 = vmatpush1.bf16.msra.mxu0 0
    %2264 = vmatprep.subr.bf16.mxu0 0
    %2265 = vmatpush1.bf16.msra.mxu0 0
    %2266 = vmatprep.subr.bf16.mxu0 0
    %2267 = vmatpush1.bf16.msra.mxu0 0
    %2268 = vmatprep.subr.bf16.mxu0 0
    %2269 = vmatpush1.bf16.msra.mxu0 0
    %2270 = vmatprep.subr.bf16.mxu0 0
    %2271 = vmatpush1.bf16.msra.mxu0 0
    %2272 = vmatprep.subr.bf16.mxu0 0
    %2273 = vmatpush1.bf16.msra.mxu0 0
    %2274 = vmatprep.subr.bf16.mxu0 0
    %2275 = vmatpush1.bf16.msra.mxu0 0
    %2276 = vmatprep.subr.bf16.mxu0 0
    %2277 = vmatpush1.bf16.msra.mxu0 0
    %2278 = vmatprep.subr.bf16.mxu0 0
    %2279 = vmatpush1.bf16.msra.mxu0 0
    %2280 = vmatprep.subr.bf16.mxu0 0
    %2281 = vmatpush1.bf16.msra.mxu0 0
    %2282 = vmatprep.subr.bf16.mxu0 0
    %2283 = vmatpush1.bf16.msra.mxu0 0
    %2284 = vmatprep.mubr.bf16.mxu0 0
    %2285 = vmatmul.mubr.bf16.gmra.mrb[0].mxu0 %v766
    %v2286 = vpop.f32.mrb[0].mxu0
    %v2287 = vadd.f32 %v2225, %v2286
    %v2288 = vpop.f32.mrb[0].mxu0
    %v2289 = vadd.f32 %v2229, %v2288
    %v2290 = vpop.f32.mrb[0].mxu0
    %v2291 = vpop.f32.mrb[0].mxu0
    %2292 = vdwg.mxu0
    %v2293 = vlaneseq
    %v2294 = vshrl.u32 %v2293, 7
    %v2295 = vsub.s32 0, %v2294
    %v2296 = vrot.slane %v2287, %v2295
    %v2297 = vlaneseq
    %v2298 = vshrl.u32 %v2297, 7
    %v2299 = vsub.s32 0, %v2298
    %v2300 = vrot.slane %v2289, %v2299
    %v2301 = vlaneseq
    %v2302 = vshrl.u32 %v2301, 7
    %v2303 = vsub.s32 1, %v2302
    %v2304 = vrot.slane %v2287, %v2303
    %v2305 = vlaneseq
    %v2306 = vshrl.u32 %v2305, 7
    %v2307 = vsub.s32 1, %v2306
    %v2308 = vrot.slane %v2289, %v2307
    %v2309 = vsel %vm735, %v2296, %v2304
    %v2310 = vsel %vm735, %v2300, %v2308
    %v2359 = vunpack.c.l.b16 %v2167
    %v2360 = vunpack.c.h.b16 %v2167
    %v2361 = vunpack.c.l.b16 %v2168
    %v2362 = vunpack.c.h.b16 %v2168
    %v2363 = vunpack.c.l.b16 %v2169
    %v2364 = vunpack.c.h.b16 %v2169
    %v2365 = vunpack.c.l.b16 %v2170
    %v2366 = vunpack.c.h.b16 %v2170
    %v2367 = vunpack.c.l.b16 %v2171
    %v2368 = vunpack.c.h.b16 %v2171
    %v2369 = vunpack.c.l.b16 %v2172
    %v2370 = vunpack.c.h.b16 %v2172
    %v2371 = vunpack.c.l.b16 %v2173
    %v2372 = vunpack.c.h.b16 %v2173
    %v2373 = vunpack.c.l.b16 %v2174
    %v2374 = vunpack.c.h.b16 %v2174
    %v2375 = vunpack.c.l.b16 %v2175
    %v2376 = vunpack.c.h.b16 %v2175
    %v2377 = vunpack.c.l.b16 %v2176
    %v2378 = vunpack.c.h.b16 %v2176
    %v2379 = vunpack.c.l.b16 %v2177
    %v2380 = vunpack.c.h.b16 %v2177
    %v2381 = vunpack.c.l.b16 %v2178
    %v2382 = vunpack.c.h.b16 %v2178
    %v2383 = vunpack.c.l.b16 %v2179
    %v2384 = vunpack.c.h.b16 %v2179
    %v2385 = vunpack.c.l.b16 %v2180
    %v2386 = vunpack.c.h.b16 %v2180
    %v2387 = vunpack.c.l.b16 %v2181
    %v2388 = vunpack.c.h.b16 %v2181
    %v2389 = vunpack.c.l.b16 %v2182
    %v2390 = vunpack.c.h.b16 %v2182
    %v2391 = vunpack.c.l.b16 %v2183
    %v2392 = vunpack.c.h.b16 %v2183
    %v2393 = vunpack.c.l.b16 %v2184
    %v2394 = vunpack.c.h.b16 %v2184
    %v2395 = vunpack.c.l.b16 %v2185
    %v2396 = vunpack.c.h.b16 %v2185
    %v2397 = vunpack.c.l.b16 %v2186
    %v2398 = vunpack.c.h.b16 %v2186
    %v2399 = vunpack.c.l.b16 %v2187
    %v2400 = vunpack.c.h.b16 %v2187
    %v2401 = vunpack.c.l.b16 %v2188
    %v2402 = vunpack.c.h.b16 %v2188
    %v2403 = vunpack.c.l.b16 %v2189
    %v2404 = vunpack.c.h.b16 %v2189
    %v2405 = vunpack.c.l.b16 %v2190
    %v2406 = vunpack.c.h.b16 %v2190
    %v2407 = vunpack.c.l.b16 %v2191
    %v2408 = vunpack.c.h.b16 %v2191
    %v2409 = vunpack.c.l.b16 %v2192
    %v2410 = vunpack.c.h.b16 %v2192
    %v2411 = vunpack.c.l.b16 %v2193
    %v2412 = vunpack.c.h.b16 %v2193
    %v2413 = vunpack.c.l.b16 %v2194
    %v2414 = vunpack.c.h.b16 %v2194
    %v2415 = vunpack.c.l.b16 %v2195
    %v2416 = vunpack.c.h.b16 %v2195
    %v2417 = vunpack.c.l.b16 %v2196
    %v2418 = vunpack.c.h.b16 %v2196
    %v2419 = vunpack.c.l.b16 %v2197
    %v2420 = vunpack.c.h.b16 %v2197
    %v2421 = vunpack.c.l.b16 %v2198
    %v2422 = vunpack.c.h.b16 %v2198
    %v2423 = vunpack.c.l.b16 %v2199
    %v2424 = vunpack.c.h.b16 %v2199
    %v2425 = vunpack.c.l.b16 %v2200
    %v2426 = vunpack.c.h.b16 %v2200
    %v2427 = vunpack.c.l.b16 %v2201
    %v2428 = vunpack.c.h.b16 %v2201
    %v2429 = vunpack.c.l.b16 %v2202
    %v2430 = vunpack.c.h.b16 %v2202
    %v2431 = vunpack.c.l.b16 %v2203
    %v2432 = vunpack.c.h.b16 %v2203
    %v2433 = vunpack.c.l.b16 %v2204
    %v2434 = vunpack.c.h.b16 %v2204
    %v2435 = vunpack.c.l.b16 %v2205
    %v2436 = vunpack.c.h.b16 %v2205
    %v2437 = vunpack.c.l.b16 %v2206
    %v2438 = vunpack.c.h.b16 %v2206
    %v2439 = vunpack.c.l.b16 %v2207
    %v2440 = vunpack.c.h.b16 %v2207
    %v2441 = vunpack.c.l.b16 %v2208
    %v2442 = vunpack.c.h.b16 %v2208
    %v2443 = vunpack.c.l.b16 %v2209
    %v2444 = vunpack.c.h.b16 %v2209
    %v2445 = vunpack.c.l.b16 %v2210
    %v2446 = vunpack.c.h.b16 %v2210
    %v2447 = vunpack.c.l.b16 %v2211
    %v2448 = vunpack.c.h.b16 %v2211
    %v2449 = vunpack.c.l.b16 %v2212
    %v2450 = vunpack.c.h.b16 %v2212
    %v2451 = vunpack.c.l.b16 %v2213
    %v2452 = vunpack.c.h.b16 %v2213
    %v2453 = vunpack.c.l.b16 %v2214
    %v2454 = vunpack.c.h.b16 %v2214
    %v2455 = vpack.c.b16 %v2361, %v2359
    %v2456 = vpack.c.b16 %v2362, %v2360
    %v2457 = vpack.c.b16 %v2365, %v2363
    %v2458 = vpack.c.b16 %v2366, %v2364
    %v2459 = vpack.c.b16 %v2369, %v2367
    %v2460 = vpack.c.b16 %v2370, %v2368
    %v2461 = vpack.c.b16 %v2373, %v2371
    %v2462 = vpack.c.b16 %v2374, %v2372
    %v2463 = vpack.c.b16 %v2377, %v2375
    %v2464 = vpack.c.b16 %v2378, %v2376
    %v2465 = vpack.c.b16 %v2381, %v2379
    %v2466 = vpack.c.b16 %v2382, %v2380
    %v2467 = vpack.c.b16 %v2385, %v2383
    %v2468 = vpack.c.b16 %v2386, %v2384
    %v2469 = vpack.c.b16 %v2389, %v2387
    %v2470 = vpack.c.b16 %v2390, %v2388
    %v2471 = vpack.c.b16 %v2393, %v2391
    %v2472 = vpack.c.b16 %v2394, %v2392
    %v2473 = vpack.c.b16 %v2397, %v2395
    %v2474 = vpack.c.b16 %v2398, %v2396
    %v2475 = vpack.c.b16 %v2401, %v2399
    %v2476 = vpack.c.b16 %v2402, %v2400
    %v2477 = vpack.c.b16 %v2405, %v2403
    %v2478 = vpack.c.b16 %v2406, %v2404
    %v2479 = vpack.c.b16 %v2409, %v2407
    %v2480 = vpack.c.b16 %v2410, %v2408
    %v2481 = vpack.c.b16 %v2413, %v2411
    %v2482 = vpack.c.b16 %v2414, %v2412
    %v2483 = vpack.c.b16 %v2417, %v2415
    %v2484 = vpack.c.b16 %v2418, %v2416
    %v2485 = vpack.c.b16 %v2421, %v2419
    %v2486 = vpack.c.b16 %v2422, %v2420
    %v2487 = vpack.c.b16 %v2425, %v2423
    %v2488 = vpack.c.b16 %v2426, %v2424
    %v2489 = vpack.c.b16 %v2429, %v2427
    %v2490 = vpack.c.b16 %v2430, %v2428
    %v2491 = vpack.c.b16 %v2433, %v2431
    %v2492 = vpack.c.b16 %v2434, %v2432
    %v2493 = vpack.c.b16 %v2437, %v2435
    %v2494 = vpack.c.b16 %v2438, %v2436
    %v2495 = vpack.c.b16 %v2441, %v2439
    %v2496 = vpack.c.b16 %v2442, %v2440
    %v2497 = vpack.c.b16 %v2445, %v2443
    %v2498 = vpack.c.b16 %v2446, %v2444
    %v2499 = vpack.c.b16 %v2449, %v2447
    %v2500 = vpack.c.b16 %v2450, %v2448
    %v2501 = vpack.c.b16 %v2453, %v2451
    %v2502 = vpack.c.b16 %v2454, %v2452
    %2551 = vmatprep.subr.bf16.mxu0 %v2456
    %2552 = vmatpush1.bf16.msra.mxu0 %v2455
    %2553 = vmatprep.subr.bf16.mxu0 %v2458
    %2554 = vmatpush1.bf16.msra.mxu0 %v2457
    %2555 = vmatprep.subr.bf16.mxu0 %v2460
    %2556 = vmatpush1.bf16.msra.mxu0 %v2459
    %2557 = vmatprep.subr.bf16.mxu0 %v2462
    %2558 = vmatpush1.bf16.msra.mxu0 %v2461
    %2559 = vmatprep.subr.bf16.mxu0 %v2464
    %2560 = vmatpush1.bf16.msra.mxu0 %v2463
    %2561 = vmatprep.subr.bf16.mxu0 %v2466
    %2562 = vmatpush1.bf16.msra.mxu0 %v2465
    %2563 = vmatprep.subr.bf16.mxu0 %v2468
    %2564 = vmatpush1.bf16.msra.mxu0 %v2467
    %2565 = vmatprep.subr.bf16.mxu0 %v2470
    %2566 = vmatpush1.bf16.msra.mxu0 %v2469
    %2567 = vmatprep.subr.bf16.mxu0 %v2472
    %2568 = vmatpush1.bf16.msra.mxu0 %v2471
    %2569 = vmatprep.subr.bf16.mxu0 %v2474
    %2570 = vmatpush1.bf16.msra.mxu0 %v2473
    %2571 = vmatprep.subr.bf16.mxu0 %v2476
    %2572 = vmatpush1.bf16.msra.mxu0 %v2475
    %2573 = vmatprep.subr.bf16.mxu0 %v2478
    %2574 = vmatpush1.bf16.msra.mxu0 %v2477
    %2575 = vmatprep.subr.bf16.mxu0 %v2480
    %2576 = vmatpush1.bf16.msra.mxu0 %v2479
    %2577 = vmatprep.subr.bf16.mxu0 %v2482
    %2578 = vmatpush1.bf16.msra.mxu0 %v2481
    %2579 = vmatprep.subr.bf16.mxu0 %v2484
    %2580 = vmatpush1.bf16.msra.mxu0 %v2483
    %2581 = vmatprep.subr.bf16.mxu0 %v2486
    %2582 = vmatpush1.bf16.msra.mxu0 %v2485
    %2583 = vmatprep.mubr.bf16.mxu0 %v2165
    %2584 = vmatmul.mubr.bf16.gmra.mrb[0].mxu0 %v2164
    %v2585 = vpop.f32.mrb[0].mxu0
    %v2586 = vadd.f32 %v2309, %v2585
    %v2587 = vpop.f32.mrb[0].mxu0
    %v2588 = vadd.f32 %v2310, %v2587
    %v2589 = vpop.f32.mrb[0].mxu0
    %v2590 = vpop.f32.mrb[0].mxu0
    %2591 = vdwg.mxu0
    %2592 = vmatprep.subr.bf16.mxu0 %v2488
    %2593 = vmatpush1.bf16.msra.mxu0 %v2487
    %2594 = vmatprep.subr.bf16.mxu0 %v2490
    %2595 = vmatpush1.bf16.msra.mxu0 %v2489
    %2596 = vmatprep.subr.bf16.mxu0 %v2492
    %2597 = vmatpush1.bf16.msra.mxu0 %v2491
    %2598 = vmatprep.subr.bf16.mxu0 %v2494
    %2599 = vmatpush1.bf16.msra.mxu0 %v2493
    %2600 = vmatprep.subr.bf16.mxu0 %v2496
    %2601 = vmatpush1.bf16.msra.mxu0 %v2495
    %2602 = vmatprep.subr.bf16.mxu0 %v2498
    %2603 = vmatpush1.bf16.msra.mxu0 %v2497
    %2604 = vmatprep.subr.bf16.mxu0 %v2500
    %2605 = vmatpush1.bf16.msra.mxu0 %v2499
    %2606 = vmatprep.subr.bf16.mxu0 %v2502
    %2607 = vmatpush1.bf16.msra.mxu0 %v2501
    %2608 = vmatprep.subr.bf16.mxu0 0
    %2609 = vmatpush1.bf16.msra.mxu0 0
    %2610 = vmatprep.subr.bf16.mxu0 0
    %2611 = vmatpush1.bf16.msra.mxu0 0
    %2612 = vmatprep.subr.bf16.mxu0 0
    %2613 = vmatpush1.bf16.msra.mxu0 0
    %2614 = vmatprep.subr.bf16.mxu0 0
    %2615 = vmatpush1.bf16.msra.mxu0 0
    %2616 = vmatprep.subr.bf16.mxu0 0
    %2617 = vmatpush1.bf16.msra.mxu0 0
    %2618 = vmatprep.subr.bf16.mxu0 0
    %2619 = vmatpush1.bf16.msra.mxu0 0
    %2620 = vmatprep.subr.bf16.mxu0 0
    %2621 = vmatpush1.bf16.msra.mxu0 0
    %2622 = vmatprep.subr.bf16.mxu0 0
    %2623 = vmatpush1.bf16.msra.mxu0 0
    %2624 = vmatprep.mubr.bf16.mxu0 0
    %2625 = vmatmul.mubr.bf16.gmra.mrb[0].mxu0 %v2166
    %v2626 = vpop.f32.mrb[0].mxu0
    %v2627 = vadd.f32 %v2586, %v2626
    %v2628 = vpop.f32.mrb[0].mxu0
    %v2629 = vadd.f32 %v2588, %v2628
    %v2630 = vpop.f32.mrb[0].mxu0
    %v2631 = vpop.f32.mrb[0].mxu0
    %2632 = vdwg.mxu0
    %v2633 = vsel %vm735, %v2627, 0.0
    %v2634 = vrot.slane %v2633, 4
    %v2635 = vadd.f32 %v2633, %v2634
    %v2636 = vrot.slane %v2635, 2
    %v2637 = vadd.f32 %v2635, %v2636
    %v2638 = vrot.slane %v2637, 1
    %v2639 = vadd.f32 %v2637, %v2638
    %v2640 = vsel %vm735, %v2629, 0.0
    %v2641 = vrot.slane %v2640, 4
    %v2642 = vadd.f32 %v2640, %v2641
    %v2643 = vrot.slane %v2642, 2
    %v2644 = vadd.f32 %v2642, %v2643
    %v2645 = vrot.slane %v2644, 1
    %v2646 = vadd.f32 %v2644, %v2645
    %v2647 = vmul.f32 %v2627, %v2627
    %v2648 = vmul.f32 %v2629, %v2629
    %v2649 = vsel %vm735, %v2647, 0.0
    %v2650 = vrot.slane %v2649, 4
    %v2651 = vadd.f32 %v2649, %v2650
    %v2652 = vrot.slane %v2651, 2
    %v2653 = vadd.f32 %v2651, %v2652
    %v2654 = vrot.slane %v2653, 1
    %v2655 = vadd.f32 %v2653, %v2654
    %v2656 = vsel %vm735, %v2648, 0.0
    %v2657 = vrot.slane %v2656, 4
    %v2658 = vadd.f32 %v2656, %v2657
    %v2659 = vrot.slane %v2658, 2
    %v2660 = vadd.f32 %v2658, %v2659
    %v2661 = vrot.slane %v2660, 1
    %v2662 = vadd.f32 %v2660, %v2661
    %v2665 = vrot.slane %v2627, 2
    %v2666 = vrot.slane %v2629, 2
    %v2669 = vsel %vm735, %v2665, 0.0
    %v2670 = vrot.slane %v2669, 4
    %v2671 = vadd.f32 %v2669, %v2670
    %v2672 = vrot.slane %v2671, 2
    %v2673 = vadd.f32 %v2671, %v2672
    %v2674 = vrot.slane %v2673, 1
    %v2675 = vadd.f32 %v2673, %v2674
    %v2676 = vsel %vm735, %v2666, 0.0
    %v2677 = vrot.slane %v2676, 4
    %v2678 = vadd.f32 %v2676, %v2677
    %v2679 = vrot.slane %v2678, 2
    %v2680 = vadd.f32 %v2678, %v2679
    %v2681 = vrot.slane %v2680, 1
    %v2682 = vadd.f32 %v2680, %v2681
    %v2685 = vrot.slane %v2647, 2
    %v2686 = vrot.slane %v2648, 2
    %v2689 = vsel %vm735, %v2685, 0.0
    %v2690 = vrot.slane %v2689, 4
    %v2691 = vadd.f32 %v2689, %v2690
    %v2692 = vrot.slane %v2691, 2
    %v2693 = vadd.f32 %v2691, %v2692
    %v2694 = vrot.slane %v2693, 1
    %v2695 = vadd.f32 %v2693, %v2694
    %v2696 = vsel %vm735, %v2686, 0.0
    %v2697 = vrot.slane %v2696, 4
    %v2698 = vadd.f32 %v2696, %v2697
    %v2699 = vrot.slane %v2698, 2
    %v2700 = vadd.f32 %v2698, %v2699
    %v2701 = vrot.slane %v2700, 1
    %v2702 = vadd.f32 %v2700, %v2701
    %v2703 = vsel %vm914, %v2639, %v2675
    %v2704 = vsel %vm914, %v2646, %v2682
    %v2705 = vsel %vm735, %v2703, %v2655
    %v2706 = vsel %vm735, %v2704, %v2662
    %v2707 = vsel %vm917, %v2705, %v2695
    %v2708 = vsel %vm917, %v2706, %v2702
    %v2709 = vld [vmem:[#allocation7 + $0x400] sm:$0xff]
    %v2710 = vld [vmem:[#allocation7 + $0x408] sm:$0xff]
    %v2711 = vld [vmem:[#allocation7 + $0x410] sm:$0xff]
    %v2712 = vld [vmem:[#allocation7 + $0x418] sm:$0xff]
    %v2713 = vld [vmem:[#allocation7 + $0x420] sm:$0xff]
    %v2714 = vld [vmem:[#allocation7 + $0x428] sm:$0xff]
    %v2715 = vld [vmem:[#allocation7 + $0x430] sm:$0xff]
    %v2716 = vld [vmem:[#allocation7 + $0x438] sm:$0xff]
    %v2717 = vld [vmem:[#allocation7 + $0x440] sm:$0xff]
    %v2718 = vld [vmem:[#allocation7 + $0x448] sm:$0xff]
    %v2719 = vld [vmem:[#allocation7 + $0x450] sm:$0xff]
    %v2720 = vld [vmem:[#allocation7 + $0x458] sm:$0xff]
    %v2721 = vld [vmem:[#allocation7 + $0x460] sm:$0xff]
    %v2722 = vld [vmem:[#allocation7 + $0x468] sm:$0xff]
    %v2723 = vld [vmem:[#allocation7 + $0x470] sm:$0xff]
    %v2724 = vld [vmem:[#allocation7 + $0x478] sm:$0xff]
    %v2725 = vld [vmem:[#allocation7 + $0x480] sm:$0xff]
    %v2726 = vld [vmem:[#allocation7 + $0x488] sm:$0xff]
    %v2727 = vld [vmem:[#allocation7 + $0x490] sm:$0xff]
    %v2728 = vld [vmem:[#allocation7 + $0x498] sm:$0xff]
    %v2729 = vld [vmem:[#allocation7 + $0x4a0] sm:$0xff]
    %v2730 = vld [vmem:[#allocation7 + $0x4a8] sm:$0xff]
    %v2731 = vld [vmem:[#allocation7 + $0x4b0] sm:$0xff]
    %v2732 = vld [vmem:[#allocation7 + $0x4b8] sm:$0xff]
    %v2733 = vld [vmem:[#allocation7 + $0x4c0] sm:$0xff]
    %v2734 = vld [vmem:[#allocation7 + $0x4c8] sm:$0xff]
    %v2735 = vld [vmem:[#allocation7 + $0x4d0] sm:$0xff]
    %v2736 = vld [vmem:[#allocation7 + $0x4d8] sm:$0xff]
    %v2737 = vld [vmem:[#allocation7 + $0x4e0] sm:$0xff]
    %v2738 = vld [vmem:[#allocation7 + $0x4e8] sm:$0xff]
    %v2739 = vld [vmem:[#allocation7 + $0x4f0] sm:$0xff]
    %v2740 = vld [vmem:[#allocation7 + $0x4f8] sm:$0xff]
    %v2741 = vld [vmem:[#allocation7 + $0x500] sm:$0xff]
    %v2742 = vld [vmem:[#allocation7 + $0x508] sm:$0xff]
    %v2743 = vld [vmem:[#allocation7 + $0x510] sm:$0xff]
    %v2744 = vld [vmem:[#allocation7 + $0x518] sm:$0xff]
    %v2745 = vld [vmem:[#allocation7 + $0x520] sm:$0xff]
    %v2746 = vld [vmem:[#allocation7 + $0x528] sm:$0xff]
    %v2747 = vld [vmem:[#allocation7 + $0x530] sm:$0xff]
    %v2748 = vld [vmem:[#allocation7 + $0x538] sm:$0xff]
    %v2749 = vld [vmem:[#allocation7 + $0x540] sm:$0xff]
    %v2750 = vld [vmem:[#allocation7 + $0x548] sm:$0xff]
    %v2751 = vld [vmem:[#allocation7 + $0x550] sm:$0xff]
    %v2752 = vld [vmem:[#allocation7 + $0x558] sm:$0xff]
    %v2753 = vld [vmem:[#allocation7 + $0x560] sm:$0xff]
    %v2754 = vld [vmem:[#allocation7 + $0x568] sm:$0xff]
    %v2755 = vld [vmem:[#allocation7 + $0x570] sm:$0xff]
    %v2756 = vld [vmem:[#allocation7 + $0x578] sm:$0xff]
    %v2757 = vld [vmem:[#allocation7 + $0x580] sm:$0xff]
    %v2758 = vld [vmem:[#allocation7 + $0x588] sm:$0xff]
    %v2759 = vld [vmem:[#allocation7 + $0x590] sm:$0xff]
    %v2760 = vld [vmem:[#allocation7 + $0x598] sm:$0xff]
    %v2761 = vld [vmem:[#allocation7 + $0x5a0] sm:$0xff]
    %v2762 = vld [vmem:[#allocation7 + $0x5a8] sm:$0xff]
    %v2763 = vld [vmem:[#allocation7 + $0x5b0] sm:$0xff]
    %v2764 = vld [vmem:[#allocation7 + $0x5b8] sm:$0xff]
    %v2765 = vld [vmem:[#allocation7 + $0x5c0] sm:$0xff]
    %v2766 = vld [vmem:[#allocation7 + $0x5c8] sm:$0xff]
    %v2767 = vld [vmem:[#allocation7 + $0x5d0] sm:$0xff]
    %v2768 = vld [vmem:[#allocation7 + $0x5d8] sm:$0xff]
    %v2769 = vld [vmem:[#allocation7 + $0x5e0] sm:$0xff]
    %v2770 = vld [vmem:[#allocation7 + $0x5e8] sm:$0xff]
    %v2771 = vld [vmem:[#allocation7 + $0x5f0] sm:$0xff]
    %v2772 = vld [vmem:[#allocation7 + $0x5f8] sm:$0xff]
    %2773 = vmatprep.subr.mxu0 %v2710
    %2774 = vmatpush1.msra.mxu0 %v2709
    %2775 = vmatprep.subr.mxu0 %v2712
    %2776 = vmatpush1.msra.mxu0 %v2711
    %2777 = vmatprep.subr.mxu0 %v2714
    %2778 = vmatpush1.msra.mxu0 %v2713
    %2779 = vmatprep.subr.mxu0 %v2716
    %2780 = vmatpush1.msra.mxu0 %v2715
    %2781 = vmatprep.subr.mxu0 %v2718
    %2782 = vmatpush1.msra.mxu0 %v2717
    %2783 = vmatprep.subr.mxu0 %v2720
    %2784 = vmatpush1.msra.mxu0 %v2719
    %2785 = vmatprep.subr.mxu0 %v2722
    %2786 = vmatpush1.msra.mxu0 %v2721
    %2787 = vmatprep.subr.mxu0 %v2724
    %2788 = vmatpush1.msra.mxu0 %v2723
    %2789 = vmatprep.subr.mxu0 %v2726
    %2790 = vmatpush1.msra.mxu0 %v2725
    %2791 = vmatprep.subr.mxu0 %v2728
    %2792 = vmatpush1.msra.mxu0 %v2727
    %2793 = vmatprep.subr.mxu0 %v2730
    %2794 = vmatpush1.msra.mxu0 %v2729
    %2795 = vmatprep.subr.mxu0 %v2732
    %2796 = vmatpush1.msra.mxu0 %v2731
    %2797 = vmatprep.subr.mxu0 %v2734
    %2798 = vmatpush1.msra.mxu0 %v2733
    %2799 = vmatprep.subr.mxu0 %v2736
    %2800 = vmatpush1.msra.mxu0 %v2735
    %2801 = vmatprep.subr.mxu0 %v2738
    %2802 = vmatpush1.msra.mxu0 %v2737
    %2803 = vmatprep.subr.mxu0 %v2740
    %2804 = vmatpush1.msra.mxu0 %v2739
    %2805 = vmatprep.subr.mxu0 %v2742
    %2806 = vmatpush1.msra.mxu0 %v2741
    %2807 = vmatprep.subr.mxu0 %v2744
    %2808 = vmatpush1.msra.mxu0 %v2743
    %2809 = vmatprep.subr.mxu0 %v2746
    %2810 = vmatpush1.msra.mxu0 %v2745
    %2811 = vmatprep.subr.mxu0 %v2748
    %2812 = vmatpush1.msra.mxu0 %v2747
    %2813 = vmatprep.subr.mxu0 %v2750
    %2814 = vmatpush1.msra.mxu0 %v2749
    %2815 = vmatprep.subr.mxu0 %v2752
    %2816 = vmatpush1.msra.mxu0 %v2751
    %2817 = vmatprep.subr.mxu0 %v2754
    %2818 = vmatpush1.msra.mxu0 %v2753
    %2819 = vmatprep.subr.mxu0 %v2756
    %2820 = vmatpush1.msra.mxu0 %v2755
    %2821 = vmatprep.subr.mxu0 %v2758
    %2822 = vmatpush1.msra.mxu0 %v2757
    %2823 = vmatprep.subr.mxu0 %v2760
    %2824 = vmatpush1.msra.mxu0 %v2759
    %2825 = vmatprep.subr.mxu0 %v2762
    %2826 = vmatpush1.msra.mxu0 %v2761
    %2827 = vmatprep.subr.mxu0 %v2764
    %2828 = vmatpush1.msra.mxu0 %v2763
    %2829 = vmatprep.subr.mxu0 %v2766
    %2830 = vmatpush1.msra.mxu0 %v2765
    %2831 = vmatprep.subr.mxu0 %v2768
    %2832 = vmatpush1.msra.mxu0 %v2767
    %2833 = vmatprep.subr.mxu0 %v2770
    %2834 = vmatpush1.msra.mxu0 %v2769
    %2835 = vmatprep.subr.mxu0 %v2772
    %2836 = vmatpush1.msra.mxu0 %v2771
    %2837 = vmatprep.mubr.f32.mxu0 %v2708
    %2838 = vmatmul.mubr.f32.gmra.mrb[0].mxu0 %v2707
    %v2839 = vpop.f32.mrb[0].mxu0
    %v2840 = vadd.f32 0.0, %v2839
    %v2841 = vpop.f32.mrb[0].mxu0
    %v2842 = vadd.f32 0.0, %v2841
    %2843 = vdwg.mxu0
    %v2844 = vmul.f32 %v2840, 0.0625
    %v2845 = vmul.f32 %v2842, 0.0625
    %v2846 = vmul.f32 %v2844, %v2844
    %v2847 = vmul.f32 %v2845, %v2845
    %v2850 = vrot.slane %v2846, 6
    %v2851 = vrot.slane %v2847, 6
    %v2854 = vsub.f32 %v2844, %v2850
    %v2855 = vsub.f32 %v2845, %v2851
    %v2856 = vmax.f32 %v2854, 0.0
    %v2857 = vmax.f32 %v2855, 0.0
    %v2858 = vlaneseq
    %v2859 = vshrl.u32 %v2858, 7
    %v2860 = vsub.s32 0, %v2859
    %v2861 = vrot.slane %v2844, %v2860
    %v2862 = vlaneseq
    %v2863 = vshrl.u32 %v2862, 7
    %v2864 = vsub.s32 0, %v2863
    %v2865 = vrot.slane %v2845, %v2864
    %v2866 = vlaneseq
    %v2867 = vshrl.u32 %v2866, 7
    %v2868 = vsub.s32 1, %v2867
    %v2869 = vrot.slane %v2844, %v2868
    %v2870 = vlaneseq
    %v2871 = vshrl.u32 %v2870, 7
    %v2872 = vsub.s32 1, %v2871
    %v2873 = vrot.slane %v2845, %v2872
    %v2874 = vsel %vm735, %v2861, %v2869
    %v2875 = vsel %vm735, %v2865, %v2873
    %v2876 = vadd.f32 %v2856, 1e-05
    %v2877 = vadd.f32 %v2857, 1e-05
    %v2878 = vrsqrt.pop %v2876
    %v2879 = vrsqrt.pop %v2877
    %v2880 = vlaneseq
    %v2881 = vshrl.u32 %v2880, 7
    %v2882 = vsub.s32 2, %v2881
    %v2883 = vrot.slane %v2878, %v2882
    %v2884 = vlaneseq
    %v2885 = vshrl.u32 %v2884, 7
    %v2886 = vsub.s32 2, %v2885
    %v2887 = vrot.slane %v2879, %v2886
    %v2888 = vlaneseq
    %v2889 = vshrl.u32 %v2888, 7
    %v2890 = vsub.s32 3, %v2889
    %v2891 = vrot.slane %v2878, %v2890
    %v2892 = vlaneseq
    %v2893 = vshrl.u32 %v2892, 7
    %v2894 = vsub.s32 3, %v2893
    %v2895 = vrot.slane %v2879, %v2894
    %v2896 = vsel %vm735, %v2883, %v2891
    %v2897 = vsel %vm735, %v2887, %v2895
    %v2898 = vsub.f32 %v2627, %v2874
    %v2899 = vsub.f32 %v2629, %v2875
    %v2900 = vmul.f32 %v2898, %v2896
    %v2901 = vmul.f32 %v2899, %v2897
    %s2902 = scalar_lea.vmem [#allocation7], 992
    %v2903 = vld [vmem:[%s2902] ss:$8 sm:$0x3]
    %v2905 = vlaneseq
    %v2906 = vshrl.u32 %v2905, 7
    %v2907 = vsub.s32 0, %v2906
    %v2908 = vrot.slane %v2903, %v2907
    %v2909 = vlaneseq
    %v2910 = vshrl.u32 %v2909, 7
    %v2911 = vsub.s32 1, %v2910
    %v2912 = vrot.slane %v2903, %v2911
    %v2915 = vmul.f32 %v2900, %v2908
    %v2916 = vmul.f32 %v2901, %v2912
    %s2917 = scalar_lea.vmem [#allocation7], 1008
    %v2918 = vld [vmem:[%s2917] ss:$8 sm:$0x3]
    %v2920 = vlaneseq
    %v2921 = vshrl.u32 %v2920, 7
    %v2922 = vsub.s32 0, %v2921
    %v2923 = vrot.slane %v2918, %v2922
    %v2924 = vlaneseq
    %v2925 = vshrl.u32 %v2924, 7
    %v2926 = vsub.s32 1, %v2925
    %v2927 = vrot.slane %v2918, %v2926
    %v2930 = vadd.f32 %v2915, %v2923
    %v2931 = vadd.f32 %v2916, %v2927
    %v2932 = vsub.f32 0.0, %v2930
    %v2933 = vsub.f32 0.0, %v2931
    %v2934 = vmul.f32 %v2932, 1.442695
    %v2935 = vpow.pop %v2934
    %v2936 = vmul.f32 %v2933, 1.442695
    %v2937 = vpow.pop %v2936
    %v2938 = vadd.f32 %v2935, 1.0
    %v2939 = vadd.f32 %v2937, 1.0
    %v2940 = vrcp.pop %v2938
    %v2941 = vrcp.pop %v2939
    %v2942 = vmul.f32 %v2930, %v2940
    %v2943 = vmul.f32 %v2931, %v2941
    %v2944 = vpack.c.bf16 %v2942, %v2942
    %v2945 = vpack.c.bf16 %v2943, %v2943
    %v2946 = vld [vmem:[#allocation5 + $0x570] sm:$0xff]
    %v2947 = vld [vmem:[#allocation5 + $0x578] sm:$0xf]
    %v2948 = vld [vmem:[#allocation5 + $0x57c] sm:$0xff]
    %v2949 = vld [vmem:[#allocation5 + $0x584] sm:$0xf]
    %v2950 = vld [vmem:[#allocation5 + $0x588] sm:$0xff]
    %v2951 = vld [vmem:[#allocation5 + $0x590] sm:$0xf]
    %v2952 = vld [vmem:[#allocation5 + $0x594] sm:$0xff]
    %v2953 = vld [vmem:[#allocation5 + $0x59c] sm:$0xf]
    %v2954 = vld [vmem:[#allocation5 + $0x5a0] sm:$0xff]
    %v2955 = vld [vmem:[#allocation5 + $0x5a8] sm:$0xf]
    %v2956 = vld [vmem:[#allocation5 + $0x5ac] sm:$0xff]
    %v2957 = vld [vmem:[#allocation5 + $0x5b4] sm:$0xf]
    %v2958 = vld [vmem:[#allocation5 + $0x5b8] sm:$0xff]
    %v2959 = vld [vmem:[#allocation5 + $0x5c0] sm:$0xf]
    %v2960 = vld [vmem:[#allocation5 + $0x5c4] sm:$0xff]
    %v2961 = vld [vmem:[#allocation5 + $0x5cc] sm:$0xf]
    %v2962 = vld [vmem:[#allocation5 + $0x5d0] sm:$0xff]
    %v2963 = vld [vmem:[#allocation5 + $0x5d8] sm:$0xf]
    %v2964 = vld [vmem:[#allocation5 + $0x5dc] sm:$0xff]
    %v2965 = vld [vmem:[#allocation5 + $0x5e4] sm:$0xf]
    %v2966 = vld [vmem:[#allocation5 + $0x5e8] sm:$0xff]
    %v2967 = vld [vmem:[#allocation5 + $0x5f0] sm:$0xf]
    %v2968 = vld [vmem:[#allocation5 + $0x5f4] sm:$0xff]
    %v2969 = vld [vmem:[#allocation5 + $0x5fc] sm:$0xf]
    %v2970 = vld [vmem:[#allocation5 + $0x600] sm:$0xff]
    %v2971 = vld [vmem:[#allocation5 + $0x608] sm:$0xf]
    %v2972 = vld [vmem:[#allocation5 + $0x60c] sm:$0xff]
    %v2973 = vld [vmem:[#allocation5 + $0x614] sm:$0xf]
    %v2974 = vld [vmem:[#allocation5 + $0x618] sm:$0xff]
    %v2975 = vld [vmem:[#allocation5 + $0x620] sm:$0xf]
    %v2976 = vld [vmem:[#allocation5 + $0x624] sm:$0xff]
    %v2977 = vld [vmem:[#allocation5 + $0x62c] sm:$0xf]
    %v2978 = vld [vmem:[#allocation5 + $0x630] sm:$0xff]
    %v2979 = vld [vmem:[#allocation5 + $0x638] sm:$0xf]
    %v2980 = vld [vmem:[#allocation5 + $0x63c] sm:$0xff]
    %v2981 = vld [vmem:[#allocation5 + $0x644] sm:$0xf]
    %v2982 = vld [vmem:[#allocation5 + $0x648] sm:$0xff]
    %v2983 = vld [vmem:[#allocation5 + $0x650] sm:$0xf]
    %v2984 = vld [vmem:[#allocation5 + $0x654] sm:$0xff]
    %v2985 = vld [vmem:[#allocation5 + $0x65c] sm:$0xf]
    %v2986 = vld [vmem:[#allocation5 + $0x660] sm:$0xff]
    %v2987 = vld [vmem:[#allocation5 + $0x668] sm:$0xf]
    %v2988 = vld [vmem:[#allocation5 + $0x66c] sm:$0xff]
    %v2989 = vld [vmem:[#allocation5 + $0x674] sm:$0xf]
    %v2990 = vld [vmem:[#allocation5 + $0x678] sm:$0xff]
    %v2991 = vld [vmem:[#allocation5 + $0x680] sm:$0xf]
    %v2992 = vld [vmem:[#allocation5 + $0x684] sm:$0xff]
    %v2993 = vld [vmem:[#allocation5 + $0x68c] sm:$0xf]
    %v2994 = vld [vmem:[#allocation5 + $0x690] sm:$0xff]
    %v2995 = vld [vmem:[#allocation5 + $0x698] sm:$0xf]
    %v2996 = vld [vmem:[#allocation5 + $0x69c] sm:$0xff]
    %v2997 = vld [vmem:[#allocation5 + $0x6a4] sm:$0xf]
    %v2998 = vld [vmem:[#allocation5 + $0x6a8] sm:$0xff]
    %v2999 = vld [vmem:[#allocation5 + $0x6b0] sm:$0xf]
    %v3000 = vld [vmem:[#allocation5 + $0x6b4] sm:$0xff]
    %v3001 = vld [vmem:[#allocation5 + $0x6bc] sm:$0xf]
    %v3002 = vld [vmem:[#allocation5 + $0x6c0] sm:$0xff]
    %v3003 = vld [vmem:[#allocation5 + $0x6c8] sm:$0xf]
    %v3004 = vld [vmem:[#allocation5 + $0x6cc] sm:$0xff]
    %v3005 = vld [vmem:[#allocation5 + $0x6d4] sm:$0xf]
    %v3006 = vld [vmem:[#allocation5 + $0x6d8] sm:$0xff]
    %v3007 = vld [vmem:[#allocation5 + $0x6e0] sm:$0xf]
    %v3008 = vld [vmem:[#allocation5 + $0x6e4] sm:$0xff]
    %v3009 = vld [vmem:[#allocation5 + $0x6ec] sm:$0xf]
    %v3074 = vunpack.c.l.b16 %v2946
    %v3075 = vunpack.c.h.b16 %v2946
    %v3076 = vunpack.c.l.b16 %v2947
    %v3077 = vunpack.c.l.b16 %v2948
    %v3078 = vunpack.c.h.b16 %v2948
    %v3079 = vunpack.c.l.b16 %v2949
    %v3080 = vunpack.c.l.b16 %v2950
    %v3081 = vunpack.c.h.b16 %v2950
    %v3082 = vunpack.c.l.b16 %v2951
    %v3083 = vunpack.c.l.b16 %v2952
    %v3084 = vunpack.c.h.b16 %v2952
    %v3085 = vunpack.c.l.b16 %v2953
    %v3086 = vunpack.c.l.b16 %v2954
    %v3087 = vunpack.c.h.b16 %v2954
    %v3088 = vunpack.c.l.b16 %v2955
    %v3089 = vunpack.c.l.b16 %v2956
    %v3090 = vunpack.c.h.b16 %v2956
    %v3091 = vunpack.c.l.b16 %v2957
    %v3092 = vunpack.c.l.b16 %v2958
    %v3093 = vunpack.c.h.b16 %v2958
    %v3094 = vunpack.c.l.b16 %v2959
    %v3095 = vunpack.c.l.b16 %v2960
    %v3096 = vunpack.c.h.b16 %v2960
    %v3097 = vunpack.c.l.b16 %v2961
    %v3098 = vunpack.c.l.b16 %v2962
    %v3099 = vunpack.c.h.b16 %v2962
    %v3100 = vunpack.c.l.b16 %v2963
    %v3101 = vunpack.c.l.b16 %v2964
    %v3102 = vunpack.c.h.b16 %v2964
    %v3103 = vunpack.c.l.b16 %v2965
    %v3104 = vunpack.c.l.b16 %v2966
    %v3105 = vunpack.c.h.b16 %v2966
    %v3106 = vunpack.c.l.b16 %v2967
    %v3107 = vunpack.c.l.b16 %v2968
    %v3108 = vunpack.c.h.b16 %v2968
    %v3109 = vunpack.c.l.b16 %v2969
    %v3110 = vunpack.c.l.b16 %v2970
    %v3111 = vunpack.c.h.b16 %v2970
    %v3112 = vunpack.c.l.b16 %v2971
    %v3113 = vunpack.c.l.b16 %v2972
    %v3114 = vunpack.c.h.b16 %v2972
    %v3115 = vunpack.c.l.b16 %v2973
    %v3116 = vunpack.c.l.b16 %v2974
    %v3117 = vunpack.c.h.b16 %v2974
    %v3118 = vunpack.c.l.b16 %v2975
    %v3119 = vunpack.c.l.b16 %v2976
    %v3120 = vunpack.c.h.b16 %v2976
    %v3121 = vunpack.c.l.b16 %v2977
    %v3122 = vunpack.c.l.b16 %v2978
    %v3123 = vunpack.c.h.b16 %v2978
    %v3124 = vunpack.c.l.b16 %v2979
    %v3125 = vunpack.c.l.b16 %v2980
    %v3126 = vunpack.c.h.b16 %v2980
    %v3127 = vunpack.c.l.b16 %v2981
    %v3128 = vunpack.c.l.b16 %v2982
    %v3129 = vunpack.c.h.b16 %v2982
    %v3130 = vunpack.c.l.b16 %v2983
    %v3131 = vunpack.c.l.b16 %v2984
    %v3132 = vunpack.c.h.b16 %v2984
    %v3133 = vunpack.c.l.b16 %v2985
    %v3134 = vunpack.c.l.b16 %v2986
    %v3135 = vunpack.c.h.b16 %v2986
    %v3136 = vunpack.c.l.b16 %v2987
    %v3137 = vunpack.c.l.b16 %v2988
    %v3138 = vunpack.c.h.b16 %v2988
    %v3139 = vunpack.c.l.b16 %v2989
    %v3140 = vunpack.c.l.b16 %v2990
    %v3141 = vunpack.c.h.b16 %v2990
    %v3142 = vunpack.c.l.b16 %v2991
    %v3143 = vunpack.c.l.b16 %v2992
    %v3144 = vunpack.c.h.b16 %v2992
    %v3145 = vunpack.c.l.b16 %v2993
    %v3146 = vunpack.c.l.b16 %v2994
    %v3147 = vunpack.c.h.b16 %v2994
    %v3148 = vunpack.c.l.b16 %v2995
    %v3149 = vunpack.c.l.b16 %v2996
    %v3150 = vunpack.c.h.b16 %v2996
    %v3151 = vunpack.c.l.b16 %v2997
    %v3152 = vunpack.c.l.b16 %v2998
    %v3153 = vunpack.c.h.b16 %v2998
    %v3154 = vunpack.c.l.b16 %v2999
    %v3155 = vunpack.c.l.b16 %v3000
    %v3156 = vunpack.c.h.b16 %v3000
    %v3157 = vunpack.c.l.b16 %v3001
    %v3158 = vunpack.c.l.b16 %v3002
    %v3159 = vunpack.c.h.b16 %v3002
    %v3160 = vunpack.c.l.b16 %v3003
    %v3161 = vunpack.c.l.b16 %v3004
    %v3162 = vunpack.c.h.b16 %v3004
    %v3163 = vunpack.c.l.b16 %v3005
    %v3164 = vunpack.c.l.b16 %v3006
    %v3165 = vunpack.c.h.b16 %v3006
    %v3166 = vunpack.c.l.b16 %v3007
    %v3167 = vunpack.c.l.b16 %v3008
    %v3168 = vunpack.c.h.b16 %v3008
    %v3169 = vunpack.c.l.b16 %v3009
    %v3170 = vpack.c.b16 %v3077, %v3074
    %v3171 = vpack.c.b16 %v3078, %v3075
    %v3172 = vpack.c.b16 %v3079, %v3076
    %v3173 = vpack.c.b16 %v3083, %v3080
    %v3174 = vpack.c.b16 %v3084, %v3081
    %v3175 = vpack.c.b16 %v3085, %v3082
    %v3176 = vpack.c.b16 %v3089, %v3086
    %v3177 = vpack.c.b16 %v3090, %v3087
    %v3178 = vpack.c.b16 %v3091, %v3088
    %v3179 = vpack.c.b16 %v3095, %v3092
    %v3180 = vpack.c.b16 %v3096, %v3093
    %v3181 = vpack.c.b16 %v3097, %v3094
    %v3182 = vpack.c.b16 %v3101, %v3098
    %v3183 = vpack.c.b16 %v3102, %v3099
    %v3184 = vpack.c.b16 %v3103, %v3100
    %v3185 = vpack.c.b16 %v3107, %v3104
    %v3186 = vpack.c.b16 %v3108, %v3105
    %v3187 = vpack.c.b16 %v3109, %v3106
    %v3188 = vpack.c.b16 %v3113, %v3110
    %v3189 = vpack.c.b16 %v3114, %v3111
    %v3190 = vpack.c.b16 %v3115, %v3112
    %v3191 = vpack.c.b16 %v3119, %v3116
    %v3192 = vpack.c.b16 %v3120, %v3117
    %v3193 = vpack.c.b16 %v3121, %v3118
    %v3194 = vpack.c.b16 %v3125, %v3122
    %v3195 = vpack.c.b16 %v3126, %v3123
    %v3196 = vpack.c.b16 %v3127, %v3124
    %v3197 = vpack.c.b16 %v3131, %v3128
    %v3198 = vpack.c.b16 %v3132, %v3129
    %v3199 = vpack.c.b16 %v3133, %v3130
    %v3200 = vpack.c.b16 %v3137, %v3134
    %v3201 = vpack.c.b16 %v3138, %v3135
    %v3202 = vpack.c.b16 %v3139, %v3136
    %v3203 = vpack.c.b16 %v3143, %v3140
    %v3204 = vpack.c.b16 %v3144, %v3141
    %v3205 = vpack.c.b16 %v3145, %v3142
    %v3206 = vpack.c.b16 %v3149, %v3146
    %v3207 = vpack.c.b16 %v3150, %v3147
    %v3208 = vpack.c.b16 %v3151, %v3148
    %v3209 = vpack.c.b16 %v3155, %v3152
    %v3210 = vpack.c.b16 %v3156, %v3153
    %v3211 = vpack.c.b16 %v3157, %v3154
    %v3212 = vpack.c.b16 %v3161, %v3158
    %v3213 = vpack.c.b16 %v3162, %v3159
    %v3214 = vpack.c.b16 %v3163, %v3160
    %v3215 = vpack.c.b16 %v3167, %v3164
    %v3216 = vpack.c.b16 %v3168, %v3165
    %v3217 = vpack.c.b16 %v3169, %v3166
    %3266 = vmatprep.subr.bf16.mxu0 %v3171
    %3267 = vmatpush1.bf16.msra.mxu0 %v3170
    %3268 = vmatprep.subr.bf16.mxu0 %v3174
    %3269 = vmatpush1.bf16.msra.mxu0 %v3173
    %3270 = vmatprep.subr.bf16.mxu0 %v3177
    %3271 = vmatpush1.bf16.msra.mxu0 %v3176
    %3272 = vmatprep.subr.bf16.mxu0 %v3180
    %3273 = vmatpush1.bf16.msra.mxu0 %v3179
    %3274 = vmatprep.subr.bf16.mxu0 %v3183
    %3275 = vmatpush1.bf16.msra.mxu0 %v3182
    %3276 = vmatprep.subr.bf16.mxu0 %v3186
    %3277 = vmatpush1.bf16.msra.mxu0 %v3185
    %3278 = vmatprep.subr.bf16.mxu0 %v3189
    %3279 = vmatpush1.bf16.msra.mxu0 %v3188
    %3280 = vmatprep.subr.bf16.mxu0 %v3192
    %3281 = vmatpush1.bf16.msra.mxu0 %v3191
    %3282 = vmatprep.subr.bf16.mxu0 %v3195
    %3283 = vmatpush1.bf16.msra.mxu0 %v3194
    %3284 = vmatprep.subr.bf16.mxu0 %v3198
    %3285 = vmatpush1.bf16.msra.mxu0 %v3197
    %3286 = vmatprep.subr.bf16.mxu0 %v3201
    %3287 = vmatpush1.bf16.msra.mxu0 %v3200
    %3288 = vmatprep.subr.bf16.mxu0 %v3204
    %3289 = vmatpush1.bf16.msra.mxu0 %v3203
    %3290 = vmatprep.subr.bf16.mxu0 %v3207
    %3291 = vmatpush1.bf16.msra.mxu0 %v3206
    %3292 = vmatprep.subr.bf16.mxu0 %v3210
    %3293 = vmatpush1.bf16.msra.mxu0 %v3209
    %3294 = vmatprep.subr.bf16.mxu0 %v3213
    %3295 = vmatpush1.bf16.msra.mxu0 %v3212
    %3296 = vmatprep.subr.bf16.mxu0 %v3216
    %3297 = vmatpush1.bf16.msra.mxu0 %v3215
    %3298 = vmatprep.mubr.bf16.mxu0 %v2945
    %3299 = vmatmul.mubr.bf16.gmra.mrb[0].mxu0 %v2944
    %v3300 = vpop.f32.mrb[0].mxu0
    %v3301 = vadd.f32 0.0, %v3300
    %v3302 = vpop.f32.mrb[0].mxu0
    %v3303 = vadd.f32 0.0, %v3302
    %v3304 = vpop.f32.mrb[0].mxu0
    %v3305 = vpop.f32.mrb[0].mxu0
    %3306 = vdwg.mxu0
    %3307 = vmatprep.subr.bf16.mxu0 0
    %3308 = vmatpush1.bf16.msra.mxu0 %v3172
    %3309 = vmatprep.subr.bf16.mxu0 0
    %3310 = vmatpush1.bf16.msra.mxu0 %v3175
    %3311 = vmatprep.subr.bf16.mxu0 0
    %3312 = vmatpush1.bf16.msra.mxu0 %v3178
    %3313 = vmatprep.subr.bf16.mxu0 0
    %3314 = vmatpush1.bf16.msra.mxu0 %v3181
    %3315 = vmatprep.subr.bf16.mxu0 0
    %3316 = vmatpush1.bf16.msra.mxu0 %v3184
    %3317 = vmatprep.subr.bf16.mxu0 0
    %3318 = vmatpush1.bf16.msra.mxu0 %v3187
    %3319 = vmatprep.subr.bf16.mxu0 0
    %3320 = vmatpush1.bf16.msra.mxu0 %v3190
    %3321 = vmatprep.subr.bf16.mxu0 0
    %3322 = vmatpush1.bf16.msra.mxu0 %v3193
    %3323 = vmatprep.subr.bf16.mxu0 0
    %3324 = vmatpush1.bf16.msra.mxu0 %v3196
    %3325 = vmatprep.subr.bf16.mxu0 0
    %3326 = vmatpush1.bf16.msra.mxu0 %v3199
    %3327 = vmatprep.subr.bf16.mxu0 0
    %3328 = vmatpush1.bf16.msra.mxu0 %v3202
    %3329 = vmatprep.subr.bf16.mxu0 0
    %3330 = vmatpush1.bf16.msra.mxu0 %v3205
    %3331 = vmatprep.subr.bf16.mxu0 0
    %3332 = vmatpush1.bf16.msra.mxu0 %v3208
    %3333 = vmatprep.subr.bf16.mxu0 0
    %3334 = vmatpush1.bf16.msra.mxu0 %v3211
    %3335 = vmatprep.subr.bf16.mxu0 0
    %3336 = vmatpush1.bf16.msra.mxu0 %v3214
    %3337 = vmatprep.subr.bf16.mxu0 0
    %3338 = vmatpush1.bf16.msra.mxu0 %v3217
    %3339 = vmatprep.mubr.bf16.mxu0 %v2945
    %3340 = vmatmul.mubr.bf16.gmra.mrb[0].mxu0 %v2944
    %v3341 = vpop.f32.mrb[0].mxu0
    %v3342 = vadd.f32 0.0, %v3341
    %v3343 = vpop.f32.mrb[0].mxu0
    %v3344 = vpop.f32.mrb[0].mxu0
    %v3345 = vpop.f32.mrb[0].mxu0
    %3346 = vdwg.mxu0
    %v3348 = vrot.slane %v3303, 4
    %v3350 = vsel %vm1332, %v3301, %v3348
    %v3351 = vld [vmem:[#allocation5 + $0x6f0] sm:$0xf]
    %v3352 = vld [vmem:[#allocation5 + $0x6fc] sm:$0x1]
    %v3353 = vpack.c.bf16 %v3342, %v3350
    %v3354 = vld [vmem:[#allocation5 + $0x708] sm:$0xf]
    %v3355 = vld [vmem:[#allocation5 + $0x714] sm:$0xf]
    %v3356 = vld [vmem:[#allocation5 + $0x720] sm:$0xf]
    %v3357 = vld [vmem:[#allocation5 + $0x72c] sm:$0xf]
    %v3358 = vld [vmem:[#allocation7 + $0x600] ss:$0 sm:$0xff]
    %v3363 = vunpack.c.l.b16 %v3354
    %v3364 = vunpack.c.l.b16 %v3355
    %v3365 = vunpack.c.l.b16 %v3356
    %v3366 = vunpack.c.l.b16 %v3357
    %v3367 = vpack.c.b16 %v3364, %v3363
    %v3368 = vpack.c.b16 %v3366, %v3365
    %3371 = vmatprep.subr.bf16.mxu0 0
    %3372 = vmatpush1.bf16.msra.mxu0 %v3367
    %3373 = vmatprep.subr.bf16.mxu0 0
    %3374 = vmatpush1.bf16.msra.mxu0 %v3368
    %3375 = vmatprep.subr.bf16.mxu0 0
    %3376 = vmatpush1.bf16.msra.mxu0 0
    %3377 = vmatprep.subr.bf16.mxu0 0
    %3378 = vmatpush1.bf16.msra.mxu0 0
    %3379 = vmatprep.subr.bf16.mxu0 0
    %3380 = vmatpush1.bf16.msra.mxu0 0
    %3381 = vmatprep.subr.bf16.mxu0 0
    %3382 = vmatpush1.bf16.msra.mxu0 0
    %3383 = vmatprep.subr.bf16.mxu0 0
    %3384 = vmatpush1.bf16.msra.mxu0 0
    %3385 = vmatprep.subr.bf16.mxu0 0
    %3386 = vmatpush1.bf16.msra.mxu0 0
    %3387 = vmatprep.subr.bf16.mxu0 0
    %3388 = vmatpush1.bf16.msra.mxu0 0
    %3389 = vmatprep.subr.bf16.mxu0 0
    %3390 = vmatpush1.bf16.msra.mxu0 0
    %3391 = vmatprep.subr.bf16.mxu0 0
    %3392 = vmatpush1.bf16.msra.mxu0 0
    %3393 = vmatprep.subr.bf16.mxu0 0
    %3394 = vmatpush1.bf16.msra.mxu0 0
    %3395 = vmatprep.subr.bf16.mxu0 0
    %3396 = vmatpush1.bf16.msra.mxu0 0
    %3397 = vmatprep.subr.bf16.mxu0 0
    %3398 = vmatpush1.bf16.msra.mxu0 0
    %3399 = vmatprep.subr.bf16.mxu0 0
    %3400 = vmatpush1.bf16.msra.mxu0 0
    %3401 = vmatprep.subr.bf16.mxu0 0
    %3402 = vmatpush1.bf16.msra.mxu0 0
    %3403 = vmatprep.mubr.bf16.mxu0 0
    %3404 = vmatmul.mubr.bf16.gmra.mrb[0].mxu0 %v766
    %v3405 = vpop.f32.mrb[0].mxu0
    %v3406 = vadd.f32 %v3358, %v3405
    %v3407 = vpop.f32.mrb[0].mxu0
    %v3408 = vpop.f32.mrb[0].mxu0
    %v3409 = vpop.f32.mrb[0].mxu0
    %3410 = vdwg.mxu0
    %v3411 = vlaneseq
    %v3412 = vshrl.u32 %v3411, 7
    %v3413 = vsub.s32 0, %v3412
    %v3414 = vrot.slane %v3406, %v3413
    %v3415 = vlaneseq
    %v3416 = vshrl.u32 %v3415, 7
    %v3417 = vsub.s32 1, %v3416
    %v3418 = vrot.slane %v3406, %v3417
    %v3419 = vsel %vm1807, %v3414, %v3418
    %v3422 = vunpack.c.l.b16 %v3351
    %v3423 = vunpack.c.l.b16 %v3352
    %v3424 = vpack.c.b16 %v3423, %v3422
    %vm3425 = vcmask 97280
    %v3427 = vsel %vm3425, %v3424, 0
    %v3430 = vsel %vm649, %v3353, 0
    %3432 = vmatprep.subr.bf16.mxu0 0
    %3433 = vmatpush1.bf16.msra.mxu0 %v3430
    %3434 = vmatprep.subr.bf16.mxu0 0
    %3435 = vmatpush1.bf16.msra.mxu0 0
    %3436 = vmatprep.subr.bf16.mxu0 0
    %3437 = vmatpush1.bf16.msra.mxu0 0
    %3438 = vmatprep.subr.bf16.mxu0 0
    %3439 = vmatpush1.bf16.msra.mxu0 0
    %3440 = vmatprep.subr.bf16.mxu0 0
    %3441 = vmatpush1.bf16.msra.mxu0 0
    %3442 = vmatprep.subr.bf16.mxu0 0
    %3443 = vmatpush1.bf16.msra.mxu0 0
    %3444 = vmatprep.subr.bf16.mxu0 0
    %3445 = vmatpush1.bf16.msra.mxu0 0
    %3446 = vmatprep.subr.bf16.mxu0 0
    %3447 = vmatpush1.bf16.msra.mxu0 0
    %3448 = vmatprep.subr.bf16.mxu0 0
    %3449 = vmatpush1.bf16.msra.mxu0 0
    %3450 = vmatprep.subr.bf16.mxu0 0
    %3451 = vmatpush1.bf16.msra.mxu0 0
    %3452 = vmatprep.subr.bf16.mxu0 0
    %3453 = vmatpush1.bf16.msra.mxu0 0
    %3454 = vmatprep.subr.bf16.mxu0 0
    %3455 = vmatpush1.bf16.msra.mxu0 0
    %3456 = vmatprep.subr.bf16.mxu0 0
    %3457 = vmatpush1.bf16.msra.mxu0 0
    %3458 = vmatprep.subr.bf16.mxu0 0
    %3459 = vmatpush1.bf16.msra.mxu0 0
    %3460 = vmatprep.subr.bf16.mxu0 0
    %3461 = vmatpush1.bf16.msra.mxu0 0
    %3462 = vmatprep.subr.bf16.mxu0 0
    %3463 = vmatpush1.bf16.msra.mxu0 0
    %3464 = vmatprep.mubr.bf16.mxu0 0
    %3465 = vmatmul.mubr.bf16.gmra.mrb[0].mxu0 %v3427
    %v3466 = vpop.f32.mrb[0].mxu0
    %v3467 = vadd.f32 %v3419, %v3466
    %v3468 = vpop.f32.mrb[0].mxu0
    %v3469 = vpop.f32.mrb[0].mxu0
    %v3470 = vadd.f32 %v3418, %v3469
    %v3471 = vpop.f32.mrb[0].mxu0
    %3472 = vdwg.mxu0
    %v3473 = vsel %vm1807, %v3467, 0.0
    %v3474 = vrot.slane %v3473, 4
    %v3475 = vadd.f32 %v3473, %v3474
    %v3476 = vrot.slane %v3475, 2
    %v3477 = vadd.f32 %v3475, %v3476
    %v3478 = vrot.slane %v3477, 1
    %v3479 = vadd.f32 %v3477, %v3478
    %v3480 = vmul.f32 %v3467, %v3467
    %v3481 = vsel %vm1807, %v3480, 0.0
    %v3482 = vrot.slane %v3481, 4
    %v3483 = vadd.f32 %v3481, %v3482
    %v3484 = vrot.slane %v3483, 2
    %v3485 = vadd.f32 %v3483, %v3484
    %v3486 = vrot.slane %v3485, 1
    %v3487 = vadd.f32 %v3485, %v3486
    %v3490 = vrot.slane %v3467, 5
    %v3491 = vrot.slane %v3470, 5
    %v3492 = vsel %vm917, %v3490, %v3491
    %v3494 = vsel %vm1807, %v3492, 0.0
    %v3495 = vrot.slane %v3494, 4
    %v3496 = vadd.f32 %v3494, %v3495
    %v3497 = vrot.slane %v3496, 2
    %v3498 = vadd.f32 %v3496, %v3497
    %v3499 = vrot.slane %v3498, 1
    %v3500 = vadd.f32 %v3498, %v3499
    %v3501 = vmul.f32 %v3470, %v3470
    %v3504 = vrot.slane %v3480, 5
    %v3505 = vrot.slane %v3501, 5
    %v3506 = vsel %vm917, %v3504, %v3505
    %v3508 = vsel %vm1807, %v3506, 0.0
    %v3509 = vrot.slane %v3508, 4
    %v3510 = vadd.f32 %v3508, %v3509
    %v3511 = vrot.slane %v3510, 2
    %v3512 = vadd.f32 %v3510, %v3511
    %v3513 = vrot.slane %v3512, 1
    %v3514 = vadd.f32 %v3512, %v3513
    %v3515 = vsel %vm914, %v3479, %v3500
    %v3516 = vsel %vm735, %v3515, %v3487
    %v3517 = vsel %vm917, %v3516, %v3514
    %v3518 = vld [vmem:[#allocation7 + $0x630] sm:$0xff]
    %v3519 = vld [vmem:[#allocation7 + $0x640] sm:$0xff]
    %v3520 = vld [vmem:[#allocation7 + $0x650] sm:$0xff]
    %v3521 = vld [vmem:[#allocation7 + $0x660] sm:$0xff]
    %v3522 = vld [vmem:[#allocation7 + $0x670] sm:$0xff]
    %v3523 = vld [vmem:[#allocation7 + $0x680] sm:$0xff]
    %v3524 = vld [vmem:[#allocation7 + $0x690] sm:$0xff]
    %v3525 = vld [vmem:[#allocation7 + $0x6a0] sm:$0xff]
    %v3526 = vld [vmem:[#allocation7 + $0x6b0] sm:$0xff]
    %v3527 = vld [vmem:[#allocation7 + $0x6c0] sm:$0xff]
    %v3528 = vld [vmem:[#allocation7 + $0x6d0] sm:$0xff]
    %v3529 = vld [vmem:[#allocation7 + $0x6e0] sm:$0xff]
    %v3530 = vld [vmem:[#allocation7 + $0x6f0] sm:$0xff]
    %v3531 = vld [vmem:[#allocation7 + $0x700] sm:$0xff]
    %v3532 = vld [vmem:[#allocation7 + $0x710] sm:$0xff]
    %v3533 = vld [vmem:[#allocation7 + $0x720] sm:$0xff]
    %3534 = vmatprep.subr.mxu0 0.0
    %3535 = vmatpush1.msra.mxu0 %v3518
    %3536 = vmatprep.subr.mxu0 0.0
    %3537 = vmatpush1.msra.mxu0 %v3519
    %3538 = vmatprep.subr.mxu0 0.0
    %3539 = vmatpush1.msra.mxu0 %v3520
    %3540 = vmatprep.subr.mxu0 0.0
    %3541 = vmatpush1.msra.mxu0 %v3521
    %3542 = vmatprep.subr.mxu0 0.0
    %3543 = vmatpush1.msra.mxu0 %v3522
    %3544 = vmatprep.subr.mxu0 0.0
    %3545 = vmatpush1.msra.mxu0 %v3523
    %3546 = vmatprep.subr.mxu0 0.0
    %3547 = vmatpush1.msra.mxu0 %v3524
    %3548 = vmatprep.subr.mxu0 0.0
    %3549 = vmatpush1.msra.mxu0 %v3525
    %3550 = vmatprep.subr.mxu0 0.0
    %3551 = vmatpush1.msra.mxu0 %v3526
    %3552 = vmatprep.subr.mxu0 0.0
    %3553 = vmatpush1.msra.mxu0 %v3527
    %3554 = vmatprep.subr.mxu0 0.0
    %3555 = vmatpush1.msra.mxu0 %v3528
    %3556 = vmatprep.subr.mxu0 0.0
    %3557 = vmatpush1.msra.mxu0 %v3529
    %3558 = vmatprep.subr.mxu0 0.0
    %3559 = vmatpush1.msra.mxu0 %v3530
    %3560 = vmatprep.subr.mxu0 0.0
    %3561 = vmatpush1.msra.mxu0 %v3531
    %3562 = vmatprep.subr.mxu0 0.0
    %3563 = vmatpush1.msra.mxu0 %v3532
    %3564 = vmatprep.subr.mxu0 0.0
    %3565 = vmatpush1.msra.mxu0 %v3533
    %3566 = vmatprep.subr.mxu0 0.0
    %3567 = vmatpush1.msra.mxu0 0.0
    %3568 = vmatprep.subr.mxu0 0.0
    %3569 = vmatpush1.msra.mxu0 0.0
    %3570 = vmatprep.subr.mxu0 0.0
    %3571 = vmatpush1.msra.mxu0 0.0
    %3572 = vmatprep.subr.mxu0 0.0
    %3573 = vmatpush1.msra.mxu0 0.0
    %3574 = vmatprep.subr.mxu0 0.0
    %3575 = vmatpush1.msra.mxu0 0.0
    %3576 = vmatprep.subr.mxu0 0.0
    %3577 = vmatpush1.msra.mxu0 0.0
    %3578 = vmatprep.subr.mxu0 0.0
    %3579 = vmatpush1.msra.mxu0 0.0
    %3580 = vmatprep.subr.mxu0 0.0
    %3581 = vmatpush1.msra.mxu0 0.0
    %3582 = vmatprep.subr.mxu0 0.0
    %3583 = vmatpush1.msra.mxu0 0.0
    %3584 = vmatprep.subr.mxu0 0.0
    %3585 = vmatpush1.msra.mxu0 0.0
    %3586 = vmatprep.subr.mxu0 0.0
    %3587 = vmatpush1.msra.mxu0 0.0
    %3588 = vmatprep.subr.mxu0 0.0
    %3589 = vmatpush1.msra.mxu0 0.0
    %3590 = vmatprep.subr.mxu0 0.0
    %3591 = vmatpush1.msra.mxu0 0.0
    %3592 = vmatprep.subr.mxu0 0.0
    %3593 = vmatpush1.msra.mxu0 0.0
    %3594 = vmatprep.subr.mxu0 0.0
    %3595 = vmatpush1.msra.mxu0 0.0
    %3596 = vmatprep.subr.mxu0 0.0
    %3597 = vmatpush1.msra.mxu0 0.0
    %3598 = vmatprep.mubr.f32.mxu0 0.0
    %3599 = vmatmul.mubr.f32.gmra.mrb[0].mxu0 %v3517
    %v3600 = vpop.f32.mrb[0].mxu0
    %v3601 = vadd.f32 0.0, %v3600
    %v3602 = vpop.f32.mrb[0].mxu0
    %3603 = vdwg.mxu0
    %v3604 = vmul.f32 %v3601, 0.05
    %v3605 = vmul.f32 %v3604, %v3604
    %v3607 = vrot.slane %v3605, 6
    %v3609 = vsub.f32 %v3604, %v3607
    %v3610 = vmax.f32 %v3609, 0.0
    %v3611 = vlaneseq
    %v3612 = vshrl.u32 %v3611, 7
    %v3613 = vsub.s32 0, %v3612
    %v3614 = vrot.slane %v3604, %v3613
    %v3615 = vlaneseq
    %v3616 = vshrl.u32 %v3615, 7
    %v3617 = vsub.s32 1, %v3616
    %v3618 = vrot.slane %v3604, %v3617
    %v3619 = vsel %vm1807, %v3614, %v3618
    %v3620 = vadd.f32 %v3610, 1e-05
    %v3621 = vrsqrt.pop %v3620
    %v3622 = vlaneseq
    %v3623 = vshrl.u32 %v3622, 7
    %v3624 = vsub.s32 2, %v3623
    %v3625 = vrot.slane %v3621, %v3624
    %v3626 = vlaneseq
    %v3627 = vshrl.u32 %v3626, 7
    %v3628 = vsub.s32 3, %v3627
    %v3629 = vrot.slane %v3621, %v3628
    %v3630 = vsel %vm1807, %v3625, %v3629
    %v3631 = vsub.f32 %v3467, %v3619
    %v3632 = vsub.f32 %v3470, %v3618
    %v3633 = vmul.f32 %v3631, %v3630
    %v3634 = vmul.f32 %v3632, %v3629
    %v3635 = vld [vmem:[#allocation7 + $0x610] ss:$0 sm:$0xff]
    %v3636 = vmul.f32 %v3633, %v3635
    %v3637 = vmul.f32 %v3634, %v3635
    %v3638 = vld [vmem:[#allocation7 + $0x620] ss:$0 sm:$0xff]
    %v3639 = vadd.f32 %v3636, %v3638
    %v3640 = vadd.f32 %v3637, %v3638
    %v3641 = vsub.f32 0.0, %v3639
    %v3642 = vsub.f32 0.0, %v3640
    %v3643 = vmul.f32 %v3641, 1.442695
    %v3644 = vpow.pop %v3643
    %v3645 = vmul.f32 %v3642, 1.442695
    %v3646 = vpow.pop %v3645
    %v3647 = vadd.f32 %v3644, 1.0
    %v3648 = vadd.f32 %v3646, 1.0
    %v3649 = vrcp.pop %v3647
    %v3650 = vrcp.pop %v3648
    %v3651 = vmul.f32 %v3639, %v3649
    %v3652 = vmul.f32 %v3640, %v3650
    %v3653 = vpack.c.bf16 %v3652, %v3651
    %v3654 = vld [vmem:[#allocation5 + $0x738] sm:$0xff]
    %v3655 = vld [vmem:[#allocation5 + $0x744] sm:$0xff]
    %v3656 = vld [vmem:[#allocation5 + $0x750] sm:$0xff]
    %v3657 = vld [vmem:[#allocation5 + $0x75c] sm:$0xff]
    %v3658 = vld [vmem:[#allocation5 + $0x768] sm:$0xff]
    %v3659 = vld [vmem:[#allocation5 + $0x774] sm:$0xff]
    %v3660 = vld [vmem:[#allocation5 + $0x780] sm:$0xff]
    %v3661 = vld [vmem:[#allocation5 + $0x78c] sm:$0xff]
    %v3662 = vld [vmem:[#allocation5 + $0x798] sm:$0xff]
    %v3663 = vld [vmem:[#allocation5 + $0x7a4] sm:$0xff]
    %v3664 = vld [vmem:[#allocation5 + $0x7b0] sm:$0xff]
    %v3665 = vld [vmem:[#allocation5 + $0x7bc] sm:$0xff]
    %v3666 = vld [vmem:[#allocation5 + $0x7c8] sm:$0xff]
    %v3667 = vld [vmem:[#allocation5 + $0x7d4] sm:$0xff]
    %v3668 = vld [vmem:[#allocation5 + $0x7e0] sm:$0xff]
    %v3669 = vld [vmem:[#allocation5 + $0x7ec] sm:$0xff]
    %v3670 = vld [vmem:[#allocation5 + $0x7f8] sm:$0xff]
    %v3671 = vld [vmem:[#allocation5 + $0x804] sm:$0xff]
    %v3672 = vld [vmem:[#allocation5 + $0x810] sm:$0xff]
    %v3673 = vld [vmem:[#allocation5 + $0x81c] sm:$0xff]
    %v3674 = vld [vmem:[#allocation5 + $0x828] sm:$0xff]
    %v3675 = vld [vmem:[#allocation5 + $0x834] sm:$0xff]
    %v3676 = vld [vmem:[#allocation5 + $0x840] sm:$0xff]
    %v3677 = vld [vmem:[#allocation5 + $0x84c] sm:$0xff]
    %v3678 = vld [vmem:[#allocation5 + $0x858] sm:$0xff]
    %v3679 = vld [vmem:[#allocation5 + $0x864] sm:$0xff]
    %v3680 = vld [vmem:[#allocation5 + $0x870] sm:$0xff]
    %v3681 = vld [vmem:[#allocation5 + $0x87c] sm:$0xff]
    %v3682 = vld [vmem:[#allocation5 + $0x888] sm:$0xff]
    %v3683 = vld [vmem:[#allocation5 + $0x894] sm:$0xff]
    %v3684 = vld [vmem:[#allocation5 + $0x8a0] sm:$0xff]
    %v3685 = vld [vmem:[#allocation5 + $0x8ac] sm:$0xff]
    %v3718 = vunpack.c.l.b16 %v3654
    %v3719 = vunpack.c.h.b16 %v3654
    %v3720 = vunpack.c.l.b16 %v3655
    %v3721 = vunpack.c.h.b16 %v3655
    %v3722 = vunpack.c.l.b16 %v3656
    %v3723 = vunpack.c.h.b16 %v3656
    %v3724 = vunpack.c.l.b16 %v3657
    %v3725 = vunpack.c.h.b16 %v3657
    %v3726 = vunpack.c.l.b16 %v3658
    %v3727 = vunpack.c.h.b16 %v3658
    %v3728 = vunpack.c.l.b16 %v3659
    %v3729 = vunpack.c.h.b16 %v3659
    %v3730 = vunpack.c.l.b16 %v3660
    %v3731 = vunpack.c.h.b16 %v3660
    %v3732 = vunpack.c.l.b16 %v3661
    %v3733 = vunpack.c.h.b16 %v3661
    %v3734 = vunpack.c.l.b16 %v3662
    %v3735 = vunpack.c.h.b16 %v3662
    %v3736 = vunpack.c.l.b16 %v3663
    %v3737 = vunpack.c.h.b16 %v3663
    %v3738 = vunpack.c.l.b16 %v3664
    %v3739 = vunpack.c.h.b16 %v3664
    %v3740 = vunpack.c.l.b16 %v3665
    %v3741 = vunpack.c.h.b16 %v3665
    %v3742 = vunpack.c.l.b16 %v3666
    %v3743 = vunpack.c.h.b16 %v3666
    %v3744 = vunpack.c.l.b16 %v3667
    %v3745 = vunpack.c.h.b16 %v3667
    %v3746 = vunpack.c.l.b16 %v3668
    %v3747 = vunpack.c.h.b16 %v3668
    %v3748 = vunpack.c.l.b16 %v3669
    %v3749 = vunpack.c.h.b16 %v3669
    %v3750 = vunpack.c.l.b16 %v3670
    %v3751 = vunpack.c.h.b16 %v3670
    %v3752 = vunpack.c.l.b16 %v3671
    %v3753 = vunpack.c.h.b16 %v3671
    %v3754 = vunpack.c.l.b16 %v3672
    %v3755 = vunpack.c.h.b16 %v3672
    %v3756 = vunpack.c.l.b16 %v3673
    %v3757 = vunpack.c.h.b16 %v3673
    %v3758 = vunpack.c.l.b16 %v3674
    %v3759 = vunpack.c.h.b16 %v3674
    %v3760 = vunpack.c.l.b16 %v3675
    %v3761 = vunpack.c.h.b16 %v3675
    %v3762 = vunpack.c.l.b16 %v3676
    %v3763 = vunpack.c.h.b16 %v3676
    %v3764 = vunpack.c.l.b16 %v3677
    %v3765 = vunpack.c.h.b16 %v3677
    %v3766 = vunpack.c.l.b16 %v3678
    %v3767 = vunpack.c.h.b16 %v3678
    %v3768 = vunpack.c.l.b16 %v3679
    %v3769 = vunpack.c.h.b16 %v3679
    %v3770 = vunpack.c.l.b16 %v3680
    %v3771 = vunpack.c.h.b16 %v3680
    %v3772 = vunpack.c.l.b16 %v3681
    %v3773 = vunpack.c.h.b16 %v3681
    %v3774 = vunpack.c.l.b16 %v3682
    %v3775 = vunpack.c.h.b16 %v3682
    %v3776 = vunpack.c.l.b16 %v3683
    %v3777 = vunpack.c.h.b16 %v3683
    %v3778 = vunpack.c.l.b16 %v3684
    %v3779 = vunpack.c.h.b16 %v3684
    %v3780 = vunpack.c.l.b16 %v3685
    %v3781 = vunpack.c.h.b16 %v3685
    %v3782 = vpack.c.b16 %v3720, %v3718
    %v3783 = vpack.c.b16 %v3721, %v3719
    %v3784 = vpack.c.b16 %v3724, %v3722
    %v3785 = vpack.c.b16 %v3725, %v3723
    %v3786 = vpack.c.b16 %v3728, %v3726
    %v3787 = vpack.c.b16 %v3729, %v3727
    %v3788 = vpack.c.b16 %v3732, %v3730
    %v3789 = vpack.c.b16 %v3733, %v3731
    %v3790 = vpack.c.b16 %v3736, %v3734
    %v3791 = vpack.c.b16 %v3737, %v3735
    %v3792 = vpack.c.b16 %v3740, %v3738
    %v3793 = vpack.c.b16 %v3741, %v3739
    %v3794 = vpack.c.b16 %v3744, %v3742
    %v3795 = vpack.c.b16 %v3745, %v3743
    %v3796 = vpack.c.b16 %v3748, %v3746
    %v3797 = vpack.c.b16 %v3749, %v3747
    %v3798 = vpack.c.b16 %v3752, %v3750
    %v3799 = vpack.c.b16 %v3753, %v3751
    %v3800 = vpack.c.b16 %v3756, %v3754
    %v3801 = vpack.c.b16 %v3757, %v3755
    %v3802 = vpack.c.b16 %v3760, %v3758
    %v3803 = vpack.c.b16 %v3761, %v3759
    %v3804 = vpack.c.b16 %v3764, %v3762
    %v3805 = vpack.c.b16 %v3765, %v3763
    %v3806 = vpack.c.b16 %v3768, %v3766
    %v3807 = vpack.c.b16 %v3769, %v3767
    %v3808 = vpack.c.b16 %v3772, %v3770
    %v3809 = vpack.c.b16 %v3773, %v3771
    %v3810 = vpack.c.b16 %v3776, %v3774
    %v3811 = vpack.c.b16 %v3777, %v3775
    %v3812 = vpack.c.b16 %v3780, %v3778
    %v3813 = vpack.c.b16 %v3781, %v3779
    %3846 = vmatprep.subr.bf16.mxu0 %v3783
    %3847 = vmatpush1.bf16.msra.mxu0 %v3782
    %3848 = vmatprep.subr.bf16.mxu0 %v3785
    %3849 = vmatpush1.bf16.msra.mxu0 %v3784
    %3850 = vmatprep.subr.bf16.mxu0 %v3787
    %3851 = vmatpush1.bf16.msra.mxu0 %v3786
    %3852 = vmatprep.subr.bf16.mxu0 %v3789
    %3853 = vmatpush1.bf16.msra.mxu0 %v3788
    %3854 = vmatprep.subr.bf16.mxu0 %v3791
    %3855 = vmatpush1.bf16.msra.mxu0 %v3790
    %3856 = vmatprep.subr.bf16.mxu0 %v3793
    %3857 = vmatpush1.bf16.msra.mxu0 %v3792
    %3858 = vmatprep.subr.bf16.mxu0 %v3795
    %3859 = vmatpush1.bf16.msra.mxu0 %v3794
    %3860 = vmatprep.subr.bf16.mxu0 %v3797
    %3861 = vmatpush1.bf16.msra.mxu0 %v3796
    %3862 = vmatprep.subr.bf16.mxu0 %v3799
    %3863 = vmatpush1.bf16.msra.mxu0 %v3798
    %3864 = vmatprep.subr.bf16.mxu0 %v3801
    %3865 = vmatpush1.bf16.msra.mxu0 %v3800
    %3866 = vmatprep.subr.bf16.mxu0 %v3803
    %3867 = vmatpush1.bf16.msra.mxu0 %v3802
    %3868 = vmatprep.subr.bf16.mxu0 %v3805
    %3869 = vmatpush1.bf16.msra.mxu0 %v3804
    %3870 = vmatprep.subr.bf16.mxu0 %v3807
    %3871 = vmatpush1.bf16.msra.mxu0 %v3806
    %3872 = vmatprep.subr.bf16.mxu0 %v3809
    %3873 = vmatpush1.bf16.msra.mxu0 %v3808
    %3874 = vmatprep.subr.bf16.mxu0 %v3811
    %3875 = vmatpush1.bf16.msra.mxu0 %v3810
    %3876 = vmatprep.subr.bf16.mxu0 %v3813
    %3877 = vmatpush1.bf16.msra.mxu0 %v3812
    %3878 = vmatprep.mubr.bf16.mxu0 %v2107
    %3879 = vmatmul.mubr.bf16.gmra.mrb[0].mxu0 %v3653
    %v3880 = vpop.f32.mrb[0].mxu0
    %v3881 = vadd.f32 0.0, %v3880
    %v3882 = vpop.f32.mrb[0].mxu0
    %v3883 = vadd.f32 0.0, %v3882
    %v3884 = vpop.f32.mrb[0].mxu0
    %v3885 = vadd.f32 0.0, %v3884
    %v3886 = vpop.f32.mrb[0].mxu0
    %v3887 = vadd.f32 0.0, %v3886
    %3888 = vdwg.mxu0
    %v3891 = vrot.slane %v3881, 6
    %v3892 = vrot.slane %v3885, 6
    %v3893 = vsel %vm735, %v3891, %v3892
    %3894 = vrot.lane.b32.xlu0 %v3891, 64
    %v3895 = vpop.permute.xlu0 %3894
    %3896 = vrot.lane.b32.xlu0 %v3893, 64
    %v3897 = vpop.permute.xlu0 %3896
    %v3902 = vrot.slane %v3883, 4
    %v3903 = vrot.slane %v3887, 4
    %v3904 = vsel %vm1332, %v3902, %v3903
    %v3907 = vsel %vm735, %v3885, %v3895
    %v3908 = vsel %vm1332, %v3897, %v3902
    %v3909 = vld [vmem:[#allocation5 + $0x8b8] sm:$0xf]
    %v3910 = vld [vmem:[#allocation5 + $0x8c4] sm:$0xf]
    %v3911 = vld [vmem:[#allocation5 + $0x8d0] sm:$0xf]
    %v3912 = vpack.c.bf16 %v3907, %v3881
    %v3913 = vpack.c.bf16 %v3904, %v3908
    %v3914 = vld [vmem:[#allocation5 + $0x8e8] sm:$0xf]
    %v3915 = vld [vmem:[#allocation5 + $0x8f4] sm:$0xf]
    %v3916 = vld [vmem:[#allocation5 + $0x900] sm:$0xf]
    %v3917 = vld [vmem:[#allocation5 + $0x90c] sm:$0xf]
    %v3918 = vld [vmem:[#allocation7 + $0x730] ss:$0 sm:$0xff]
    %v3923 = vunpack.c.l.b16 %v3914
    %v3924 = vunpack.c.l.b16 %v3915
    %v3925 = vunpack.c.l.b16 %v3916
    %v3926 = vunpack.c.l.b16 %v3917
    %v3927 = vpack.c.b16 %v3924, %v3923
    %v3928 = vpack.c.b16 %v3926, %v3925
    %3931 = vmatprep.subr.bf16.mxu0 0
    %3932 = vmatpush1.bf16.msra.mxu0 %v3927
    %3933 = vmatprep.subr.bf16.mxu0 0
    %3934 = vmatpush1.bf16.msra.mxu0 %v3928
    %3935 = vmatprep.subr.bf16.mxu0 0
    %3936 = vmatpush1.bf16.msra.mxu0 0
    %3937 = vmatprep.subr.bf16.mxu0 0
    %3938 = vmatpush1.bf16.msra.mxu0 0
    %3939 = vmatprep.subr.bf16.mxu0 0
    %3940 = vmatpush1.bf16.msra.mxu0 0
    %3941 = vmatprep.subr.bf16.mxu0 0
    %3942 = vmatpush1.bf16.msra.mxu0 0
    %3943 = vmatprep.subr.bf16.mxu0 0
    %3944 = vmatpush1.bf16.msra.mxu0 0
    %3945 = vmatprep.subr.bf16.mxu0 0
    %3946 = vmatpush1.bf16.msra.mxu0 0
    %3947 = vmatprep.subr.bf16.mxu0 0
    %3948 = vmatpush1.bf16.msra.mxu0 0
    %3949 = vmatprep.subr.bf16.mxu0 0
    %3950 = vmatpush1.bf16.msra.mxu0 0
    %3951 = vmatprep.subr.bf16.mxu0 0
    %3952 = vmatpush1.bf16.msra.mxu0 0
    %3953 = vmatprep.subr.bf16.mxu0 0
    %3954 = vmatpush1.bf16.msra.mxu0 0
    %3955 = vmatprep.subr.bf16.mxu0 0
    %3956 = vmatpush1.bf16.msra.mxu0 0
    %3957 = vmatprep.subr.bf16.mxu0 0
    %3958 = vmatpush1.bf16.msra.mxu0 0
    %3959 = vmatprep.subr.bf16.mxu0 0
    %3960 = vmatpush1.bf16.msra.mxu0 0
    %3961 = vmatprep.subr.bf16.mxu0 0
    %3962 = vmatpush1.bf16.msra.mxu0 0
    %3963 = vmatprep.mubr.bf16.mxu0 0
    %3964 = vmatmul.mubr.bf16.gmra.mrb[0].mxu0 %v766
    %v3965 = vpop.f32.mrb[0].mxu0
    %v3966 = vadd.f32 %v3918, %v3965
    %v3967 = vpop.f32.mrb[0].mxu0
    %v3968 = vpop.f32.mrb[0].mxu0
    %v3969 = vpop.f32.mrb[0].mxu0
    %3970 = vdwg.mxu0
    %v3971 = vlaneseq
    %v3972 = vshrl.u32 %v3971, 7
    %v3973 = vsub.s32 0, %v3972
    %v3974 = vrot.slane %v3966, %v3973
    %v3975 = vlaneseq
    %v3976 = vshrl.u32 %v3975, 7
    %v3977 = vsub.s32 1, %v3976
    %v3978 = vrot.slane %v3966, %v3977
    %v3979 = vsel %vm1332, %v3974, %v3978
    %v3983 = vunpack.c.l.b16 %v3909
    %v3984 = vunpack.c.l.b16 %v3910
    %v3985 = vunpack.c.l.b16 %v3911
    %v3986 = vpack.c.b16 %v3984, %v3983
    %v3987 = vpack.c.b16 %v3985, %v3985
    %vm3988 = vcmask 244736
    %v3990 = vsel %vm3988, %v3986, 0
    %v3993 = vsel %vm3988, %v3987, 0
    %v3996 = vsel %vm621, %v3913, 0
    %3998 = vmatprep.subr.bf16.mxu0 0
    %3999 = vmatpush1.bf16.msra.mxu0 %v3912
    %4000 = vmatprep.subr.bf16.mxu0 0
    %4001 = vmatpush1.bf16.msra.mxu0 %v3996
    %4002 = vmatprep.subr.bf16.mxu0 0
    %4003 = vmatpush1.bf16.msra.mxu0 0
    %4004 = vmatprep.subr.bf16.mxu0 0
    %4005 = vmatpush1.bf16.msra.mxu0 0
    %4006 = vmatprep.subr.bf16.mxu0 0
    %4007 = vmatpush1.bf16.msra.mxu0 0
    %4008 = vmatprep.subr.bf16.mxu0 0
    %4009 = vmatpush1.bf16.msra.mxu0 0
    %4010 = vmatprep.subr.bf16.mxu0 0
    %4011 = vmatpush1.bf16.msra.mxu0 0
    %4012 = vmatprep.subr.bf16.mxu0 0
    %4013 = vmatpush1.bf16.msra.mxu0 0
    %4014 = vmatprep.subr.bf16.mxu0 0
    %4015 = vmatpush1.bf16.msra.mxu0 0
    %4016 = vmatprep.subr.bf16.mxu0 0
    %4017 = vmatpush1.bf16.msra.mxu0 0
    %4018 = vmatprep.subr.bf16.mxu0 0
    %4019 = vmatpush1.bf16.msra.mxu0 0
    %4020 = vmatprep.subr.bf16.mxu0 0
    %4021 = vmatpush1.bf16.msra.mxu0 0
    %4022 = vmatprep.subr.bf16.mxu0 0
    %4023 = vmatpush1.bf16.msra.mxu0 0
    %4024 = vmatprep.subr.bf16.mxu0 0
    %4025 = vmatpush1.bf16.msra.mxu0 0
    %4026 = vmatprep.subr.bf16.mxu0 0
    %4027 = vmatpush1.bf16.msra.mxu0 0
    %4028 = vmatprep.subr.bf16.mxu0 0
    %4029 = vmatpush1.bf16.msra.mxu0 0
    %4030 = vmatprep.mubr.bf16.mxu0 0
    %4031 = vmatmul.mubr.bf16.gmra.mrb[0].mxu0 %v3990
    %v4032 = vpop.f32.mrb[0].mxu0
    %v4033 = vadd.f32 %v3974, %v4032
    %v4034 = vpop.f32.mrb[0].mxu0
    %v4035 = vpop.f32.mrb[0].mxu0
    %v4036 = vadd.f32 %v3979, %v4035
    %v4037 = vpop.f32.mrb[0].mxu0
    %4038 = vmatprep.mubr.bf16.mxu0 0
    %4039 = vmatmul.mubr.bf16.gmra.mrb[0].mxu0 %v3993
    %v4040 = vpop.f32.mrb[0].mxu0
    %v4041 = vadd.f32 %v3978, %v4040
    %v4042 = vpop.f32.mrb[0].mxu0
    %v4043 = vpop.f32.mrb[0].mxu0
    %v4044 = vpop.f32.mrb[0].mxu0
    %4045 = vdwg.mxu0
    %v4046 = vsel %vm1249, %v4033, 0.0
    %v4047 = vsel %vm1426, %v4036, 0.0
    %v4048 = vadd.f32 %v4046, %v4047
    %v4049 = vrot.slane %v4048, 4
    %v4050 = vadd.f32 %v4048, %v4049
    %v4051 = vrot.slane %v4050, 2
    %v4052 = vadd.f32 %v4050, %v4051
    %v4053 = vrot.slane %v4052, 1
    %v4054 = vadd.f32 %v4052, %v4053
    %v4055 = vmul.f32 %v4033, %v4033
    %v4056 = vmul.f32 %v4036, %v4036
    %v4057 = vsel %vm1249, %v4055, 0.0
    %v4058 = vsel %vm1426, %v4056, 0.0
    %v4059 = vadd.f32 %v4057, %v4058
    %v4060 = vrot.slane %v4059, 4
    %v4061 = vadd.f32 %v4059, %v4060
    %v4062 = vrot.slane %v4061, 2
    %v4063 = vadd.f32 %v4061, %v4062
    %v4064 = vrot.slane %v4063, 1
    %v4065 = vadd.f32 %v4063, %v4064
    %v4068 = vrot.slane %v4036, 4
    %v4069 = vrot.slane %v4041, 4
    %v4070 = vsel %vm1332, %v4068, %v4069
    %v4073 = vsel %vm1249, %v4070, 0.0
    %v4074 = vsel %vm1426, %v4069, 0.0
    %v4075 = vadd.f32 %v4073, %v4074
    %v4076 = vrot.slane %v4075, 4
    %v4077 = vadd.f32 %v4075, %v4076
    %v4078 = vrot.slane %v4077, 2
    %v4079 = vadd.f32 %v4077, %v4078
    %v4080 = vrot.slane %v4079, 1
    %v4081 = vadd.f32 %v4079, %v4080
    %v4082 = vmul.f32 %v4041, %v4041
    %v4085 = vrot.slane %v4056, 4
    %v4086 = vrot.slane %v4082, 4
    %v4087 = vsel %vm1332, %v4085, %v4086
    %v4090 = vsel %vm1249, %v4087, 0.0
    %v4091 = vsel %vm1426, %v4086, 0.0
    %v4092 = vadd.f32 %v4090, %v4091
    %v4093 = vrot.slane %v4092, 4
    %v4094 = vadd.f32 %v4092, %v4093
    %v4095 = vrot.slane %v4094, 2
    %v4096 = vadd.f32 %v4094, %v4095
    %v4097 = vrot.slane %v4096, 1
    %v4098 = vadd.f32 %v4096, %v4097
    %v4099 = vsel %vm914, %v4054, %v4081
    %v4100 = vsel %vm735, %v4099, %v4065
    %v4101 = vsel %vm917, %v4100, %v4098
    %v4102 = vld [vmem:[#allocation7 + $0x760] sm:$0xff]
    %v4103 = vld [vmem:[#allocation7 + $0x770] sm:$0xff]
    %v4104 = vld [vmem:[#allocation7 + $0x780] sm:$0xff]
    %v4105 = vld [vmem:[#allocation7 + $0x790] sm:$0xff]
    %v4106 = vld [vmem:[#allocation7 + $0x7a0] sm:$0xff]
    %v4107 = vld [vmem:[#allocation7 + $0x7b0] sm:$0xff]
    %v4108 = vld [vmem:[#allocation7 + $0x7c0] sm:$0xff]
    %v4109 = vld [vmem:[#allocation7 + $0x7d0] sm:$0xff]
    %v4111 = vsel %vm1249, %v4101, 0
    %4113 = vmatprep.subr.mxu0 0.0
    %4114 = vmatpush1.msra.mxu0 %v4102
    %4115 = vmatprep.subr.mxu0 0.0
    %4116 = vmatpush1.msra.mxu0 %v4103
    %4117 = vmatprep.subr.mxu0 0.0
    %4118 = vmatpush1.msra.mxu0 %v4104
    %4119 = vmatprep.subr.mxu0 0.0
    %4120 = vmatpush1.msra.mxu0 %v4105
    %4121 = vmatprep.subr.mxu0 0.0
    %4122 = vmatpush1.msra.mxu0 %v4106
    %4123 = vmatprep.subr.mxu0 0.0
    %4124 = vmatpush1.msra.mxu0 %v4107
    %4125 = vmatprep.subr.mxu0 0.0
    %4126 = vmatpush1.msra.mxu0 %v4108
    %4127 = vmatprep.subr.mxu0 0.0
    %4128 = vmatpush1.msra.mxu0 %v4109
    %4129 = vmatprep.subr.mxu0 0.0
    %4130 = vmatpush1.msra.mxu0 0.0
    %4131 = vmatprep.subr.mxu0 0.0
    %4132 = vmatpush1.msra.mxu0 0.0
    %4133 = vmatprep.subr.mxu0 0.0
    %4134 = vmatpush1.msra.mxu0 0.0
    %4135 = vmatprep.subr.mxu0 0.0
    %4136 = vmatpush1.msra.mxu0 0.0
    %4137 = vmatprep.subr.mxu0 0.0
    %4138 = vmatpush1.msra.mxu0 0.0
    %4139 = vmatprep.subr.mxu0 0.0
    %4140 = vmatpush1.msra.mxu0 0.0
    %4141 = vmatprep.subr.mxu0 0.0
    %4142 = vmatpush1.msra.mxu0 0.0
    %4143 = vmatprep.subr.mxu0 0.0
    %4144 = vmatpush1.msra.mxu0 0.0
    %4145 = vmatprep.subr.mxu0 0.0
    %4146 = vmatpush1.msra.mxu0 0.0
    %4147 = vmatprep.subr.mxu0 0.0
    %4148 = vmatpush1.msra.mxu0 0.0
    %4149 = vmatprep.subr.mxu0 0.0
    %4150 = vmatpush1.msra.mxu0 0.0
    %4151 = vmatprep.subr.mxu0 0.0
    %4152 = vmatpush1.msra.mxu0 0.0
    %4153 = vmatprep.subr.mxu0 0.0
    %4154 = vmatpush1.msra.mxu0 0.0
    %4155 = vmatprep.subr.mxu0 0.0
    %4156 = vmatpush1.msra.mxu0 0.0
    %4157 = vmatprep.subr.mxu0 0.0
    %4158 = vmatpush1.msra.mxu0 0.0
    %4159 = vmatprep.subr.mxu0 0.0
    %4160 = vmatpush1.msra.mxu0 0.0
    %4161 = vmatprep.subr.mxu0 0.0
    %4162 = vmatpush1.msra.mxu0 0.0
    %4163 = vmatprep.subr.mxu0 0.0
    %4164 = vmatpush1.msra.mxu0 0.0
    %4165 = vmatprep.subr.mxu0 0.0
    %4166 = vmatpush1.msra.mxu0 0.0
    %4167 = vmatprep.subr.mxu0 0.0
    %4168 = vmatpush1.msra.mxu0 0.0
    %4169 = vmatprep.subr.mxu0 0.0
    %4170 = vmatpush1.msra.mxu0 0.0
    %4171 = vmatprep.subr.mxu0 0.0
    %4172 = vmatpush1.msra.mxu0 0.0
    %4173 = vmatprep.subr.mxu0 0.0
    %4174 = vmatpush1.msra.mxu0 0.0
    %4175 = vmatprep.subr.mxu0 0.0
    %4176 = vmatpush1.msra.mxu0 0.0
    %4177 = vmatprep.mubr.f32.mxu0 0.0
    %4178 = vmatmul.mubr.f32.gmra.mrb[0].mxu0 %v4111
    %v4179 = vpop.f32.mrb[0].mxu0
    %v4180 = vadd.f32 0.0, %v4179
    %v4181 = vpop.f32.mrb[0].mxu0
    %4182 = vdwg.mxu0
    %v4183 = vmul.f32 %v4180, 0.041666668
    %v4184 = vmul.f32 %v4183, %v4183
    %v4186 = vrot.slane %v4184, 6
    %v4188 = vsub.f32 %v4183, %v4186
    %v4189 = vmax.f32 %v4188, 0.0
    %v4190 = vlaneseq
    %v4191 = vshrl.u32 %v4190, 7
    %v4192 = vsub.s32 0, %v4191
    %v4193 = vrot.slane %v4183, %v4192
    %v4194 = vlaneseq
    %v4195 = vshrl.u32 %v4194, 7
    %v4196 = vsub.s32 1, %v4195
    %v4197 = vrot.slane %v4183, %v4196
    %v4198 = vsel %vm1332, %v4193, %v4197
    %v4199 = vadd.f32 %v4189, 1e-05
    %v4200 = vrsqrt.pop %v4199
    %v4201 = vlaneseq
    %v4202 = vshrl.u32 %v4201, 7
    %v4203 = vsub.s32 2, %v4202
    %v4204 = vrot.slane %v4200, %v4203
    %v4205 = vlaneseq
    %v4206 = vshrl.u32 %v4205, 7
    %v4207 = vsub.s32 3, %v4206
    %v4208 = vrot.slane %v4200, %v4207
    %v4209 = vsel %vm1332, %v4204, %v4208
    %v4210 = vsub.f32 %v4033, %v4193
    %v4211 = vsub.f32 %v4036, %v4198
    %v4212 = vsub.f32 %v4041, %v4197
    %v4213 = vmul.f32 %v4210, %v4204
    %v4214 = vmul.f32 %v4211, %v4209
    %v4215 = vmul.f32 %v4212, %v4208
    %v4216 = vld [vmem:[#allocation7 + $0x740] ss:$0 sm:$0xff]
    %v4217 = vmul.f32 %v4213, %v4216
    %v4218 = vmul.f32 %v4214, %v4216
    %v4219 = vmul.f32 %v4215, %v4216
    %v4220 = vld [vmem:[#allocation7 + $0x750] ss:$0 sm:$0xff]
    %v4221 = vadd.f32 %v4217, %v4220
    %v4222 = vadd.f32 %v4218, %v4220
    %v4223 = vadd.f32 %v4219, %v4220
    %v4224 = vsub.f32 0.0, %v4221
    %v4225 = vsub.f32 0.0, %v4222
    %v4226 = vsub.f32 0.0, %v4223
    %v4227 = vmul.f32 %v4224, 1.442695
    %v4228 = vpow.pop %v4227
    %v4229 = vmul.f32 %v4225, 1.442695
    %v4230 = vpow.pop %v4229
    %v4231 = vmul.f32 %v4226, 1.442695
    %v4232 = vpow.pop %v4231
    %v4233 = vadd.f32 %v4228, 1.0
    %v4234 = vadd.f32 %v4230, 1.0
    %v4235 = vadd.f32 %v4232, 1.0
    %v4236 = vrcp.pop %v4233
    %v4237 = vrcp.pop %v4234
    %v4238 = vrcp.pop %v4235
    %v4239 = vmul.f32 %v4221, %v4236
    %v4240 = vmul.f32 %v4222, %v4237
    %v4241 = vmul.f32 %v4223, %v4238
    %4245 = vrot.lane.b32.xlu0 %v1619, 64
    %v4246 = vpop.permute.xlu0 %4245
    %4247 = vrot.lane.b32.xlu0 %v1620, 64
    %v4248 = vpop.permute.xlu0 %4247
    %4249 = vrot.lane.b32.xlu0 %v1621, 64
    %v4250 = vpop.permute.xlu0 %4249
    %v4254 = vsel %vm1249, %v4239, %v4246
    %v4255 = vsel %vm1249, %v4240, %v4248
    %v4256 = vsel %vm1249, %v4241, %v4250
    %v4257 = vpack.c.bf16 %v4255, %v4254
    %v4258 = vpack.c.bf16 %v4256, %v4256
    %v4259 = vld [vmem:[#allocation5 + $0x918] sm:$0xf]
    %v4260 = vld [vmem:[#allocation5 + $0x924] sm:$0xf]
    %v4261 = vld [vmem:[#allocation5 + $0x930] sm:$0xf]
    %v4262 = vld [vmem:[#allocation5 + $0x93c] sm:$0xf]
    %v4263 = vld [vmem:[#allocation5 + $0x948] sm:$0xf]
    %v4264 = vld [vmem:[#allocation5 + $0x954] sm:$0xf]
    %v4265 = vld [vmem:[#allocation5 + $0x960] sm:$0xf]
    %v4266 = vld [vmem:[#allocation5 + $0x96c] sm:$0xf]
    %v4267 = vld [vmem:[#allocation5 + $0x978] sm:$0xf]
    %v4268 = vld [vmem:[#allocation5 + $0x984] sm:$0xf]
    %v4269 = vld [vmem:[#allocation5 + $0x990] sm:$0xf]
    %v4270 = vld [vmem:[#allocation5 + $0x99c] sm:$0xf]
    %v4271 = vld [vmem:[#allocation5 + $0x9a8] sm:$0xf]
    %v4272 = vld [vmem:[#allocation5 + $0x9b4] sm:$0xf]
    %v4273 = vld [vmem:[#allocation5 + $0x9c0] sm:$0xf]
    %v4274 = vld [vmem:[#allocation5 + $0x9cc] sm:$0xf]
    %v4291 = vunpack.c.l.b16 %v4259
    %v4292 = vunpack.c.l.b16 %v4260
    %v4293 = vunpack.c.l.b16 %v4261
    %v4294 = vunpack.c.l.b16 %v4262
    %v4295 = vunpack.c.l.b16 %v4263
    %v4296 = vunpack.c.l.b16 %v4264
    %v4297 = vunpack.c.l.b16 %v4265
    %v4298 = vunpack.c.l.b16 %v4266
    %v4299 = vunpack.c.l.b16 %v4267
    %v4300 = vunpack.c.l.b16 %v4268
    %v4301 = vunpack.c.l.b16 %v4269
    %v4302 = vunpack.c.l.b16 %v4270
    %v4303 = vunpack.c.l.b16 %v4271
    %v4304 = vunpack.c.l.b16 %v4272
    %v4305 = vunpack.c.l.b16 %v4273
    %v4306 = vunpack.c.l.b16 %v4274
    %v4307 = vpack.c.b16 %v4292, %v4291
    %v4308 = vpack.c.b16 %v4294, %v4293
    %v4309 = vpack.c.b16 %v4296, %v4295
    %v4310 = vpack.c.b16 %v4298, %v4297
    %v4311 = vpack.c.b16 %v4300, %v4299
    %v4312 = vpack.c.b16 %v4302, %v4301
    %v4313 = vpack.c.b16 %v4304, %v4303
    %v4314 = vpack.c.b16 %v4306, %v4305
    %4323 = vmatprep.subr.bf16.mxu0 0
    %4324 = vmatpush1.bf16.msra.mxu0 %v4307
    %4325 = vmatprep.subr.bf16.mxu0 0
    %4326 = vmatpush1.bf16.msra.mxu0 %v4308
    %4327 = vmatprep.subr.bf16.mxu0 0
    %4328 = vmatpush1.bf16.msra.mxu0 %v4309
    %4329 = vmatprep.subr.bf16.mxu0 0
    %4330 = vmatpush1.bf16.msra.mxu0 %v4310
    %4331 = vmatprep.subr.bf16.mxu0 0
    %4332 = vmatpush1.bf16.msra.mxu0 %v4311
    %4333 = vmatprep.subr.bf16.mxu0 0
    %4334 = vmatpush1.bf16.msra.mxu0 %v4312
    %4335 = vmatprep.subr.bf16.mxu0 0
    %4336 = vmatpush1.bf16.msra.mxu0 %v4313
    %4337 = vmatprep.subr.bf16.mxu0 0
    %4338 = vmatpush1.bf16.msra.mxu0 %v4314
    %4339 = vmatprep.subr.bf16.mxu0 0
    %4340 = vmatpush1.bf16.msra.mxu0 0
    %4341 = vmatprep.subr.bf16.mxu0 0
    %4342 = vmatpush1.bf16.msra.mxu0 0
    %4343 = vmatprep.subr.bf16.mxu0 0
    %4344 = vmatpush1.bf16.msra.mxu0 0
    %4345 = vmatprep.subr.bf16.mxu0 0
    %4346 = vmatpush1.bf16.msra.mxu0 0
    %4347 = vmatprep.subr.bf16.mxu0 0
    %4348 = vmatpush1.bf16.msra.mxu0 0
    %4349 = vmatprep.subr.bf16.mxu0 0
    %4350 = vmatpush1.bf16.msra.mxu0 0
    %4351 = vmatprep.subr.bf16.mxu0 0
    %4352 = vmatpush1.bf16.msra.mxu0 0
    %4353 = vmatprep.subr.bf16.mxu0 0
    %4354 = vmatpush1.bf16.msra.mxu0 0
    %4355 = vmatprep.mubr.bf16.mxu0 0
    %4356 = vmatmul.mubr.bf16.gmra.mrb[0].mxu0 %v4257
    %v4357 = vpop.f32.mrb[0].mxu0
    %v4358 = vadd.f32 0.0, %v4357
    %v4359 = vpop.f32.mrb[0].mxu0
    %v4360 = vpop.f32.mrb[0].mxu0
    %v4361 = vadd.f32 0.0, %v4360
    %v4362 = vpop.f32.mrb[0].mxu0
    %4363 = vmatprep.mubr.bf16.mxu0 0
    %4364 = vmatmul.mubr.bf16.gmra.mrb[0].mxu0 %v4258
    %v4365 = vpop.f32.mrb[0].mxu0
    %v4366 = vadd.f32 0.0, %v4365
    %v4367 = vpop.f32.mrb[0].mxu0
    %v4368 = vpop.f32.mrb[0].mxu0
    %v4369 = vpop.f32.mrb[0].mxu0
    %4370 = vdwg.mxu0
    %4374 = vrot.lane.b32.xlu0 %v4358, 96
    %v4375 = vpop.permute.xlu0 %4374
    %4376 = vrot.lane.b32.xlu0 %v4361, 96
    %v4377 = vpop.permute.xlu0 %4376
    %4378 = vrot.lane.b32.xlu0 %v4366, 96
    %v4379 = vpop.permute.xlu0 %4378
    %4383 = vrot.lane.b32.xlu0 %v4358, 64
    %v4384 = vpop.permute.xlu0 %4383
    %4385 = vrot.lane.b32.xlu0 %v4361, 64
    %v4386 = vpop.permute.xlu0 %4385
    %4387 = vrot.lane.b32.xlu0 %v4366, 64
    %v4388 = vpop.permute.xlu0 %4387
    %v4392 = vld [vmem:[#allocation5 + $0x9d8] sm:$0xf]
    %v4393 = vld [vmem:[#allocation5 + $0x9e4] sm:$0xf]
    %v4394 = vld [vmem:[#allocation5 + $0x9f0] sm:$0xf]
    %v4395 = vld [vmem:[#allocation5 + $0x9fc] sm:$0xf]
    %v4396 = vld [vmem:[#allocation5 + $0xa08] sm:$0xf]
    %v4397 = vld [vmem:[#allocation5 + $0xa14] sm:$0xf]
    %v4398 = vld [vmem:[#allocation5 + $0xa20] sm:$0x3]
    %v4399 = vpack.c.bf16 %v4361, %v4358
    %v4400 = vpack.c.bf16 %v4375, %v4366
    %v4401 = vpack.c.bf16 %v4379, %v4377
    %v4402 = vpack.c.bf16 %v4386, %v4384
    %v4403 = vpack.c.bf16 %v4388, %v4388
    %v4404 = vld [vmem:[#allocation5 + $0xa38] sm:$0xf]
    %v4405 = vld [vmem:[#allocation5 + $0xa44] sm:$0xf]
    %v4406 = vld [vmem:[#allocation5 + $0xa50] sm:$0xf]
    %v4407 = vld [vmem:[#allocation5 + $0xa5c] sm:$0xf]
    %v4408 = vld [vmem:[#allocation7 + $0x7e0] ss:$0 sm:$0xff]
    %v4413 = vunpack.c.l.b16 %v4404
    %v4414 = vunpack.c.l.b16 %v4405
    %v4415 = vunpack.c.l.b16 %v4406
    %v4416 = vunpack.c.l.b16 %v4407
    %v4417 = vpack.c.b16 %v4414, %v4413
    %v4418 = vpack.c.b16 %v4416, %v4415
    %4421 = vmatprep.subr.bf16.mxu0 0
    %4422 = vmatpush1.bf16.msra.mxu0 %v4417
    %4423 = vmatprep.subr.bf16.mxu0 0
    %4424 = vmatpush1.bf16.msra.mxu0 %v4418
    %4425 = vmatprep.subr.bf16.mxu0 0
    %4426 = vmatpush1.bf16.msra.mxu0 0
    %4427 = vmatprep.subr.bf16.mxu0 0
    %4428 = vmatpush1.bf16.msra.mxu0 0
    %4429 = vmatprep.subr.bf16.mxu0 0
    %4430 = vmatpush1.bf16.msra.mxu0 0
    %4431 = vmatprep.subr.bf16.mxu0 0
    %4432 = vmatpush1.bf16.msra.mxu0 0
    %4433 = vmatprep.subr.bf16.mxu0 0
    %4434 = vmatpush1.bf16.msra.mxu0 0
    %4435 = vmatprep.subr.bf16.mxu0 0
    %4436 = vmatpush1.bf16.msra.mxu0 0
    %4437 = vmatprep.subr.bf16.mxu0 0
    %4438 = vmatpush1.bf16.msra.mxu0 0
    %4439 = vmatprep.subr.bf16.mxu0 0
    %4440 = vmatpush1.bf16.msra.mxu0 0
    %4441 = vmatprep.subr.bf16.mxu0 0
    %4442 = vmatpush1.bf16.msra.mxu0 0
    %4443 = vmatprep.subr.bf16.mxu0 0
    %4444 = vmatpush1.bf16.msra.mxu0 0
    %4445 = vmatprep.subr.bf16.mxu0 0
    %4446 = vmatpush1.bf16.msra.mxu0 0
    %4447 = vmatprep.subr.bf16.mxu0 0
    %4448 = vmatpush1.bf16.msra.mxu0 0
    %4449 = vmatprep.subr.bf16.mxu0 0
    %4450 = vmatpush1.bf16.msra.mxu0 0
    %4451 = vmatprep.subr.bf16.mxu0 0
    %4452 = vmatpush1.bf16.msra.mxu0 0
    %4453 = vmatprep.mubr.bf16.mxu0 0
    %4454 = vmatmul.mubr.bf16.gmra.mrb[0].mxu0 %v766
    %v4455 = vpop.f32.mrb[0].mxu0
    %v4456 = vadd.f32 %v4408, %v4455
    %v4457 = vpop.f32.mrb[0].mxu0
    %v4458 = vpop.f32.mrb[0].mxu0
    %v4459 = vpop.f32.mrb[0].mxu0
    %4460 = vdwg.mxu0
    %v4461 = vlaneseq
    %v4462 = vshrl.u32 %v4461, 7
    %v4463 = vsub.s32 0, %v4462
    %v4464 = vrot.slane %v4456, %v4463
    %v4465 = vlaneseq
    %v4466 = vshrl.u32 %v4465, 7
    %v4467 = vsub.s32 1, %v4466
    %v4468 = vrot.slane %v4456, %v4467
    %v4469 = vsel %vm735, %v4464, %v4468
    %v4477 = vunpack.c.l.b16 %v4392
    %v4478 = vunpack.c.l.b16 %v4393
    %v4479 = vunpack.c.l.b16 %v4394
    %v4480 = vunpack.c.l.b16 %v4395
    %v4481 = vunpack.c.l.b16 %v4396
    %v4482 = vunpack.c.l.b16 %v4397
    %v4483 = vunpack.c.l.b16 %v4398
    %v4484 = vpack.c.b16 %v4478, %v4477
    %v4485 = vpack.c.b16 %v4480, %v4479
    %v4486 = vpack.c.b16 %v4482, %v4481
    %v4487 = vpack.c.b16 %v4483, %v4483
    %vm4488 = vcmask 588800
    %v4490 = vsel %vm4488, %v4484, 0
    %v4493 = vsel %vm4488, %v4485, 0
    %v4496 = vsel %vm4488, %v4486, 0
    %v4499 = vsel %vm4488, %v4487, 0
    %v4502 = vsel %vm1332, %v4403, 0
    %4504 = vmatprep.subr.bf16.mxu0 0
    %4505 = vmatpush1.bf16.msra.mxu0 %v4399
    %4506 = vmatprep.subr.bf16.mxu0 0
    %4507 = vmatpush1.bf16.msra.mxu0 %v4400
    %4508 = vmatprep.subr.bf16.mxu0 0
    %4509 = vmatpush1.bf16.msra.mxu0 %v4401
    %4510 = vmatprep.subr.bf16.mxu0 0
    %4511 = vmatpush1.bf16.msra.mxu0 %v4402
    %4512 = vmatprep.subr.bf16.mxu0 0
    %4513 = vmatpush1.bf16.msra.mxu0 %v4502
    %4514 = vmatprep.subr.bf16.mxu0 0
    %4515 = vmatpush1.bf16.msra.mxu0 0
    %4516 = vmatprep.subr.bf16.mxu0 0
    %4517 = vmatpush1.bf16.msra.mxu0 0
    %4518 = vmatprep.subr.bf16.mxu0 0
    %4519 = vmatpush1.bf16.msra.mxu0 0
    %4520 = vmatprep.subr.bf16.mxu0 0
    %4521 = vmatpush1.bf16.msra.mxu0 0
    %4522 = vmatprep.subr.bf16.mxu0 0
    %4523 = vmatpush1.bf16.msra.mxu0 0
    %4524 = vmatprep.subr.bf16.mxu0 0
    %4525 = vmatpush1.bf16.msra.mxu0 0
    %4526 = vmatprep.subr.bf16.mxu0 0
    %4527 = vmatpush1.bf16.msra.mxu0 0
    %4528 = vmatprep.subr.bf16.mxu0 0
    %4529 = vmatpush1.bf16.msra.mxu0 0
    %4530 = vmatprep.subr.bf16.mxu0 0
    %4531 = vmatpush1.bf16.msra.mxu0 0
    %4532 = vmatprep.subr.bf16.mxu0 0
    %4533 = vmatpush1.bf16.msra.mxu0 0
    %4534 = vmatprep.subr.bf16.mxu0 0
    %4535 = vmatpush1.bf16.msra.mxu0 0
    %4536 = vmatprep.mubr.bf16.mxu0 0
    %4537 = vmatmul.mubr.bf16.gmra.mrb[0].mxu0 %v4490
    %v4538 = vpop.f32.mrb[0].mxu0
    %v4539 = vadd.f32 %v4464, %v4538
    %v4540 = vpop.f32.mrb[0].mxu0
    %v4541 = vpop.f32.mrb[0].mxu0
    %v4542 = vadd.f32 %v4464, %v4541
    %v4543 = vpop.f32.mrb[0].mxu0
    %4544 = vmatprep.mubr.bf16.mxu0 0
    %4545 = vmatmul.mubr.bf16.gmra.mrb[0].mxu0 %v4493
    %v4546 = vpop.f32.mrb[0].mxu0
    %v4547 = vadd.f32 %v4464, %v4546
    %v4548 = vpop.f32.mrb[0].mxu0
    %v4549 = vpop.f32.mrb[0].mxu0
    %v4550 = vadd.f32 %v4469, %v4549
    %v4551 = vpop.f32.mrb[0].mxu0
    %4552 = vmatprep.mubr.bf16.mxu0 0
    %4553 = vmatmul.mubr.bf16.gmra.mrb[0].mxu0 %v4496
    %v4554 = vpop.f32.mrb[0].mxu0
    %v4555 = vadd.f32 %v4468, %v4554
    %v4556 = vpop.f32.mrb[0].mxu0
    %v4557 = vpop.f32.mrb[0].mxu0
    %v4558 = vadd.f32 %v4468, %v4557
    %v4559 = vpop.f32.mrb[0].mxu0
    %4560 = vmatprep.mubr.bf16.mxu0 0
    %4561 = vmatmul.mubr.bf16.gmra.mrb[0].mxu0 %v4499
    %v4562 = vpop.f32.mrb[0].mxu0
    %v4563 = vadd.f32 %v4468, %v4562
    %v4564 = vpop.f32.mrb[0].mxu0
    %v4565 = vpop.f32.mrb[0].mxu0
    %v4566 = vpop.f32.mrb[0].mxu0
    %4567 = vdwg.mxu0
    %v4568 = vsel %vm291, %v4539, 0.0
    %v4569 = vsel %vm291, %v4542, 0.0
    %v4570 = vadd.f32 %v4568, %v4569
    %v4571 = vsel %vm291, %v4547, 0.0
    %v4572 = vadd.f32 %v4570, %v4571
    %v4573 = vsel %vm829, %v4550, 0.0
    %v4574 = vadd.f32 %v4572, %v4573
    %v4575 = vrot.slane %v4574, 4
    %v4576 = vadd.f32 %v4574, %v4575
    %v4577 = vrot.slane %v4576, 2
    %v4578 = vadd.f32 %v4576, %v4577
    %v4579 = vrot.slane %v4578, 1
    %v4580 = vadd.f32 %v4578, %v4579
    %v4581 = vmul.f32 %v4539, %v4539
    %v4582 = vmul.f32 %v4542, %v4542
    %v4583 = vmul.f32 %v4547, %v4547
    %v4584 = vmul.f32 %v4550, %v4550
    %v4585 = vsel %vm291, %v4581, 0.0
    %v4586 = vsel %vm291, %v4582, 0.0
    %v4587 = vadd.f32 %v4585, %v4586
    %v4588 = vsel %vm291, %v4583, 0.0
    %v4589 = vadd.f32 %v4587, %v4588
    %v4590 = vsel %vm829, %v4584, 0.0
    %v4591 = vadd.f32 %v4589, %v4590
    %v4592 = vrot.slane %v4591, 4
    %v4593 = vadd.f32 %v4591, %v4592
    %v4594 = vrot.slane %v4593, 2
    %v4595 = vadd.f32 %v4593, %v4594
    %v4596 = vrot.slane %v4595, 1
    %v4597 = vadd.f32 %v4595, %v4596
    %v4602 = vrot.slane %v4550, 2
    %v4603 = vrot.slane %v4555, 2
    %v4604 = vsel %vm649, %v4602, %v4603
    %v4605 = vrot.slane %v4558, 2
    %v4606 = vsel %vm649, %v4603, %v4605
    %v4607 = vrot.slane %v4563, 2
    %v4608 = vsel %vm649, %v4605, %v4607
    %v4613 = vsel %vm291, %v4604, 0.0
    %v4614 = vsel %vm291, %v4606, 0.0
    %v4615 = vadd.f32 %v4613, %v4614
    %v4616 = vsel %vm291, %v4608, 0.0
    %v4617 = vadd.f32 %v4615, %v4616
    %v4618 = vsel %vm829, %v4607, 0.0
    %v4619 = vadd.f32 %v4617, %v4618
    %v4620 = vrot.slane %v4619, 4
    %v4621 = vadd.f32 %v4619, %v4620
    %v4622 = vrot.slane %v4621, 2
    %v4623 = vadd.f32 %v4621, %v4622
    %v4624 = vrot.slane %v4623, 1
    %v4625 = vadd.f32 %v4623, %v4624
    %v4626 = vmul.f32 %v4555, %v4555
    %v4627 = vmul.f32 %v4558, %v4558
    %v4628 = vmul.f32 %v4563, %v4563
    %v4633 = vrot.slane %v4584, 2
    %v4634 = vrot.slane %v4626, 2
    %v4635 = vsel %vm649, %v4633, %v4634
    %v4636 = vrot.slane %v4627, 2
    %v4637 = vsel %vm649, %v4634, %v4636
    %v4638 = vrot.slane %v4628, 2
    %v4639 = vsel %vm649, %v4636, %v4638
    %v4644 = vsel %vm291, %v4635, 0.0
    %v4645 = vsel %vm291, %v4637, 0.0
    %v4646 = vadd.f32 %v4644, %v4645
    %v4647 = vsel %vm291, %v4639, 0.0
    %v4648 = vadd.f32 %v4646, %v4647
    %v4649 = vsel %vm829, %v4638, 0.0
    %v4650 = vadd.f32 %v4648, %v4649
    %v4651 = vrot.slane %v4650, 4
    %v4652 = vadd.f32 %v4650, %v4651
    %v4653 = vrot.slane %v4652, 2
    %v4654 = vadd.f32 %v4652, %v4653
    %v4655 = vrot.slane %v4654, 1
    %v4656 = vadd.f32 %v4654, %v4655
    %v4657 = vsel %vm914, %v4580, %v4625
    %v4658 = vsel %vm735, %v4657, %v4597
    %v4659 = vsel %vm917, %v4658, %v4656
    %v4660 = vld [vmem:[#allocation7 + $0x810] sm:$0xff]
    %v4661 = vld [vmem:[#allocation7 + $0x820] sm:$0xff]
    %v4662 = vld [vmem:[#allocation7 + $0x830] sm:$0xff]
    %v4663 = vld [vmem:[#allocation7 + $0x840] sm:$0xff]
    %v4665 = vsel %vm291, %v4659, 0
    %4667 = vmatprep.subr.mxu0 0.0
    %4668 = vmatpush1.msra.mxu0 %v4660
    %4669 = vmatprep.subr.mxu0 0.0
    %4670 = vmatpush1.msra.mxu0 %v4661
    %4671 = vmatprep.subr.mxu0 0.0
    %4672 = vmatpush1.msra.mxu0 %v4662
    %4673 = vmatprep.subr.mxu0 0.0
    %4674 = vmatpush1.msra.mxu0 %v4663
    %4675 = vmatprep.subr.mxu0 0.0
    %4676 = vmatpush1.msra.mxu0 0.0
    %4677 = vmatprep.subr.mxu0 0.0
    %4678 = vmatpush1.msra.mxu0 0.0
    %4679 = vmatprep.subr.mxu0 0.0
    %4680 = vmatpush1.msra.mxu0 0.0
    %4681 = vmatprep.subr.mxu0 0.0
    %4682 = vmatpush1.msra.mxu0 0.0
    %4683 = vmatprep.subr.mxu0 0.0
    %4684 = vmatpush1.msra.mxu0 0.0
    %4685 = vmatprep.subr.mxu0 0.0
    %4686 = vmatpush1.msra.mxu0 0.0
    %4687 = vmatprep.subr.mxu0 0.0
    %4688 = vmatpush1.msra.mxu0 0.0
    %4689 = vmatprep.subr.mxu0 0.0
    %4690 = vmatpush1.msra.mxu0 0.0
    %4691 = vmatprep.subr.mxu0 0.0
    %4692 = vmatpush1.msra.mxu0 0.0
    %4693 = vmatprep.subr.mxu0 0.0
    %4694 = vmatpush1.msra.mxu0 0.0
    %4695 = vmatprep.subr.mxu0 0.0
    %4696 = vmatpush1.msra.mxu0 0.0
    %4697 = vmatprep.subr.mxu0 0.0
    %4698 = vmatpush1.msra.mxu0 0.0
    %4699 = vmatprep.subr.mxu0 0.0
    %4700 = vmatpush1.msra.mxu0 0.0
    %4701 = vmatprep.subr.mxu0 0.0
    %4702 = vmatpush1.msra.mxu0 0.0
    %4703 = vmatprep.subr.mxu0 0.0
    %4704 = vmatpush1.msra.mxu0 0.0
    %4705 = vmatprep.subr.mxu0 0.0
    %4706 = vmatpush1.msra.mxu0 0.0
    %4707 = vmatprep.subr.mxu0 0.0
    %4708 = vmatpush1.msra.mxu0 0.0
    %4709 = vmatprep.subr.mxu0 0.0
    %4710 = vmatpush1.msra.mxu0 0.0
    %4711 = vmatprep.subr.mxu0 0.0
    %4712 = vmatpush1.msra.mxu0 0.0
    %4713 = vmatprep.subr.mxu0 0.0
    %4714 = vmatpush1.msra.mxu0 0.0
    %4715 = vmatprep.subr.mxu0 0.0
    %4716 = vmatpush1.msra.mxu0 0.0
    %4717 = vmatprep.subr.mxu0 0.0
    %4718 = vmatpush1.msra.mxu0 0.0
    %4719 = vmatprep.subr.mxu0 0.0
    %4720 = vmatpush1.msra.mxu0 0.0
    %4721 = vmatprep.subr.mxu0 0.0
    %4722 = vmatpush1.msra.mxu0 0.0
    %4723 = vmatprep.subr.mxu0 0.0
    %4724 = vmatpush1.msra.mxu0 0.0
    %4725 = vmatprep.subr.mxu0 0.0
    %4726 = vmatpush1.msra.mxu0 0.0
    %4727 = vmatprep.subr.mxu0 0.0
    %4728 = vmatpush1.msra.mxu0 0.0
    %4729 = vmatprep.subr.mxu0 0.0
    %4730 = vmatpush1.msra.mxu0 0.0
    %4731 = vmatprep.mubr.f32.mxu0 0.0
    %4732 = vmatmul.mubr.f32.gmra.mrb[0].mxu0 %v4665
    %v4733 = vpop.f32.mrb[0].mxu0
    %v4734 = vadd.f32 0.0, %v4733
    %v4735 = vpop.f32.mrb[0].mxu0
    %4736 = vdwg.mxu0
    %v4737 = vmul.f32 %v4734, 0.03846154
    %v4738 = vmul.f32 %v4737, %v4737
    %v4740 = vrot.slane %v4738, 6
    %v4742 = vsub.f32 %v4737, %v4740
    %v4743 = vmax.f32 %v4742, 0.0
    %v4744 = vlaneseq
    %v4745 = vshrl.u32 %v4744, 7
    %v4746 = vsub.s32 0, %v4745
    %v4747 = vrot.slane %v4737, %v4746
    %v4748 = vlaneseq
    %v4749 = vshrl.u32 %v4748, 7
    %v4750 = vsub.s32 1, %v4749
    %v4751 = vrot.slane %v4737, %v4750
    %v4752 = vsel %vm735, %v4747, %v4751
    %v4753 = vadd.f32 %v4743, 1e-05
    %v4754 = vrsqrt.pop %v4753
    %v4755 = vlaneseq
    %v4756 = vshrl.u32 %v4755, 7
    %v4757 = vsub.s32 2, %v4756
    %v4758 = vrot.slane %v4754, %v4757
    %v4759 = vlaneseq
    %v4760 = vshrl.u32 %v4759, 7
    %v4761 = vsub.s32 3, %v4760
    %v4762 = vrot.slane %v4754, %v4761
    %v4763 = vsel %vm735, %v4758, %v4762
    %v4764 = vsub.f32 %v4539, %v4747
    %v4765 = vsub.f32 %v4542, %v4747
    %v4766 = vsub.f32 %v4547, %v4747
    %v4767 = vsub.f32 %v4550, %v4752
    %v4768 = vsub.f32 %v4555, %v4751
    %v4769 = vsub.f32 %v4558, %v4751
    %v4770 = vsub.f32 %v4563, %v4751
    %v4771 = vmul.f32 %v4764, %v4758
    %v4772 = vmul.f32 %v4765, %v4758
    %v4773 = vmul.f32 %v4766, %v4758
    %v4774 = vmul.f32 %v4767, %v4763
    %v4775 = vmul.f32 %v4768, %v4762
    %v4776 = vmul.f32 %v4769, %v4762
    %v4777 = vmul.f32 %v4770, %v4762
    %v4778 = vld [vmem:[#allocation7 + $0x7f0] ss:$0 sm:$0xff]
    %v4779 = vmul.f32 %v4771, %v4778
    %v4780 = vmul.f32 %v4772, %v4778
    %v4781 = vmul.f32 %v4773, %v4778
    %v4782 = vmul.f32 %v4774, %v4778
    %v4783 = vmul.f32 %v4775, %v4778
    %v4784 = vmul.f32 %v4776, %v4778
    %v4785 = vmul.f32 %v4777, %v4778
    %v4786 = vld [vmem:[#allocation7 + $0x800] ss:$0 sm:$0xff]
    %v4787 = vadd.f32 %v4779, %v4786
    %v4788 = vadd.f32 %v4780, %v4786
    %v4789 = vadd.f32 %v4781, %v4786
    %v4790 = vadd.f32 %v4782, %v4786
    %v4791 = vadd.f32 %v4783, %v4786
    %v4792 = vadd.f32 %v4784, %v4786
    %v4793 = vadd.f32 %v4785, %v4786
    %v4794 = vsub.f32 0.0, %v4787
    %v4795 = vsub.f32 0.0, %v4788
    %v4796 = vsub.f32 0.0, %v4789
    %v4797 = vsub.f32 0.0, %v4790
    %v4798 = vsub.f32 0.0, %v4791
    %v4799 = vsub.f32 0.0, %v4792
    %v4800 = vsub.f32 0.0, %v4793
    %v4801 = vmul.f32 %v4794, 1.442695
    %v4802 = vpow.pop %v4801
    %v4803 = vmul.f32 %v4795, 1.442695
    %v4804 = vpow.pop %v4803
    %v4805 = vmul.f32 %v4796, 1.442695
    %v4806 = vpow.pop %v4805
    %v4807 = vmul.f32 %v4797, 1.442695
    %v4808 = vpow.pop %v4807
    %v4809 = vmul.f32 %v4798, 1.442695
    %v4810 = vpow.pop %v4809
    %v4811 = vmul.f32 %v4799, 1.442695
    %v4812 = vpow.pop %v4811
    %v4813 = vmul.f32 %v4800, 1.442695
    %v4814 = vpow.pop %v4813
    %v4815 = vadd.f32 %v4802, 1.0
    %v4816 = vadd.f32 %v4804, 1.0
    %v4817 = vadd.f32 %v4806, 1.0
    %v4818 = vadd.f32 %v4808, 1.0
    %v4819 = vadd.f32 %v4810, 1.0
    %v4820 = vadd.f32 %v4812, 1.0
    %v4821 = vadd.f32 %v4814, 1.0
    %v4822 = vrcp.pop %v4815
    %v4823 = vrcp.pop %v4816
    %v4824 = vrcp.pop %v4817
    %v4825 = vrcp.pop %v4818
    %v4826 = vrcp.pop %v4819
    %v4827 = vrcp.pop %v4820
    %v4828 = vrcp.pop %v4821
    %v4829 = vmul.f32 %v4787, %v4822
    %v4830 = vmul.f32 %v4788, %v4823
    %v4831 = vmul.f32 %v4789, %v4824
    %v4832 = vmul.f32 %v4790, %v4825
    %v4833 = vmul.f32 %v4791, %v4826
    %v4834 = vmul.f32 %v4792, %v4827
    %v4835 = vmul.f32 %v4793, %v4828
    %4843 = vrot.lane.b32.xlu0 %v1088, 32
    %v4844 = vpop.permute.xlu0 %4843
    %4845 = vrot.lane.b32.xlu0 %v1089, 32
    %v4846 = vpop.permute.xlu0 %4845
    %4847 = vrot.lane.b32.xlu0 %v1090, 32
    %v4848 = vpop.permute.xlu0 %4847
    %4849 = vrot.lane.b32.xlu0 %v1091, 32
    %v4850 = vpop.permute.xlu0 %4849
    %4851 = vrot.lane.b32.xlu0 %v1092, 32
    %v4852 = vpop.permute.xlu0 %4851
    %4853 = vrot.lane.b32.xlu0 %v1093, 32
    %v4854 = vpop.permute.xlu0 %4853
    %4855 = vrot.lane.b32.xlu0 %v1094, 32
    %v4856 = vpop.permute.xlu0 %4855
    %v4864 = vsel %vm291, %v4829, %v4844
    %v4865 = vsel %vm291, %v4830, %v4846
    %v4866 = vsel %vm291, %v4831, %v4848
    %v4867 = vsel %vm291, %v4832, %v4850
    %v4868 = vsel %vm291, %v4833, %v4852
    %v4869 = vsel %vm291, %v4834, %v4854
    %v4870 = vsel %vm291, %v4835, %v4856
    %v4871 = vld [vmem:[#allocation7 + $0x160] sm:$0x7]
    %v4872 = vlaneseq
    %v4873 = vshrl.u32 %v4872, 7
    %v4874 = vsub.s32 0, %v4873
    %v4875 = vrot.slane %v4871, %v4874
    %v4876 = vmul.f32 %v4864, %v4875
    %v4877 = vmul.f32 %v4865, %v4875
    %v4878 = vmul.f32 %v4866, %v4875
    %v4879 = vmul.f32 %v4867, %v4875
    %v4880 = vmul.f32 %v4868, %v4875
    %v4881 = vmul.f32 %v4869, %v4875
    %v4882 = vmul.f32 %v4870, %v4875
    %v4883 = vsel %vm1249, %v4876, 0.0
    %4884 = vadd.xlane.f32.xlu0 %v4883
    %v4885 = vpop.xlane.xlu0 %4884
    %v4886 = vsel %vm1249, %v4877, 0.0
    %4887 = vadd.xlane.f32.xlu0 %v4886
    %v4888 = vpop.xlane.xlu0 %4887
    %v4889 = vsel %vm1249, %v4878, 0.0
    %4890 = vadd.xlane.f32.xlu0 %v4889
    %v4891 = vpop.xlane.xlu0 %4890
    %v4892 = vsel %vm1249, %v4879, 0.0
    %4893 = vadd.xlane.f32.xlu0 %v4892
    %v4894 = vpop.xlane.xlu0 %4893
    %v4895 = vsel %vm1249, %v4880, 0.0
    %4896 = vadd.xlane.f32.xlu0 %v4895
    %v4897 = vpop.xlane.xlu0 %4896
    %v4898 = vsel %vm1249, %v4881, 0.0
    %4899 = vadd.xlane.f32.xlu0 %v4898
    %v4900 = vpop.xlane.xlu0 %4899
    %v4901 = vsel %vm1426, %v4882, 0.0
    %4902 = vadd.xlane.f32.xlu0 %v4901
    %v4903 = vpop.xlane.xlu0 %4902
    %v4904 = vlaneseq
    %v4905 = vshrl.u32 %v4904, 7
    %v4906 = vsub.s32 1, %v4905
    %v4907 = vrot.slane %v4871, %v4906
    %v4908 = vmul.f32 %v4864, %v4907
    %v4909 = vmul.f32 %v4865, %v4907
    %v4910 = vmul.f32 %v4866, %v4907
    %v4911 = vmul.f32 %v4867, %v4907
    %v4912 = vmul.f32 %v4868, %v4907
    %v4913 = vmul.f32 %v4869, %v4907
    %v4914 = vmul.f32 %v4870, %v4907
    %v4915 = vsel %vm1249, %v4908, 0.0
    %4916 = vadd.xlane.f32.xlu0 %v4915
    %v4917 = vpop.xlane.xlu0 %4916
    %v4918 = vsel %vm1249, %v4909, 0.0
    %4919 = vadd.xlane.f32.xlu0 %v4918
    %v4920 = vpop.xlane.xlu0 %4919
    %v4921 = vsel %vm1249, %v4910, 0.0
    %4922 = vadd.xlane.f32.xlu0 %v4921
    %v4923 = vpop.xlane.xlu0 %4922
    %v4924 = vsel %vm1249, %v4911, 0.0
    %4925 = vadd.xlane.f32.xlu0 %v4924
    %v4926 = vpop.xlane.xlu0 %4925
    %v4927 = vsel %vm1249, %v4912, 0.0
    %4928 = vadd.xlane.f32.xlu0 %v4927
    %v4929 = vpop.xlane.xlu0 %4928
    %v4930 = vsel %vm1249, %v4913, 0.0
    %4931 = vadd.xlane.f32.xlu0 %v4930
    %v4932 = vpop.xlane.xlu0 %4931
    %v4933 = vsel %vm1426, %v4914, 0.0
    %4934 = vadd.xlane.f32.xlu0 %v4933
    %v4935 = vpop.xlane.xlu0 %4934
    %v4936 = vlaneseq
    %v4937 = vshrl.u32 %v4936, 7
    %v4938 = vsub.s32 2, %v4937
    %v4939 = vrot.slane %v4871, %v4938
    %v4940 = vmul.f32 %v4864, %v4939
    %v4941 = vmul.f32 %v4865, %v4939
    %v4942 = vmul.f32 %v4866, %v4939
    %v4943 = vmul.f32 %v4867, %v4939
    %v4944 = vmul.f32 %v4868, %v4939
    %v4945 = vmul.f32 %v4869, %v4939
    %v4946 = vmul.f32 %v4870, %v4939
    %v4947 = vsel %vm1249, %v4940, 0.0
    %4948 = vadd.xlane.f32.xlu0 %v4947
    %v4949 = vpop.xlane.xlu0 %4948
    %v4950 = vsel %vm1249, %v4941, 0.0
    %4951 = vadd.xlane.f32.xlu0 %v4950
    %v4952 = vpop.xlane.xlu0 %4951
    %v4953 = vsel %vm1249, %v4942, 0.0
    %4954 = vadd.xlane.f32.xlu0 %v4953
    %v4955 = vpop.xlane.xlu0 %4954
    %v4956 = vsel %vm1249, %v4943, 0.0
    %4957 = vadd.xlane.f32.xlu0 %v4956
    %v4958 = vpop.xlane.xlu0 %4957
    %v4959 = vsel %vm1249, %v4944, 0.0
    %4960 = vadd.xlane.f32.xlu0 %v4959
    %v4961 = vpop.xlane.xlu0 %4960
    %v4962 = vsel %vm1249, %v4945, 0.0
    %4963 = vadd.xlane.f32.xlu0 %v4962
    %v4964 = vpop.xlane.xlu0 %4963
    %v4965 = vsel %vm1426, %v4946, 0.0
    %4966 = vadd.xlane.f32.xlu0 %v4965
    %v4967 = vpop.xlane.xlu0 %4966
    %v4968 = vld [vmem:[#allocation7 + $0x170] ss:$0 sm:$0xff]
    %v4969 = vld [vmem:[#allocation7 + $0x100] sm:$0xff]
    %v4970 = vld [vmem:[#allocation7 + $0x110] sm:$0xff]
    %v4971 = vld [vmem:[#allocation7 + $0x120] sm:$0xff]
    %v4972 = vld [vmem:[#allocation7 + $0x130] sm:$0xf]
    %v4973 = vld [vmem:[#allocation7 + $0x140] ss:$0 sm:$0xff]
    %v4974 = vsel %vm735, %v4894, 0.0
    %v4975 = vadd.f32 %v4968, %v4885
    %v4976 = vadd.f32 %v4968, %v4888
    %v4977 = vadd.f32 %v4968, %v4891
    %v4978 = vadd.f32 %v4968, %v4974
    %v4983 = vrot.slane %v4917, 7
    %v4984 = vrot.slane %v4920, 7
    %v4985 = vsel %vm914, %v4983, %v4984
    %v4986 = vrot.slane %v4923, 7
    %v4987 = vsel %vm914, %v4984, %v4986
    %v4988 = vrot.slane %v4926, 7
    %v4989 = vsel %vm914, %v4986, %v4988
    %v4994 = vsel %vm914, 0.0, %v4983
    %v4995 = vsel %vm917, %v4989, 0.0
    %v4996 = vadd.f32 %v4975, %v4994
    %v4997 = vadd.f32 %v4976, %v4985
    %v4998 = vadd.f32 %v4977, %v4987
    %v4999 = vadd.f32 %v4978, %v4995
    %v5004 = vrot.slane %v4949, 6
    %v5005 = vrot.slane %v4952, 6
    %v5006 = vsel %vm735, %v5004, %v5005
    %v5007 = vrot.slane %v4955, 6
    %v5008 = vsel %vm735, %v5005, %v5007
    %v5009 = vrot.slane %v4958, 6
    %v5010 = vsel %vm735, %v5007, %v5009
    %v5015 = vsel %vm735, 0.0, %v5004
    %v5016 = vadd.f32 %v4996, %v5015
    %v5017 = vadd.f32 %v4997, %v5006
    %v5018 = vadd.f32 %v4998, %v5008
    %v5019 = vadd.f32 %v4999, %v5010
    %5021 = vset.pattern.permute.xlu0 0
    %5022 = vperm.xlu0 %5021, %v5016
    %v5023 = vpop.permute.xlu0 %5022
    %5026 = vset.pattern.permute.xlu0 0
    %5027 = vperm.xlu0 %5026, %v5017
    %v5028 = vpop.permute.xlu0 %5027
    %5031 = vset.pattern.permute.xlu0 0
    %5032 = vperm.xlu0 %5031, %v5018
    %v5033 = vpop.permute.xlu0 %5032
    %5036 = vset.pattern.permute.xlu0 0
    %5037 = vperm.xlu0 %5036, %v5019
    %v5038 = vpop.permute.xlu0 %5037
    %v5040 = vmul.f32 %v5023, %v4969
    %v5041 = vmul.f32 %v5028, %v4970
    %v5042 = vmul.f32 %v5033, %v4971
    %v5043 = vmul.f32 %v5038, %v4972
    %v5044 = vsel %vm284, %v5040, 0.0
    %v5045 = vsel %vm284, %v5041, 0.0
    %v5046 = vadd.f32 %v5044, %v5045
    %v5047 = vsel %vm284, %v5042, 0.0
    %v5048 = vadd.f32 %v5046, %v5047
    %vm5049 = vcmask 125952
    %v5050 = vsel %vm5049, %v5043, 0.0
    %v5051 = vadd.f32 %v5048, %v5050
    %v5052 = vrot.slane %v5051, 4
    %v5053 = vadd.f32 %v5051, %v5052
    %v5054 = vrot.slane %v5053, 2
    %v5055 = vadd.f32 %v5053, %v5054
    %v5056 = vrot.slane %v5055, 1
    %v5057 = vadd.f32 %v5055, %v5056
    %v5058 = vadd.f32 %v5057, %v4973
    %v5063 = vrot.slane %v4894, 2
    %v5064 = vrot.slane %v4897, 2
    %v5065 = vsel %vm649, %v5063, %v5064
    %v5066 = vrot.slane %v4900, 2
    %v5067 = vsel %vm649, %v5064, %v5066
    %v5068 = vrot.slane %v4903, 2
    %v5069 = vsel %vm649, %v5066, %v5068
    %v5074 = vsel %vm735, %v5068, 0.0
    %v5075 = vadd.f32 %v4968, %v5065
    %v5076 = vadd.f32 %v4968, %v5067
    %v5077 = vadd.f32 %v4968, %v5069
    %v5078 = vadd.f32 %v4968, %v5074
    %v5082 = vrot.slane %v4926, 1
    %v5083 = vrot.slane %v4929, 1
    %v5084 = vsel %vm621, %v5082, %v5083
    %v5085 = vrot.slane %v4932, 1
    %v5086 = vsel %vm621, %v5083, %v5085
    %v5087 = vrot.slane %v4935, 1
    %v5088 = vsel %vm621, %v5085, %v5087
    %v5093 = vsel %vm914, 0.0, %v5084
    %v5094 = vsel %vm917, %v5087, 0.0
    %v5095 = vadd.f32 %v5075, %v5093
    %v5096 = vadd.f32 %v5076, %v5086
    %v5097 = vadd.f32 %v5077, %v5088
    %v5098 = vadd.f32 %v5078, %v5094
    %v5099 = vsel %vm735, 0.0, %v4958
    %v5100 = vadd.f32 %v5095, %v5099
    %v5101 = vadd.f32 %v5096, %v4961
    %v5102 = vadd.f32 %v5097, %v4964
    %v5103 = vadd.f32 %v5098, %v4967
    %5105 = vset.pattern.permute.xlu0 0
    %5106 = vperm.xlu0 %5105, %v5100
    %v5107 = vpop.permute.xlu0 %5106
    %5110 = vset.pattern.permute.xlu0 0
    %5111 = vperm.xlu0 %5110, %v5101
    %v5112 = vpop.permute.xlu0 %5111
    %5115 = vset.pattern.permute.xlu0 0
    %5116 = vperm.xlu0 %5115, %v5102
    %v5117 = vpop.permute.xlu0 %5116
    %5120 = vset.pattern.permute.xlu0 0
    %5121 = vperm.xlu0 %5120, %v5103
    %v5122 = vpop.permute.xlu0 %5121
    %v5124 = vmul.f32 %v5107, %v4969
    %v5125 = vmul.f32 %v5112, %v4970
    %v5126 = vmul.f32 %v5117, %v4971
    %v5127 = vmul.f32 %v5122, %v4972
    %v5128 = vsel %vm284, %v5124, 0.0
    %v5129 = vsel %vm284, %v5125, 0.0
    %v5130 = vadd.f32 %v5128, %v5129
    %v5131 = vsel %vm284, %v5126, 0.0
    %v5132 = vadd.f32 %v5130, %v5131
    %v5133 = vsel %vm5049, %v5127, 0.0
    %v5134 = vadd.f32 %v5132, %v5133
    %v5135 = vrot.slane %v5134, 4
    %v5136 = vadd.f32 %v5134, %v5135
    %v5137 = vrot.slane %v5136, 2
    %v5138 = vadd.f32 %v5136, %v5137
    %v5139 = vrot.slane %v5138, 1
    %v5140 = vadd.f32 %v5138, %v5139
    %v5141 = vadd.f32 %v5140, %v4973
    %v5142 = vsel %vm914, %v5058, %v5141
    %v5143 = vmul.f32 %v64, 6.437752
    %v5144 = vmul.f32 %v5143, 1.442695
    %v5145 = vpow.pop %v5144
    %v5146 = vsub.f32 %v5145, 1.0
    %v5147 = vrcp.pop 6.437752
    %v5148 = vmul.f32 %v5146, %v5147
    %v5149 = vrsqrt.pop %v5148
    %v5150 = vmul.f32 %v5148, %v5149
    %vm5151 = vcmp.eq.f32.partialorder %v5148, inf
    %v5152 = vsel %vm5151, %v5148, %v5150
    %vm5153 = vcmp.eq.f32.partialorder %v5148, 0.0
    %v5154 = vand.u32 %v5148, 2147483648
    %v5155 = vsel %vm5153, %v5154, %v5152
    %v5156 = vrcp.pop %v5155
    %5158 = vset.pattern.permute.xlu0 0
    %5159 = vperm.xlu0 %5158, %v5156
    %v5160 = vpop.permute.xlu0 %5159
    %v5162 = vmul.f32 %v5142, %v5160
    %vm5163 = vcmask 123904
    %5164 = vst.msk [vmem:[#allocation8] sm:$0x3] %vm5163, %v5162
    // Predicated region
    $region34: #{tpu_custom_call.1} parent=1 // pred_check
      _
    $region35: #{tpu_custom_call.1} parent=1 // pred_check_branch
      %5166 = sbr.rel (0) target = $region37
    $region36: #{tpu_custom_call.1} parent=1 // pred_region
      %s5168 = ssub.s32 32, 32
      %5169 = vsyncadd [#allocation4], %s5168
      %s5171 = sshll.u32 [#allocation8], 4
      %s5172 = int_to_ptr.vmem [resolvable:$true] %s5171
      %5174 = dma.vmem_to_hbm [thread:$0]  %s5172, 32, %s5, [#allocation4]
    $region37: #{tpu_custom_call.1} parent=1 // pred_fallthru
      _
    // Predicated region
    $region38: #{tpu_custom_call.1} parent=1 // pred_check
      _
    $region39: #{tpu_custom_call.1} parent=1 // pred_check_branch
      %5176 = sbr.rel (0) target = $region41
    $region40: #{tpu_custom_call.1} parent=1 // pred_region
      %5177 = dma.done [#allocation4], 32
    $region41: #{tpu_custom_call.1} parent=1 // pred_fallthru
      _
    %5178 = vsyncpa [#allocation3], 1
    %5179 = vsyncpa [#allocation6], 1
    %5180 = vsyncpa [#allocation4], 1

</llo_original>
